<compile_context>
chip_gen: v7x
topology: tpu7x:2x2x1
jax: 0.10.0
libtpu: 0.0.40
codegen_flags: <defaults>
</compile_context>

<pallas_src>
import functools
import math

import jax
import jax.numpy as jnp
from jax.experimental import pallas as pl
from jax.experimental.pallas import tpu as pltpu


def _encoder_layer_kernel(
    x_ref,                        # (bt, S, D)       input block
    n1a_ref, n1b_ref,             # (1, D)           norm_1 alpha / bias
    wqkv_ref, bqkv_ref,           # (D, 3D), (1, 3D) fused QKV projection
    wo_ref, bo_ref,               # (D, D), (1, D)   attention output proj
    n2a_ref, n2b_ref,             # (1, D)           norm_2 alpha / bias
    w1_ref, fb1_ref,              # (D, DFF), (1, DFF)
    w2_ref, fb2_ref,              # (DFF, D), (1, D)
    o_ref,                        # (bt, S, D)
    *, heads, d_k, eps, kv_tile, compute_dtype):
    bt, s, d = x_ref.shape
    m = bt * s
    nh = bt * heads
    inv_sqrt_dk = 1.0 / math.sqrt(d_k)

    def mm(a, w):
        # 2-D MXU matmul; operands in compute_dtype, f32 accumulation.
        return jnp.dot(a.astype(compute_dtype), w.astype(compute_dtype),
                       preferred_element_type=jnp.float32)

    def bmm(eq, a, b):
        return jnp.einsum(eq, a.astype(compute_dtype), b.astype(compute_dtype),
                          preferred_element_type=jnp.float32)

    def layer_norm(v, alpha, beta):
        # torch Norm: alpha*(v - mean)/(std + eps) + bias, std unbiased (ddof=1).
        mu = jnp.mean(v, axis=-1, keepdims=True)
        vc = v - mu
        var = jnp.sum(vc * vc, axis=-1, keepdims=True) * (1.0 / (d - 1))
        # One reciprocal per row instead of a broadcast elementwise divide.
        inv = pl.reciprocal(jnp.sqrt(var) + eps, approx=False)
        return alpha * vc * inv + beta

    x = x_ref[...].reshape(m, d).astype(jnp.float32)   # token rows

    # ---- sub-layer 1: pre-norm -> multi-head attention -> residual ----
    x2 = layer_norm(x, n1a_ref[...], n1b_ref[...])

    # ONE fat (m, D) @ (D, 3D) matmul for Q, K, V (full MXU width; no weight
    # replication, no activation tiling).  Biases stay f32.
    qkv = mm(x2, wqkv_ref[...]) + bqkv_ref[...]        # (m, 3D) f32

    def split_heads(sec):
        # sec in {0,1,2} selects the Q / K / V column block; returns
        # (heads*bt, s, d_k) with batch order (head, batch).  Only static lane
        # slices, major-dim reshapes and a major-axis concat are used.
        parts = []
        for h in range(heads):
            lo = sec * d + h * d_k
            parts.append(qkv[:, lo:lo + d_k].reshape(bt, s, d_k))
        return jnp.concatenate(parts, axis=0)

    q = split_heads(0)
    k = split_heads(1)
    v = split_heads(2)

    # Flash-style online softmax over KV tiles (static loop): the full
    # (nh, S, S) score matrix is never materialized when S > kv_tile.
    n_kv = s // kv_tile
    m_i = jnp.full((nh, s, 1), -jnp.inf, dtype=jnp.float32)
    l_i = jnp.zeros((nh, s, 1), dtype=jnp.float32)
    acc = jnp.zeros((nh, s, d_k), dtype=jnp.float32)
    for t in range(n_kv):
        k_t = k[:, t * kv_tile:(t + 1) * kv_tile, :]
        v_t = v[:, t * kv_tile:(t + 1) * kv_tile, :]
        sc = bmm("bqd,bkd->bqk", q, k_t) * inv_sqrt_dk
        m_new = jnp.maximum(m_i, jnp.max(sc, axis=-1, keepdims=True))
        scale = jnp.exp(m_i - m_new)                   # 0 on first tile
        p = jnp.exp(sc - m_new)
        l_i = scale * l_i + jnp.sum(p, axis=-1, keepdims=True)
        acc = scale * acc + bmm("bqk,bkd->bqd", p, v_t)
        m_i = m_new
    # Exact reciprocal keeps the 1e-4 f32 parity; approx=True (EUP vrcp) is a
    # free upgrade once only the relaxed-tolerance test is required.
    ctx = acc * pl.reciprocal(l_i, approx=False)       # (nh, s, d_k)

    # Merge heads back along the lane dim (inverse of split_heads) and run the
    # output projection as ONE (m, D) @ (D, D) matmul (contract over H*d_k).
    ctx_cols = [ctx[h * bt:(h + 1) * bt].reshape(m, d_k) for h in range(heads)]
    ctx_m = jnp.concatenate(ctx_cols, axis=-1)         # (m, D)
    attn = mm(ctx_m, wo_ref[...]) + bo_ref[...]
    x = x + attn

    # ---- sub-layer 2: pre-norm -> feed-forward -> residual ----
    x2 = layer_norm(x, n2a_ref[...], n2b_ref[...])
    h1 = jnp.maximum(mm(x2, w1_ref[...]) + fb1_ref[...], 0.0)
    x = x + mm(h1, w2_ref[...]) + fb2_ref[...]

    o_ref[...] = x.reshape(bt, s, d).astype(o_ref.dtype)


def encoder_layer(x, params, *, heads, use_bf16=False):
    """x: (B, S, D) float32. params: linear weights stored as (in, out) = torch W.T."""
    B, S, D = x.shape
    assert D % heads == 0, "heads must divide d_model"
    d_k = D // heads
    d_ff = params["w1"].shape[1]

    # Batch tile: enough token rows per step for the MXU, but capped at B//2 so
    # the parallel grid axis has >= 2 steps (v7x has 2 TensorCores per chip).
    bt = max(1, min(B // 2 if B >= 2 else 1, pl.cdiv(128, S)))
    while B % bt:
        bt -= 1
    grid = (B // bt,)

    # KV tile for the in-kernel online-softmax loop (bounds score VMEM).
    kv_tile = S
    for cand in (512, 256, 128):
        if S > cand and S % cand == 0:
            kv_tile = cand
            break

    # --- wrapper-side weight layout (no replication): concat Q/K/V columns ---
    w_dtype = jnp.bfloat16 if use_bf16 else jnp.float32
    wqkv = jnp.concatenate([params["wq"], params["wk"], params["wv"]],
                           axis=1).astype(w_dtype)                  # (D, 3D)
    bqkv = jnp.concatenate([params["bq"], params["bk"], params["bv"]],
                           axis=1)                                  # (1, 3D) f32
    wo = params["wo"].astype(w_dtype)
    w1 = params["w1"].astype(w_dtype)
    w2 = params["w2"].astype(w_dtype)

    kernel = functools.partial(_encoder_layer_kernel,
                               heads=heads, d_k=d_k, eps=1e-6,
                               kv_tile=kv_tile, compute_dtype=w_dtype)

    # VMEM budget with per-generation headroom (~96 MiB on 128 MiB parts,
    # ~48 MiB on v7x's 64 MiB).
    try:
        vmem_cap = pltpu.get_tpu_info().vmem_capacity_bytes
    except Exception:
        vmem_cap = 64 * 1024 * 1024
    vmem_limit = min(int(vmem_cap * 3 // 4), 100 * 1024 * 1024)

    # Honest cost estimate (weights counted once, no replication).
    itemsize = 2 if use_bf16 else 4
    flops = int(2 * B * S * D * 3 * D            # fused QKV projection
                + 4 * B * heads * S * S * d_k    # scores + probs @ V
                + 2 * B * S * D * D              # output projection
                + 4 * B * S * D * d_ff)          # feed-forward
    weight_bytes = itemsize * (4 * D * D + 2 * D * d_ff) + 4 * (8 * D + d_ff)
    cost = pl.CostEstimate(
        flops=flops,
        transcendentals=int(B * heads * S * S + 2 * B * S),
        bytes_accessed=int(4 * 2 * B * S * D + weight_bytes))

    x_spec = pl.BlockSpec((bt, S, D), lambda i: (i, 0, 0))
    args = (x,
            params["alpha1"], params["bias1"],
            wqkv, bqkv,
            wo, params["bo"],
            params["alpha2"], params["bias2"],
            w1, params["b1"],
            w2, params["b2"])

    def build(single_buffer_weights):
        def const_spec(shape):
            def index_map(*_):
                return (0,) * len(shape)
            if single_buffer_weights:
                # Weight block index never changes -> no double buffer needed.
                return pl.BlockSpec(shape, index_map,
                                    pipeline_mode=pl.Buffered(1))
            return pl.BlockSpec(shape, index_map)

        return pl.pallas_call(
            kernel,
            out_shape=jax.ShapeDtypeStruct((B, S, D), x.dtype),
            grid_spec=pltpu.PrefetchScalarGridSpec(
                num_scalar_prefetch=0,
                grid=grid,
                in_specs=[
                    x_spec,
                    const_spec((1, D)), const_spec((1, D)),           # norm_1
                    const_spec((D, 3 * D)), const_spec((1, 3 * D)),   # Wqkv, bqkv
                    const_spec((D, D)), const_spec((1, D)),           # Wo, bo
                    const_spec((1, D)), const_spec((1, D)),           # norm_2
                    const_spec((D, d_ff)), const_spec((1, d_ff)),     # W1, b1
                    const_spec((d_ff, D)), const_spec((1, D)),        # W2, b2
                ],
                out_specs=x_spec,
            ),
            compiler_params=pltpu.CompilerParams(
                dimension_semantics=("parallel",),
                vmem_limit_bytes=vmem_limit),
            cost_estimate=cost,
        )

    try:
        return build(True)(*args)
    except Exception:
        # pipeline_mode=pl.Buffered(1) unsupported on this jax version: fall
        # back to default (double-buffered) weight pipelining; semantics are
        # identical, only VMEM footprint differs.
        return build(False)(*args)


def init_params(key, d_model, d_ff=1024):
    """Deterministic init. Linear weights stored as (in, out) == torch weight.T."""
    ks = jax.random.split(key, 16)

    def lin(k, fin, fout):
        limit = math.sqrt(6.0 / (fin + fout))
        return jax.random.uniform(k, (fin, fout), jnp.float32, -limit, limit)

    def vec(k, n, scale=0.1):
        return jax.random.uniform(k, (1, n), jnp.float32, -scale, scale)

    return {
        "wq": lin(ks[0], d_model, d_model), "bq": vec(ks[1], d_model),
        "wk": lin(ks[2], d_model, d_model), "bk": vec(ks[3], d_model),
        "wv": lin(ks[4], d_model, d_model), "bv": vec(ks[5], d_model),
        "wo": lin(ks[6], d_model, d_model), "bo": vec(ks[7], d_model),
        # torch init is alpha=1 / bias=0; perturb so the test exercises them
        "alpha1": 1.0 + vec(ks[8], d_model), "bias1": vec(ks[9], d_model),
        "alpha2": 1.0 + vec(ks[10], d_model), "bias2": vec(ks[11], d_model),
        "w1": lin(ks[12], d_model, d_ff), "b1": vec(ks[13], d_ff),
        "w2": lin(ks[14], d_ff, d_model), "b2": vec(ks[15], d_model),
    }


def _reference(x, params, heads, eps=1e-6):
    """Pure-JAX mirror of the PyTorch EncoderLayer (mask=None, no dropout)."""
    B, S, D = x.shape
    d_k = D // heads

    def norm(v, alpha, bias):
        mu = v.mean(axis=-1, keepdims=True)
        sd = jnp.std(v, axis=-1, keepdims=True, ddof=1)   # torch std: unbiased
        return alpha * (v - mu) / (sd + eps) + bias

    def mha(q, k, v):
        def proj(t, w, b):
            return t @ w + b

        def split(t):
            return t.reshape(B, S, heads, d_k).transpose(0, 2, 1, 3)

        qh = split(proj(q, params["wq"], params["bq"]))
        kh = split(proj(k, params["wk"], params["bk"]))
        vh = split(proj(v, params["wv"], params["bv"]))
        sc = jnp.einsum("bhqd,bhkd->bhqk", qh, kh) / math.sqrt(d_k)
        p = jax.nn.softmax(sc, axis=-1)
        o = jnp.einsum("bhqk,bhkd->bhqd", p, vh)
        o = o.transpose(0, 2, 1, 3).reshape(B, S, D)
        return o @ params["wo"] + params["bo"]

    def ff(v):
        h = jax.nn.relu(v @ params["w1"] + params["b1"])
        return h @ params["w2"] + params["b2"]

    x2 = norm(x, params["alpha1"], params["bias1"])
    x = x + mha(x2, x2, x2)
    x2 = norm(x, params["alpha2"], params["bias2"])
    return x + ff(x2)


if __name__ == "__main__":
    B, S, D, H = 2, 8, 32, 4
    D_FF = 1024   # FeedForward default d_ff in the reference module

    key = jax.random.PRNGKey(0)
    kx, kp = jax.random.split(key)
    x = jax.random.normal(kx, (B, S, D), jnp.float32)
    params = init_params(kp, D, D_FF)

    ref = _reference(x, params, H)

    # f32 path: strict parity against the PyTorch-equivalent reference.
    out = jax.block_until_ready(encoder_layer(x, params, heads=H))
    assert out.shape == (B, S, D)
    max_err = float(jnp.max(jnp.abs(out - ref)))
    assert jnp.allclose(out, ref, atol=1e-4, rtol=1e-4), f"f32 max abs diff {max_err}"

    # bf16 matmul-operand path (f32 accumulation): separate, looser tolerance.
    out16 = jax.block_until_ready(encoder_layer(x, params, heads=H, use_bf16=True))
    max_err16 = float(jnp.max(jnp.abs(out16 - ref)))
    assert jnp.allclose(out16, ref, atol=5e-2, rtol=5e-2), f"bf16 max abs diff {max_err16}"

    print("KERNEL_OK")
</pallas_src>

<mosaic_0001>
module attributes {stable_mosaic.version = 11 : i64} {
  func.func @_encoder_layer_kernel(%arg0: i32, %arg1: memref<1x8x32xf32, #tpu.memory_space<vmem>>, %arg2: memref<1x32xf32, #tpu.memory_space<vmem>>, %arg3: memref<1x32xf32, #tpu.memory_space<vmem>>, %arg4: memref<32x96xf32, #tpu.memory_space<vmem>>, %arg5: memref<1x96xf32, #tpu.memory_space<vmem>>, %arg6: memref<32x32xf32, #tpu.memory_space<vmem>>, %arg7: memref<1x32xf32, #tpu.memory_space<vmem>>, %arg8: memref<1x32xf32, #tpu.memory_space<vmem>>, %arg9: memref<1x32xf32, #tpu.memory_space<vmem>>, %arg10: memref<32x1024xf32, #tpu.memory_space<vmem>>, %arg11: memref<1x1024xf32, #tpu.memory_space<vmem>>, %arg12: memref<1024x32xf32, #tpu.memory_space<vmem>>, %arg13: memref<1x32xf32, #tpu.memory_space<vmem>>, %arg14: memref<1x8x32xf32, #tpu.memory_space<vmem>>) attributes {dimension_semantics = [#tpu.dimension_semantics<parallel>], iteration_bounds = array<i64: 2>, scalar_prefetch = 0 : i64, scratch_operands = 0 : i64, tpu.core_type = #tpu.core_type<tc>, window_params = [{transform_indices = @transform_0, window_bounds = array<i64: 1, 8, 32>}, {pipeline_mode = #tpu.pipeline_mode<synchronous>, transform_indices = @transform_1, window_bounds = array<i64: 1, 32>}, {pipeline_mode = #tpu.pipeline_mode<synchronous>, transform_indices = @transform_2, window_bounds = array<i64: 1, 32>}, {pipeline_mode = #tpu.pipeline_mode<synchronous>, transform_indices = @transform_3, window_bounds = array<i64: 32, 96>}, {pipeline_mode = #tpu.pipeline_mode<synchronous>, transform_indices = @transform_4, window_bounds = array<i64: 1, 96>}, {pipeline_mode = #tpu.pipeline_mode<synchronous>, transform_indices = @transform_5, window_bounds = array<i64: 32, 32>}, {pipeline_mode = #tpu.pipeline_mode<synchronous>, transform_indices = @transform_6, window_bounds = array<i64: 1, 32>}, {pipeline_mode = #tpu.pipeline_mode<synchronous>, transform_indices = @transform_7, window_bounds = array<i64: 1, 32>}, {pipeline_mode = #tpu.pipeline_mode<synchronous>, transform_indices = @transform_8, window_bounds = array<i64: 1, 32>}, {pipeline_mode = #tpu.pipeline_mode<synchronous>, transform_indices = @transform_9, window_bounds = array<i64: 32, 1024>}, {pipeline_mode = #tpu.pipeline_mode<synchronous>, transform_indices = @transform_10, window_bounds = array<i64: 1, 1024>}, {pipeline_mode = #tpu.pipeline_mode<synchronous>, transform_indices = @transform_11, window_bounds = array<i64: 1024, 32>}, {pipeline_mode = #tpu.pipeline_mode<synchronous>, transform_indices = @transform_12, window_bounds = array<i64: 1, 32>}, {transform_indices = @transform_13, window_bounds = array<i64: 1, 8, 32>}]} {
    %c0 = arith.constant 0 : index
    %c0_0 = arith.constant 0 : index
    %c0_1 = arith.constant 0 : index
    %0 = vector.load %arg1[%c0, %c0_0, %c0_1] : memref<1x8x32xf32, #tpu.memory_space<vmem>>, vector<1x8x32xf32>
    %1 = vector.shape_cast %0 : vector<1x8x32xf32> to vector<8x32xf32>
    %c0_2 = arith.constant 0 : index
    %c0_3 = arith.constant 0 : index
    %2 = vector.load %arg2[%c0_2, %c0_3] : memref<1x32xf32, #tpu.memory_space<vmem>>, vector<1x32xf32>
    %c0_4 = arith.constant 0 : index
    %c0_5 = arith.constant 0 : index
    %3 = vector.load %arg3[%c0_4, %c0_5] : memref<1x32xf32, #tpu.memory_space<vmem>>, vector<1x32xf32>
    %cst = arith.constant dense<0.000000e+00> : vector<8xf32>
    %4 = vector.multi_reduction <add>, %1, %cst [1] : vector<8x32xf32> to vector<8xf32>
    %5 = vector.shape_cast %4 : vector<8xf32> to vector<8x1xf32>
    %cst_6 = arith.constant 3.200000e+01 : f32
    %6 = vector.broadcast %cst_6 : f32 to vector<8x1xf32>
    %7 = arith.divf %5, %6 : vector<8x1xf32>
    %8 = vector.broadcast %7 : vector<8x1xf32> to vector<8x32xf32>
    %9 = arith.subf %1, %8 : vector<8x32xf32>
    %10 = arith.mulf %9, %9 : vector<8x32xf32>
    %cst_7 = arith.constant dense<0.000000e+00> : vector<8xf32>
    %11 = vector.multi_reduction <add>, %10, %cst_7 [1] : vector<8x32xf32> to vector<8xf32>
    %12 = vector.shape_cast %11 : vector<8xf32> to vector<8x1xf32>
    %cst_8 = arith.constant 0.0322580636 : f32
    %13 = vector.broadcast %cst_8 : f32 to vector<8x1xf32>
    %14 = arith.mulf %12, %13 : vector<8x1xf32>
    %15 = math.sqrt %14 : vector<8x1xf32>
    %cst_9 = arith.constant 9.99999997E-7 : f32
    %16 = vector.broadcast %cst_9 : f32 to vector<8x1xf32>
    %17 = arith.addf %15, %16 : vector<8x1xf32>
    %18 = tpu.reciprocal %17 : vector<8x1xf32> -> vector<8x1xf32>
    %19 = vector.broadcast %2 : vector<1x32xf32> to vector<8x32xf32>
    %20 = arith.mulf %19, %9 : vector<8x32xf32>
    %21 = vector.broadcast %18 : vector<8x1xf32> to vector<8x32xf32>
    %22 = arith.mulf %20, %21 : vector<8x32xf32>
    %23 = vector.broadcast %3 : vector<1x32xf32> to vector<8x32xf32>
    %24 = arith.addf %22, %23 : vector<8x32xf32>
    %c0_10 = arith.constant 0 : index
    %c0_11 = arith.constant 0 : index
    %25 = vector.load %arg4[%c0_10, %c0_11] : memref<32x96xf32, #tpu.memory_space<vmem>>, vector<32x96xf32>
    %cst_12 = arith.constant dense<0.000000e+00> : vector<8x96xf32>
    %26 = tpu.matmul %24, %25, %cst_12 {dimension_numbers = #tpu.dot_dimension_numbers<[1], [0], [0], [1], [0, 0, 1, 1], [], []>} : vector<8x32xf32>, vector<32x96xf32>, vector<8x96xf32> -> vector<8x96xf32>
    %c0_13 = arith.constant 0 : index
    %c0_14 = arith.constant 0 : index
    %27 = vector.load %arg5[%c0_13, %c0_14] : memref<1x96xf32, #tpu.memory_space<vmem>>, vector<1x96xf32>
    %28 = vector.broadcast %27 : vector<1x96xf32> to vector<8x96xf32>
    %29 = arith.addf %26, %28 : vector<8x96xf32>
    %30 = vector.extract_strided_slice %29 {offsets = [0, 0], sizes = [8, 8], strides = [1, 1]} : vector<8x96xf32> to vector<8x8xf32>
    %31 = vector.shape_cast %30 : vector<8x8xf32> to vector<1x8x8xf32>
    %32 = vector.extract_strided_slice %29 {offsets = [0, 8], sizes = [8, 8], strides = [1, 1]} : vector<8x96xf32> to vector<8x8xf32>
    %33 = vector.shape_cast %32 : vector<8x8xf32> to vector<1x8x8xf32>
    %34 = vector.extract_strided_slice %29 {offsets = [0, 16], sizes = [8, 8], strides = [1, 1]} : vector<8x96xf32> to vector<8x8xf32>
    %35 = vector.shape_cast %34 : vector<8x8xf32> to vector<1x8x8xf32>
    %36 = vector.extract_strided_slice %29 {offsets = [0, 24], sizes = [8, 8], strides = [1, 1]} : vector<8x96xf32> to vector<8x8xf32>
    %37 = vector.shape_cast %36 : vector<8x8xf32> to vector<1x8x8xf32>
    %38 = tpu.concatenate %31, %33, %35, %37 in 0 : vector<1x8x8xf32>, vector<1x8x8xf32>, vector<1x8x8xf32>, vector<1x8x8xf32> -> vector<4x8x8xf32>
    %39 = vector.extract_strided_slice %29 {offsets = [0, 32], sizes = [8, 8], strides = [1, 1]} : vector<8x96xf32> to vector<8x8xf32>
    %40 = vector.shape_cast %39 : vector<8x8xf32> to vector<1x8x8xf32>
    %41 = vector.extract_strided_slice %29 {offsets = [0, 40], sizes = [8, 8], strides = [1, 1]} : vector<8x96xf32> to vector<8x8xf32>
    %42 = vector.shape_cast %41 : vector<8x8xf32> to vector<1x8x8xf32>
    %43 = vector.extract_strided_slice %29 {offsets = [0, 48], sizes = [8, 8], strides = [1, 1]} : vector<8x96xf32> to vector<8x8xf32>
    %44 = vector.shape_cast %43 : vector<8x8xf32> to vector<1x8x8xf32>
    %45 = vector.extract_strided_slice %29 {offsets = [0, 56], sizes = [8, 8], strides = [1, 1]} : vector<8x96xf32> to vector<8x8xf32>
    %46 = vector.shape_cast %45 : vector<8x8xf32> to vector<1x8x8xf32>
    %47 = tpu.concatenate %40, %42, %44, %46 in 0 : vector<1x8x8xf32>, vector<1x8x8xf32>, vector<1x8x8xf32>, vector<1x8x8xf32> -> vector<4x8x8xf32>
    %48 = vector.extract_strided_slice %29 {offsets = [0, 64], sizes = [8, 8], strides = [1, 1]} : vector<8x96xf32> to vector<8x8xf32>
    %49 = vector.shape_cast %48 : vector<8x8xf32> to vector<1x8x8xf32>
    %50 = vector.extract_strided_slice %29 {offsets = [0, 72], sizes = [8, 8], strides = [1, 1]} : vector<8x96xf32> to vector<8x8xf32>
    %51 = vector.shape_cast %50 : vector<8x8xf32> to vector<1x8x8xf32>
    %52 = vector.extract_strided_slice %29 {offsets = [0, 80], sizes = [8, 8], strides = [1, 1]} : vector<8x96xf32> to vector<8x8xf32>
    %53 = vector.shape_cast %52 : vector<8x8xf32> to vector<1x8x8xf32>
    %54 = vector.extract_strided_slice %29 {offsets = [0, 88], sizes = [8, 8], strides = [1, 1]} : vector<8x96xf32> to vector<8x8xf32>
    %55 = vector.shape_cast %54 : vector<8x8xf32> to vector<1x8x8xf32>
    %56 = tpu.concatenate %49, %51, %53, %55 in 0 : vector<1x8x8xf32>, vector<1x8x8xf32>, vector<1x8x8xf32>, vector<1x8x8xf32> -> vector<4x8x8xf32>
    %cst_15 = arith.constant 0xFF800000 : f32
    %57 = vector.broadcast %cst_15 : f32 to vector<4x8x1xf32>
    %cst_16 = arith.constant 0.000000e+00 : f32
    %58 = vector.broadcast %cst_16 : f32 to vector<4x8x1xf32>
    %cst_17 = arith.constant 0.000000e+00 : f32
    %59 = vector.broadcast %cst_17 : f32 to vector<4x8x8xf32>
    "tpu.trace_start"() <{level = 10 : i32, message = "bqd,bkd->bqk"}> : () -> ()
    %cst_18 = arith.constant dense<0.000000e+00> : vector<4x8x8xf32>
    %60 = tpu.matmul %38, %47, %cst_18 {dimension_numbers = #tpu.dot_dimension_numbers<[2], [2], [1], [1], [0, 0, 0, 1, 1, 1], [0], [0]>} : vector<4x8x8xf32>, vector<4x8x8xf32>, vector<4x8x8xf32> -> vector<4x8x8xf32>
    "tpu.trace_stop"() : () -> ()
    %cst_19 = arith.constant 0.353553385 : f32
    %61 = vector.broadcast %cst_19 : f32 to vector<4x8x8xf32>
    %62 = arith.mulf %60, %61 : vector<4x8x8xf32>
    %cst_20 = arith.constant dense<0xFF800000> : vector<4x8xf32>
    %63 = vector.multi_reduction <maximumf>, %62, %cst_20 [2] : vector<4x8x8xf32> to vector<4x8xf32>
    %64 = vector.shape_cast %63 : vector<4x8xf32> to vector<4x8x1xf32>
    %65 = arith.maximumf %57, %64 : vector<4x8x1xf32>
    %66 = arith.subf %57, %65 : vector<4x8x1xf32>
    %67 = math.exp %66 : vector<4x8x1xf32>
    %68 = vector.broadcast %65 : vector<4x8x1xf32> to vector<4x8x8xf32>
    %69 = arith.subf %62, %68 : vector<4x8x8xf32>
    %70 = math.exp %69 : vector<4x8x8xf32>
    %71 = arith.mulf %67, %58 : vector<4x8x1xf32>
    %cst_21 = arith.constant dense<0.000000e+00> : vector<4x8xf32>
    %72 = vector.multi_reduction <add>, %70, %cst_21 [2] : vector<4x8x8xf32> to vector<4x8xf32>
    %73 = vector.shape_cast %72 : vector<4x8xf32> to vector<4x8x1xf32>
    %74 = arith.addf %71, %73 : vector<4x8x1xf32>
    %75 = vector.broadcast %67 : vector<4x8x1xf32> to vector<4x8x8xf32>
    %76 = arith.mulf %75, %59 : vector<4x8x8xf32>
    "tpu.trace_start"() <{level = 10 : i32, message = "bqk,bkd->bqd"}> : () -> ()
    %cst_22 = arith.constant dense<0.000000e+00> : vector<4x8x8xf32>
    %77 = tpu.matmul %70, %56, %cst_22 {dimension_numbers = #tpu.dot_dimension_numbers<[2], [1], [1], [2], [0, 0, 0, 1, 1, 2], [0], [0]>} : vector<4x8x8xf32>, vector<4x8x8xf32>, vector<4x8x8xf32> -> vector<4x8x8xf32>
    "tpu.trace_stop"() : () -> ()
    %78 = arith.addf %76, %77 : vector<4x8x8xf32>
    %79 = tpu.reciprocal %74 : vector<4x8x1xf32> -> vector<4x8x1xf32>
    %80 = vector.broadcast %79 : vector<4x8x1xf32> to vector<4x8x8xf32>
    %81 = arith.mulf %78, %80 : vector<4x8x8xf32>
    %82 = vector.extract_strided_slice %81 {offsets = [0, 0, 0], sizes = [1, 8, 8], strides = [1, 1, 1]} : vector<4x8x8xf32> to vector<1x8x8xf32>
    %83 = vector.shape_cast %82 : vector<1x8x8xf32> to vector<8x8xf32>
    %84 = vector.extract_strided_slice %81 {offsets = [1, 0, 0], sizes = [1, 8, 8], strides = [1, 1, 1]} : vector<4x8x8xf32> to vector<1x8x8xf32>
    %85 = vector.shape_cast %84 : vector<1x8x8xf32> to vector<8x8xf32>
    %86 = vector.extract_strided_slice %81 {offsets = [2, 0, 0], sizes = [1, 8, 8], strides = [1, 1, 1]} : vector<4x8x8xf32> to vector<1x8x8xf32>
    %87 = vector.shape_cast %86 : vector<1x8x8xf32> to vector<8x8xf32>
    %88 = vector.extract_strided_slice %81 {offsets = [3, 0, 0], sizes = [1, 8, 8], strides = [1, 1, 1]} : vector<4x8x8xf32> to vector<1x8x8xf32>
    %89 = vector.shape_cast %88 : vector<1x8x8xf32> to vector<8x8xf32>
    %90 = tpu.concatenate %83, %85, %87, %89 in 1 : vector<8x8xf32>, vector<8x8xf32>, vector<8x8xf32>, vector<8x8xf32> -> vector<8x32xf32>
    %c0_23 = arith.constant 0 : index
    %c0_24 = arith.constant 0 : index
    %91 = vector.load %arg6[%c0_23, %c0_24] : memref<32x32xf32, #tpu.memory_space<vmem>>, vector<32x32xf32>
    %cst_25 = arith.constant dense<0.000000e+00> : vector<8x32xf32>
    %92 = tpu.matmul %90, %91, %cst_25 {dimension_numbers = #tpu.dot_dimension_numbers<[1], [0], [0], [1], [0, 0, 1, 1], [], []>} : vector<8x32xf32>, vector<32x32xf32>, vector<8x32xf32> -> vector<8x32xf32>
    %c0_26 = arith.constant 0 : index
    %c0_27 = arith.constant 0 : index
    %93 = vector.load %arg7[%c0_26, %c0_27] : memref<1x32xf32, #tpu.memory_space<vmem>>, vector<1x32xf32>
    %94 = vector.broadcast %93 : vector<1x32xf32> to vector<8x32xf32>
    %95 = arith.addf %92, %94 : vector<8x32xf32>
    %96 = arith.addf %1, %95 : vector<8x32xf32>
    %c0_28 = arith.constant 0 : index
    %c0_29 = arith.constant 0 : index
    %97 = vector.load %arg8[%c0_28, %c0_29] : memref<1x32xf32, #tpu.memory_space<vmem>>, vector<1x32xf32>
    %c0_30 = arith.constant 0 : index
    %c0_31 = arith.constant 0 : index
    %98 = vector.load %arg9[%c0_30, %c0_31] : memref<1x32xf32, #tpu.memory_space<vmem>>, vector<1x32xf32>
    %cst_32 = arith.constant dense<0.000000e+00> : vector<8xf32>
    %99 = vector.multi_reduction <add>, %96, %cst_32 [1] : vector<8x32xf32> to vector<8xf32>
    %100 = vector.shape_cast %99 : vector<8xf32> to vector<8x1xf32>
    %cst_33 = arith.constant 3.200000e+01 : f32
    %101 = vector.broadcast %cst_33 : f32 to vector<8x1xf32>
    %102 = arith.divf %100, %101 : vector<8x1xf32>
    %103 = vector.broadcast %102 : vector<8x1xf32> to vector<8x32xf32>
    %104 = arith.subf %96, %103 : vector<8x32xf32>
    %105 = arith.mulf %104, %104 : vector<8x32xf32>
    %cst_34 = arith.constant dense<0.000000e+00> : vector<8xf32>
    %106 = vector.multi_reduction <add>, %105, %cst_34 [1] : vector<8x32xf32> to vector<8xf32>
    %107 = vector.shape_cast %106 : vector<8xf32> to vector<8x1xf32>
    %cst_35 = arith.constant 0.0322580636 : f32
    %108 = vector.broadcast %cst_35 : f32 to vector<8x1xf32>
    %109 = arith.mulf %107, %108 : vector<8x1xf32>
    %110 = math.sqrt %109 : vector<8x1xf32>
    %cst_36 = arith.constant 9.99999997E-7 : f32
    %111 = vector.broadcast %cst_36 : f32 to vector<8x1xf32>
    %112 = arith.addf %110, %111 : vector<8x1xf32>
    %113 = tpu.reciprocal %112 : vector<8x1xf32> -> vector<8x1xf32>
    %114 = vector.broadcast %97 : vector<1x32xf32> to vector<8x32xf32>
    %115 = arith.mulf %114, %104 : vector<8x32xf32>
    %116 = vector.broadcast %113 : vector<8x1xf32> to vector<8x32xf32>
    %117 = arith.mulf %115, %116 : vector<8x32xf32>
    %118 = vector.broadcast %98 : vector<1x32xf32> to vector<8x32xf32>
    %119 = arith.addf %117, %118 : vector<8x32xf32>
    %c0_37 = arith.constant 0 : index
    %c0_38 = arith.constant 0 : index
    %120 = vector.load %arg10[%c0_37, %c0_38] : memref<32x1024xf32, #tpu.memory_space<vmem>>, vector<32x1024xf32>
    %cst_39 = arith.constant dense<0.000000e+00> : vector<8x1024xf32>
    %121 = tpu.matmul %119, %120, %cst_39 {dimension_numbers = #tpu.dot_dimension_numbers<[1], [0], [0], [1], [0, 0, 1, 1], [], []>} : vector<8x32xf32>, vector<32x1024xf32>, vector<8x1024xf32> -> vector<8x1024xf32>
    %c0_40 = arith.constant 0 : index
    %c0_41 = arith.constant 0 : index
    %122 = vector.load %arg11[%c0_40, %c0_41] : memref<1x1024xf32, #tpu.memory_space<vmem>>, vector<1x1024xf32>
    %123 = vector.broadcast %122 : vector<1x1024xf32> to vector<8x1024xf32>
    %124 = arith.addf %121, %123 : vector<8x1024xf32>
    %cst_42 = arith.constant 0.000000e+00 : f32
    %125 = vector.broadcast %cst_42 : f32 to vector<8x1024xf32>
    %126 = arith.maximumf %124, %125 : vector<8x1024xf32>
    %c0_43 = arith.constant 0 : index
    %c0_44 = arith.constant 0 : index
    %127 = vector.load %arg12[%c0_43, %c0_44] : memref<1024x32xf32, #tpu.memory_space<vmem>>, vector<1024x32xf32>
    %cst_45 = arith.constant dense<0.000000e+00> : vector<8x32xf32>
    %128 = tpu.matmul %126, %127, %cst_45 {dimension_numbers = #tpu.dot_dimension_numbers<[1], [0], [0], [1], [0, 0, 1, 1], [], []>} : vector<8x1024xf32>, vector<1024x32xf32>, vector<8x32xf32> -> vector<8x32xf32>
    %129 = arith.addf %96, %128 : vector<8x32xf32>
    %c0_46 = arith.constant 0 : index
    %c0_47 = arith.constant 0 : index
    %130 = vector.load %arg13[%c0_46, %c0_47] : memref<1x32xf32, #tpu.memory_space<vmem>>, vector<1x32xf32>
    %131 = vector.broadcast %130 : vector<1x32xf32> to vector<8x32xf32>
    %132 = arith.addf %129, %131 : vector<8x32xf32>
    %133 = vector.shape_cast %132 : vector<8x32xf32> to vector<1x8x32xf32>
    %c0_48 = arith.constant 0 : index
    %c0_49 = arith.constant 0 : index
    %c0_50 = arith.constant 0 : index
    %134 = vector.load %arg14[%c0_48, %c0_49, %c0_50] : memref<1x8x32xf32, #tpu.memory_space<vmem>>, vector<1x8x32xf32>
    tpu.vector_store %arg14[%c0_48, %c0_49, %c0_50], %133 {strides = array<i32>} : memref<1x8x32xf32, #tpu.memory_space<vmem>>, vector<1x8x32xf32>,
    return
  }
  func.func @transform_0(%arg0: i32) -> (i32, i32, i32) {
    %c0_i32 = arith.constant 0 : i32
    %c0_i32_0 = arith.constant 0 : i32
    %c0_i32_1 = arith.constant 0 : i32
    return %arg0, %c0_i32, %c0_i32_0 : i32, i32, i32
  }
  func.func @transform_1(%arg0: i32) -> (i32, i32) {
    %c0_i32 = arith.constant 0 : i32
    %c0_i32_0 = arith.constant 0 : i32
    %c0_i32_1 = arith.constant 0 : i32
    return %c0_i32, %c0_i32_0 : i32, i32
  }
  func.func @transform_2(%arg0: i32) -> (i32, i32) {
    %c0_i32 = arith.constant 0 : i32
    %c0_i32_0 = arith.constant 0 : i32
    %c0_i32_1 = arith.constant 0 : i32
    return %c0_i32, %c0_i32_0 : i32, i32
  }
  func.func @transform_3(%arg0: i32) -> (i32, i32) {
    %c0_i32 = arith.constant 0 : i32
    %c0_i32_0 = arith.constant 0 : i32
    %c0_i32_1 = arith.constant 0 : i32
    return %c0_i32, %c0_i32_0 : i32, i32
  }
  func.func @transform_4(%arg0: i32) -> (i32, i32) {
    %c0_i32 = arith.constant 0 : i32
    %c0_i32_0 = arith.constant 0 : i32
    %c0_i32_1 = arith.constant 0 : i32
    return %c0_i32, %c0_i32_0 : i32, i32
  }
  func.func @transform_5(%arg0: i32) -> (i32, i32) {
    %c0_i32 = arith.constant 0 : i32
    %c0_i32_0 = arith.constant 0 : i32
    %c0_i32_1 = arith.constant 0 : i32
    return %c0_i32, %c0_i32_0 : i32, i32
  }
  func.func @transform_6(%arg0: i32) -> (i32, i32) {
    %c0_i32 = arith.constant 0 : i32
    %c0_i32_0 = arith.constant 0 : i32
    %c0_i32_1 = arith.constant 0 : i32
    return %c0_i32, %c0_i32_0 : i32, i32
  }
  func.func @transform_7(%arg0: i32) -> (i32, i32) {
    %c0_i32 = arith.constant 0 : i32
    %c0_i32_0 = arith.constant 0 : i32
    %c0_i32_1 = arith.constant 0 : i32
    return %c0_i32, %c0_i32_0 : i32, i32
  }
  func.func @transform_8(%arg0: i32) -> (i32, i32) {
    %c0_i32 = arith.constant 0 : i32
    %c0_i32_0 = arith.constant 0 : i32
    %c0_i32_1 = arith.constant 0 : i32
    return %c0_i32, %c0_i32_0 : i32, i32
  }
  func.func @transform_9(%arg0: i32) -> (i32, i32) {
    %c0_i32 = arith.constant 0 : i32
    %c0_i32_0 = arith.constant 0 : i32
    %c0_i32_1 = arith.constant 0 : i32
    return %c0_i32, %c0_i32_0 : i32, i32
  }
  func.func @transform_10(%arg0: i32) -> (i32, i32) {
    %c0_i32 = arith.constant 0 : i32
    %c0_i32_0 = arith.constant 0 : i32
    %c0_i32_1 = arith.constant 0 : i32
    return %c0_i32, %c0_i32_0 : i32, i32
  }
  func.func @transform_11(%arg0: i32) -> (i32, i32) {
    %c0_i32 = arith.constant 0 : i32
    %c0_i32_0 = arith.constant 0 : i32
    %c0_i32_1 = arith.constant 0 : i32
    return %c0_i32, %c0_i32_0 : i32, i32
  }
  func.func @transform_12(%arg0: i32) -> (i32, i32) {
    %c0_i32 = arith.constant 0 : i32
    %c0_i32_0 = arith.constant 0 : i32
    %c0_i32_1 = arith.constant 0 : i32
    return %c0_i32, %c0_i32_0 : i32, i32
  }
  func.func @transform_13(%arg0: i32) -> (i32, i32, i32) {
    %c0_i32 = arith.constant 0 : i32
    %c0_i32_0 = arith.constant 0 : i32
    %c0_i32_1 = arith.constant 0 : i32
    return %arg0, %c0_i32, %c0_i32_0 : i32, i32, i32
  }
}

module attributes {stable_mosaic.version = 11 : i64} {
  func.func @_encoder_layer_kernel(%arg0: i32, %arg1: memref<1x8x32xf32, #tpu.memory_space<vmem>>, %arg2: memref<1x32xf32, #tpu.memory_space<vmem>>, %arg3: memref<1x32xf32, #tpu.memory_space<vmem>>, %arg4: memref<32x96xf32, #tpu.memory_space<vmem>>, %arg5: memref<1x96xf32, #tpu.memory_space<vmem>>, %arg6: memref<32x32xf32, #tpu.memory_space<vmem>>, %arg7: memref<1x32xf32, #tpu.memory_space<vmem>>, %arg8: memref<1x32xf32, #tpu.memory_space<vmem>>, %arg9: memref<1x32xf32, #tpu.memory_space<vmem>>, %arg10: memref<32x1024xf32, #tpu.memory_space<vmem>>, %arg11: memref<1x1024xf32, #tpu.memory_space<vmem>>, %arg12: memref<1024x32xf32, #tpu.memory_space<vmem>>, %arg13: memref<1x32xf32, #tpu.memory_space<vmem>>, %arg14: memref<1x8x32xf32, #tpu.memory_space<vmem>>) attributes {dimension_semantics = [#tpu.dimension_semantics<parallel>], iteration_bounds = array<i64: 2>, scalar_prefetch = 0 : i64, scratch_operands = 0 : i64, tpu.core_type = #tpu.core_type<tc>, window_params = [{transform_indices = @transform_0, window_bounds = array<i64: 1, 8, 32>}, {pipeline_mode = #tpu.pipeline_mode<synchronous>, transform_indices = @transform_1, window_bounds = array<i64: 1, 32>}, {pipeline_mode = #tpu.pipeline_mode<synchronous>, transform_indices = @transform_2, window_bounds = array<i64: 1, 32>}, {pipeline_mode = #tpu.pipeline_mode<synchronous>, transform_indices = @transform_3, window_bounds = array<i64: 32, 96>}, {pipeline_mode = #tpu.pipeline_mode<synchronous>, transform_indices = @transform_4, window_bounds = array<i64: 1, 96>}, {pipeline_mode = #tpu.pipeline_mode<synchronous>, transform_indices = @transform_5, window_bounds = array<i64: 32, 32>}, {pipeline_mode = #tpu.pipeline_mode<synchronous>, transform_indices = @transform_6, window_bounds = array<i64: 1, 32>}, {pipeline_mode = #tpu.pipeline_mode<synchronous>, transform_indices = @transform_7, window_bounds = array<i64: 1, 32>}, {pipeline_mode = #tpu.pipeline_mode<synchronous>, transform_indices = @transform_8, window_bounds = array<i64: 1, 32>}, {pipeline_mode = #tpu.pipeline_mode<synchronous>, transform_indices = @transform_9, window_bounds = array<i64: 32, 1024>}, {pipeline_mode = #tpu.pipeline_mode<synchronous>, transform_indices = @transform_10, window_bounds = array<i64: 1, 1024>}, {pipeline_mode = #tpu.pipeline_mode<synchronous>, transform_indices = @transform_11, window_bounds = array<i64: 1024, 32>}, {pipeline_mode = #tpu.pipeline_mode<synchronous>, transform_indices = @transform_12, window_bounds = array<i64: 1, 32>}, {transform_indices = @transform_13, window_bounds = array<i64: 1, 8, 32>}]} {
    %c0 = arith.constant 0 : index
    %c0_0 = arith.constant 0 : index
    %c0_1 = arith.constant 0 : index
    %0 = vector.load %arg1[%c0, %c0_0, %c0_1] : memref<1x8x32xf32, #tpu.memory_space<vmem>>, vector<1x8x32xf32>
    %1 = vector.shape_cast %0 : vector<1x8x32xf32> to vector<8x32xf32>
    %c0_2 = arith.constant 0 : index
    %c0_3 = arith.constant 0 : index
    %2 = vector.load %arg2[%c0_2, %c0_3] : memref<1x32xf32, #tpu.memory_space<vmem>>, vector<1x32xf32>
    %c0_4 = arith.constant 0 : index
    %c0_5 = arith.constant 0 : index
    %3 = vector.load %arg3[%c0_4, %c0_5] : memref<1x32xf32, #tpu.memory_space<vmem>>, vector<1x32xf32>
    %cst = arith.constant dense<0.000000e+00> : vector<8xf32>
    %4 = vector.multi_reduction <add>, %1, %cst [1] : vector<8x32xf32> to vector<8xf32>
    %5 = vector.shape_cast %4 : vector<8xf32> to vector<8x1xf32>
    %cst_6 = arith.constant 3.200000e+01 : f32
    %6 = vector.broadcast %cst_6 : f32 to vector<8x1xf32>
    %7 = arith.divf %5, %6 : vector<8x1xf32>
    %8 = vector.broadcast %7 : vector<8x1xf32> to vector<8x32xf32>
    %9 = arith.subf %1, %8 : vector<8x32xf32>
    %10 = arith.mulf %9, %9 : vector<8x32xf32>
    %cst_7 = arith.constant dense<0.000000e+00> : vector<8xf32>
    %11 = vector.multi_reduction <add>, %10, %cst_7 [1] : vector<8x32xf32> to vector<8xf32>
    %12 = vector.shape_cast %11 : vector<8xf32> to vector<8x1xf32>
    %cst_8 = arith.constant 0.0322580636 : f32
    %13 = vector.broadcast %cst_8 : f32 to vector<8x1xf32>
    %14 = arith.mulf %12, %13 : vector<8x1xf32>
    %15 = math.sqrt %14 : vector<8x1xf32>
    %cst_9 = arith.constant 9.99999997E-7 : f32
    %16 = vector.broadcast %cst_9 : f32 to vector<8x1xf32>
    %17 = arith.addf %15, %16 : vector<8x1xf32>
    %18 = tpu.reciprocal %17 : vector<8x1xf32> -> vector<8x1xf32>
    %19 = vector.broadcast %2 : vector<1x32xf32> to vector<8x32xf32>
    %20 = arith.mulf %19, %9 : vector<8x32xf32>
    %21 = vector.broadcast %18 : vector<8x1xf32> to vector<8x32xf32>
    %22 = arith.mulf %20, %21 : vector<8x32xf32>
    %23 = vector.broadcast %3 : vector<1x32xf32> to vector<8x32xf32>
    %24 = arith.addf %22, %23 : vector<8x32xf32>
    %c0_10 = arith.constant 0 : index
    %c0_11 = arith.constant 0 : index
    %25 = vector.load %arg4[%c0_10, %c0_11] : memref<32x96xf32, #tpu.memory_space<vmem>>, vector<32x96xf32>
    %cst_12 = arith.constant dense<0.000000e+00> : vector<8x96xf32>
    %26 = tpu.matmul %24, %25, %cst_12 {dimension_numbers = #tpu.dot_dimension_numbers<[1], [0], [0], [1], [0, 0, 1, 1], [], []>} : vector<8x32xf32>, vector<32x96xf32>, vector<8x96xf32> -> vector<8x96xf32>
    %c0_13 = arith.constant 0 : index
    %c0_14 = arith.constant 0 : index
    %27 = vector.load %arg5[%c0_13, %c0_14] : memref<1x96xf32, #tpu.memory_space<vmem>>, vector<1x96xf32>
    %28 = vector.broadcast %27 : vector<1x96xf32> to vector<8x96xf32>
    %29 = arith.addf %26, %28 : vector<8x96xf32>
    %30 = vector.extract_strided_slice %29 {offsets = [0, 0], sizes = [8, 8], strides = [1, 1]} : vector<8x96xf32> to vector<8x8xf32>
    %31 = vector.shape_cast %30 : vector<8x8xf32> to vector<1x8x8xf32>
    %32 = vector.extract_strided_slice %29 {offsets = [0, 8], sizes = [8, 8], strides = [1, 1]} : vector<8x96xf32> to vector<8x8xf32>
    %33 = vector.shape_cast %32 : vector<8x8xf32> to vector<1x8x8xf32>
    %34 = vector.extract_strided_slice %29 {offsets = [0, 16], sizes = [8, 8], strides = [1, 1]} : vector<8x96xf32> to vector<8x8xf32>
    %35 = vector.shape_cast %34 : vector<8x8xf32> to vector<1x8x8xf32>
    %36 = vector.extract_strided_slice %29 {offsets = [0, 24], sizes = [8, 8], strides = [1, 1]} : vector<8x96xf32> to vector<8x8xf32>
    %37 = vector.shape_cast %36 : vector<8x8xf32> to vector<1x8x8xf32>
    %38 = tpu.concatenate %31, %33, %35, %37 in 0 : vector<1x8x8xf32>, vector<1x8x8xf32>, vector<1x8x8xf32>, vector<1x8x8xf32> -> vector<4x8x8xf32>
    %39 = vector.extract_strided_slice %29 {offsets = [0, 32], sizes = [8, 8], strides = [1, 1]} : vector<8x96xf32> to vector<8x8xf32>
    %40 = vector.shape_cast %39 : vector<8x8xf32> to vector<1x8x8xf32>
    %41 = vector.extract_strided_slice %29 {offsets = [0, 40], sizes = [8, 8], strides = [1, 1]} : vector<8x96xf32> to vector<8x8xf32>
    %42 = vector.shape_cast %41 : vector<8x8xf32> to vector<1x8x8xf32>
    %43 = vector.extract_strided_slice %29 {offsets = [0, 48], sizes = [8, 8], strides = [1, 1]} : vector<8x96xf32> to vector<8x8xf32>
    %44 = vector.shape_cast %43 : vector<8x8xf32> to vector<1x8x8xf32>
    %45 = vector.extract_strided_slice %29 {offsets = [0, 56], sizes = [8, 8], strides = [1, 1]} : vector<8x96xf32> to vector<8x8xf32>
    %46 = vector.shape_cast %45 : vector<8x8xf32> to vector<1x8x8xf32>
    %47 = tpu.concatenate %40, %42, %44, %46 in 0 : vector<1x8x8xf32>, vector<1x8x8xf32>, vector<1x8x8xf32>, vector<1x8x8xf32> -> vector<4x8x8xf32>
    %48 = vector.extract_strided_slice %29 {offsets = [0, 64], sizes = [8, 8], strides = [1, 1]} : vector<8x96xf32> to vector<8x8xf32>
    %49 = vector.shape_cast %48 : vector<8x8xf32> to vector<1x8x8xf32>
    %50 = vector.extract_strided_slice %29 {offsets = [0, 72], sizes = [8, 8], strides = [1, 1]} : vector<8x96xf32> to vector<8x8xf32>
    %51 = vector.shape_cast %50 : vector<8x8xf32> to vector<1x8x8xf32>
    %52 = vector.extract_strided_slice %29 {offsets = [0, 80], sizes = [8, 8], strides = [1, 1]} : vector<8x96xf32> to vector<8x8xf32>
    %53 = vector.shape_cast %52 : vector<8x8xf32> to vector<1x8x8xf32>
    %54 = vector.extract_strided_slice %29 {offsets = [0, 88], sizes = [8, 8], strides = [1, 1]} : vector<8x96xf32> to vector<8x8xf32>
    %55 = vector.shape_cast %54 : vector<8x8xf32> to vector<1x8x8xf32>
    %56 = tpu.concatenate %49, %51, %53, %55 in 0 : vector<1x8x8xf32>, vector<1x8x8xf32>, vector<1x8x8xf32>, vector<1x8x8xf32> -> vector<4x8x8xf32>
    %cst_15 = arith.constant 0xFF800000 : f32
    %57 = vector.broadcast %cst_15 : f32 to vector<4x8x1xf32>
    %cst_16 = arith.constant 0.000000e+00 : f32
    %58 = vector.broadcast %cst_16 : f32 to vector<4x8x1xf32>
    %cst_17 = arith.constant 0.000000e+00 : f32
    %59 = vector.broadcast %cst_17 : f32 to vector<4x8x8xf32>
    "tpu.trace_start"() <{level = 10 : i32, message = "bqd,bkd->bqk"}> : () -> ()
    %cst_18 = arith.constant dense<0.000000e+00> : vector<4x8x8xf32>
    %60 = tpu.matmul %38, %47, %cst_18 {dimension_numbers = #tpu.dot_dimension_numbers<[2], [2], [1], [1], [0, 0, 0, 1, 1, 1], [0], [0]>} : vector<4x8x8xf32>, vector<4x8x8xf32>, vector<4x8x8xf32> -> vector<4x8x8xf32>
    "tpu.trace_stop"() : () -> ()
    %cst_19 = arith.constant 0.353553385 : f32
    %61 = vector.broadcast %cst_19 : f32 to vector<4x8x8xf32>
    %62 = arith.mulf %60, %61 : vector<4x8x8xf32>
    %cst_20 = arith.constant dense<0xFF800000> : vector<4x8xf32>
    %63 = vector.multi_reduction <maximumf>, %62, %cst_20 [2] : vector<4x8x8xf32> to vector<4x8xf32>
    %64 = vector.shape_cast %63 : vector<4x8xf32> to vector<4x8x1xf32>
    %65 = arith.maximumf %57, %64 : vector<4x8x1xf32>
    %66 = arith.subf %57, %65 : vector<4x8x1xf32>
    %67 = math.exp %66 : vector<4x8x1xf32>
    %68 = vector.broadcast %65 : vector<4x8x1xf32> to vector<4x8x8xf32>
    %69 = arith.subf %62, %68 : vector<4x8x8xf32>
    %70 = math.exp %69 : vector<4x8x8xf32>
    %71 = arith.mulf %67, %58 : vector<4x8x1xf32>
    %cst_21 = arith.constant dense<0.000000e+00> : vector<4x8xf32>
    %72 = vector.multi_reduction <add>, %70, %cst_21 [2] : vector<4x8x8xf32> to vector<4x8xf32>
    %73 = vector.shape_cast %72 : vector<4x8xf32> to vector<4x8x1xf32>
    %74 = arith.addf %71, %73 : vector<4x8x1xf32>
    %75 = vector.broadcast %67 : vector<4x8x1xf32> to vector<4x8x8xf32>
    %76 = arith.mulf %75, %59 : vector<4x8x8xf32>
    "tpu.trace_start"() <{level = 10 : i32, message = "bqk,bkd->bqd"}> : () -> ()
    %cst_22 = arith.constant dense<0.000000e+00> : vector<4x8x8xf32>
    %77 = tpu.matmul %70, %56, %cst_22 {dimension_numbers = #tpu.dot_dimension_numbers<[2], [1], [1], [2], [0, 0, 0, 1, 1, 2], [0], [0]>} : vector<4x8x8xf32>, vector<4x8x8xf32>, vector<4x8x8xf32> -> vector<4x8x8xf32>
    "tpu.trace_stop"() : () -> ()
    %78 = arith.addf %76, %77 : vector<4x8x8xf32>
    %79 = tpu.reciprocal %74 : vector<4x8x1xf32> -> vector<4x8x1xf32>
    %80 = vector.broadcast %79 : vector<4x8x1xf32> to vector<4x8x8xf32>
    %81 = arith.mulf %78, %80 : vector<4x8x8xf32>
    %82 = vector.extract_strided_slice %81 {offsets = [0, 0, 0], sizes = [1, 8, 8], strides = [1, 1, 1]} : vector<4x8x8xf32> to vector<1x8x8xf32>
    %83 = vector.shape_cast %82 : vector<1x8x8xf32> to vector<8x8xf32>
    %84 = vector.extract_strided_slice %81 {offsets = [1, 0, 0], sizes = [1, 8, 8], strides = [1, 1, 1]} : vector<4x8x8xf32> to vector<1x8x8xf32>
    %85 = vector.shape_cast %84 : vector<1x8x8xf32> to vector<8x8xf32>
    %86 = vector.extract_strided_slice %81 {offsets = [2, 0, 0], sizes = [1, 8, 8], strides = [1, 1, 1]} : vector<4x8x8xf32> to vector<1x8x8xf32>
    %87 = vector.shape_cast %86 : vector<1x8x8xf32> to vector<8x8xf32>
    %88 = vector.extract_strided_slice %81 {offsets = [3, 0, 0], sizes = [1, 8, 8], strides = [1, 1, 1]} : vector<4x8x8xf32> to vector<1x8x8xf32>
    %89 = vector.shape_cast %88 : vector<1x8x8xf32> to vector<8x8xf32>
    %90 = tpu.concatenate %83, %85, %87, %89 in 1 : vector<8x8xf32>, vector<8x8xf32>, vector<8x8xf32>, vector<8x8xf32> -> vector<8x32xf32>
    %c0_23 = arith.constant 0 : index
    %c0_24 = arith.constant 0 : index
    %91 = vector.load %arg6[%c0_23, %c0_24] : memref<32x32xf32, #tpu.memory_space<vmem>>, vector<32x32xf32>
    %cst_25 = arith.constant dense<0.000000e+00> : vector<8x32xf32>
    %92 = tpu.matmul %90, %91, %cst_25 {dimension_numbers = #tpu.dot_dimension_numbers<[1], [0], [0], [1], [0, 0, 1, 1], [], []>} : vector<8x32xf32>, vector<32x32xf32>, vector<8x32xf32> -> vector<8x32xf32>
    %c0_26 = arith.constant 0 : index
    %c0_27 = arith.constant 0 : index
    %93 = vector.load %arg7[%c0_26, %c0_27] : memref<1x32xf32, #tpu.memory_space<vmem>>, vector<1x32xf32>
    %94 = vector.broadcast %93 : vector<1x32xf32> to vector<8x32xf32>
    %95 = arith.addf %92, %94 : vector<8x32xf32>
    %96 = arith.addf %1, %95 : vector<8x32xf32>
    %c0_28 = arith.constant 0 : index
    %c0_29 = arith.constant 0 : index
    %97 = vector.load %arg8[%c0_28, %c0_29] : memref<1x32xf32, #tpu.memory_space<vmem>>, vector<1x32xf32>
    %c0_30 = arith.constant 0 : index
    %c0_31 = arith.constant 0 : index
    %98 = vector.load %arg9[%c0_30, %c0_31] : memref<1x32xf32, #tpu.memory_space<vmem>>, vector<1x32xf32>
    %cst_32 = arith.constant dense<0.000000e+00> : vector<8xf32>
    %99 = vector.multi_reduction <add>, %96, %cst_32 [1] : vector<8x32xf32> to vector<8xf32>
    %100 = vector.shape_cast %99 : vector<8xf32> to vector<8x1xf32>
    %cst_33 = arith.constant 3.200000e+01 : f32
    %101 = vector.broadcast %cst_33 : f32 to vector<8x1xf32>
    %102 = arith.divf %100, %101 : vector<8x1xf32>
    %103 = vector.broadcast %102 : vector<8x1xf32> to vector<8x32xf32>
    %104 = arith.subf %96, %103 : vector<8x32xf32>
    %105 = arith.mulf %104, %104 : vector<8x32xf32>
    %cst_34 = arith.constant dense<0.000000e+00> : vector<8xf32>
    %106 = vector.multi_reduction <add>, %105, %cst_34 [1] : vector<8x32xf32> to vector<8xf32>
    %107 = vector.shape_cast %106 : vector<8xf32> to vector<8x1xf32>
    %cst_35 = arith.constant 0.0322580636 : f32
    %108 = vector.broadcast %cst_35 : f32 to vector<8x1xf32>
    %109 = arith.mulf %107, %108 : vector<8x1xf32>
    %110 = math.sqrt %109 : vector<8x1xf32>
    %cst_36 = arith.constant 9.99999997E-7 : f32
    %111 = vector.broadcast %cst_36 : f32 to vector<8x1xf32>
    %112 = arith.addf %110, %111 : vector<8x1xf32>
    %113 = tpu.reciprocal %112 : vector<8x1xf32> -> vector<8x1xf32>
    %114 = vector.broadcast %97 : vector<1x32xf32> to vector<8x32xf32>
    %115 = arith.mulf %114, %104 : vector<8x32xf32>
    %116 = vector.broadcast %113 : vector<8x1xf32> to vector<8x32xf32>
    %117 = arith.mulf %115, %116 : vector<8x32xf32>
    %118 = vector.broadcast %98 : vector<1x32xf32> to vector<8x32xf32>
    %119 = arith.addf %117, %118 : vector<8x32xf32>
    %c0_37 = arith.constant 0 : index
    %c0_38 = arith.constant 0 : index
    %120 = vector.load %arg10[%c0_37, %c0_38] : memref<32x1024xf32, #tpu.memory_space<vmem>>, vector<32x1024xf32>
    %cst_39 = arith.constant dense<0.000000e+00> : vector<8x1024xf32>
    %121 = tpu.matmul %119, %120, %cst_39 {dimension_numbers = #tpu.dot_dimension_numbers<[1], [0], [0], [1], [0, 0, 1, 1], [], []>} : vector<8x32xf32>, vector<32x1024xf32>, vector<8x1024xf32> -> vector<8x1024xf32>
    %c0_40 = arith.constant 0 : index
    %c0_41 = arith.constant 0 : index
    %122 = vector.load %arg11[%c0_40, %c0_41] : memref<1x1024xf32, #tpu.memory_space<vmem>>, vector<1x1024xf32>
    %123 = vector.broadcast %122 : vector<1x1024xf32> to vector<8x1024xf32>
    %124 = arith.addf %121, %123 : vector<8x1024xf32>
    %cst_42 = arith.constant 0.000000e+00 : f32
    %125 = vector.broadcast %cst_42 : f32 to vector<8x1024xf32>
    %126 = arith.maximumf %124, %125 : vector<8x1024xf32>
    %c0_43 = arith.constant 0 : index
    %c0_44 = arith.constant 0 : index
    %127 = vector.load %arg12[%c0_43, %c0_44] : memref<1024x32xf32, #tpu.memory_space<vmem>>, vector<1024x32xf32>
    %cst_45 = arith.constant dense<0.000000e+00> : vector<8x32xf32>
    %128 = tpu.matmul %126, %127, %cst_45 {dimension_numbers = #tpu.dot_dimension_numbers<[1], [0], [0], [1], [0, 0, 1, 1], [], []>} : vector<8x1024xf32>, vector<1024x32xf32>, vector<8x32xf32> -> vector<8x32xf32>
    %129 = arith.addf %96, %128 : vector<8x32xf32>
    %c0_46 = arith.constant 0 : index
    %c0_47 = arith.constant 0 : index
    %130 = vector.load %arg13[%c0_46, %c0_47] : memref<1x32xf32, #tpu.memory_space<vmem>>, vector<1x32xf32>
    %131 = vector.broadcast %130 : vector<1x32xf32> to vector<8x32xf32>
    %132 = arith.addf %129, %131 : vector<8x32xf32>
    %133 = vector.shape_cast %132 : vector<8x32xf32> to vector<1x8x32xf32>
    %c0_48 = arith.constant 0 : index
    %c0_49 = arith.constant 0 : index
    %c0_50 = arith.constant 0 : index
    %134 = vector.load %arg14[%c0_48, %c0_49, %c0_50] : memref<1x8x32xf32, #tpu.memory_space<vmem>>, vector<1x8x32xf32>
    tpu.vector_store %arg14[%c0_48, %c0_49, %c0_50], %133 {strides = array<i32>} : memref<1x8x32xf32, #tpu.memory_space<vmem>>, vector<1x8x32xf32>,
    return
  }
  func.func @transform_0(%arg0: i32) -> (i32, i32, i32) {
    %c0_i32 = arith.constant 0 : i32
    %c0_i32_0 = arith.constant 0 : i32
    %c0_i32_1 = arith.constant 0 : i32
    return %arg0, %c0_i32, %c0_i32_0 : i32, i32, i32
  }
  func.func @transform_1(%arg0: i32) -> (i32, i32) {
    %c0_i32 = arith.constant 0 : i32
    %c0_i32_0 = arith.constant 0 : i32
    %c0_i32_1 = arith.constant 0 : i32
    return %c0_i32, %c0_i32_0 : i32, i32
  }
  func.func @transform_2(%arg0: i32) -> (i32, i32) {
    %c0_i32 = arith.constant 0 : i32
    %c0_i32_0 = arith.constant 0 : i32
    %c0_i32_1 = arith.constant 0 : i32
    return %c0_i32, %c0_i32_0 : i32, i32
  }
  func.func @transform_3(%arg0: i32) -> (i32, i32) {
    %c0_i32 = arith.constant 0 : i32
    %c0_i32_0 = arith.constant 0 : i32
    %c0_i32_1 = arith.constant 0 : i32
    return %c0_i32, %c0_i32_0 : i32, i32
  }
  func.func @transform_4(%arg0: i32) -> (i32, i32) {
    %c0_i32 = arith.constant 0 : i32
    %c0_i32_0 = arith.constant 0 : i32
    %c0_i32_1 = arith.constant 0 : i32
    return %c0_i32, %c0_i32_0 : i32, i32
  }
  func.func @transform_5(%arg0: i32) -> (i32, i32) {
    %c0_i32 = arith.constant 0 : i32
    %c0_i32_0 = arith.constant 0 : i32
    %c0_i32_1 = arith.constant 0 : i32
    return %c0_i32, %c0_i32_0 : i32, i32
  }
  func.func @transform_6(%arg0: i32) -> (i32, i32) {
    %c0_i32 = arith.constant 0 : i32
    %c0_i32_0 = arith.constant 0 : i32
    %c0_i32_1 = arith.constant 0 : i32
    return %c0_i32, %c0_i32_0 : i32, i32
  }
  func.func @transform_7(%arg0: i32) -> (i32, i32) {
    %c0_i32 = arith.constant 0 : i32
    %c0_i32_0 = arith.constant 0 : i32
    %c0_i32_1 = arith.constant 0 : i32
    return %c0_i32, %c0_i32_0 : i32, i32
  }
  func.func @transform_8(%arg0: i32) -> (i32, i32) {
    %c0_i32 = arith.constant 0 : i32
    %c0_i32_0 = arith.constant 0 : i32
    %c0_i32_1 = arith.constant 0 : i32
    return %c0_i32, %c0_i32_0 : i32, i32
  }
  func.func @transform_9(%arg0: i32) -> (i32, i32) {
    %c0_i32 = arith.constant 0 : i32
    %c0_i32_0 = arith.constant 0 : i32
    %c0_i32_1 = arith.constant 0 : i32
    return %c0_i32, %c0_i32_0 : i32, i32
  }
  func.func @transform_10(%arg0: i32) -> (i32, i32) {
    %c0_i32 = arith.constant 0 : i32
    %c0_i32_0 = arith.constant 0 : i32
    %c0_i32_1 = arith.constant 0 : i32
    return %c0_i32, %c0_i32_0 : i32, i32
  }
  func.func @transform_11(%arg0: i32) -> (i32, i32) {
    %c0_i32 = arith.constant 0 : i32
    %c0_i32_0 = arith.constant 0 : i32
    %c0_i32_1 = arith.constant 0 : i32
    return %c0_i32, %c0_i32_0 : i32, i32
  }
  func.func @transform_12(%arg0: i32) -> (i32, i32) {
    %c0_i32 = arith.constant 0 : i32
    %c0_i32_0 = arith.constant 0 : i32
    %c0_i32_1 = arith.constant 0 : i32
    return %c0_i32, %c0_i32_0 : i32, i32
  }
  func.func @transform_13(%arg0: i32) -> (i32, i32, i32) {
    %c0_i32 = arith.constant 0 : i32
    %c0_i32_0 = arith.constant 0 : i32
    %c0_i32_1 = arith.constant 0 : i32
    return %arg0, %c0_i32, %c0_i32_0 : i32, i32, i32
  }
}

</mosaic_0001>

<llo_original>
// kernel: tpu_custom_call.1
$region0: #{tpu_custom_call.1}
  #allocation0 [shape = 'u32[]', space=smem, size = 0x4, offset = 0x4, fixed_abs, tag = 'smem constant byte address 0x4 - core index']
  #allocation1 [shape = 'u32[144,128]{1,0:T(1,128)}', space=vmem, size = 0x12000, scoped, tag = 'internal scratch']
  %s0 = inlined_call_operand.vmem [shape: f32[2,8,32], index: 0, kind: input, shape index: {}]
  %s1 = inlined_call_operand.vmem [shape: f32[1,32], index: 1, kind: input, shape index: {}]
  %s2 = inlined_call_operand.vmem [shape: f32[1,32], index: 2, kind: input, shape index: {}]
  %s3 = inlined_call_operand.vmem [shape: f32[32,96], index: 3, kind: input, shape index: {}]
  %s4 = inlined_call_operand.vmem [shape: f32[1,96], index: 4, kind: input, shape index: {}]
  %s5 = inlined_call_operand.vmem [shape: f32[32,32], index: 5, kind: input, shape index: {}]
  %s6 = inlined_call_operand.vmem [shape: f32[1,32], index: 6, kind: input, shape index: {}]
  %s7 = inlined_call_operand.vmem [shape: f32[1,32], index: 7, kind: input, shape index: {}]
  %s8 = inlined_call_operand.vmem [shape: f32[1,32], index: 8, kind: input, shape index: {}]
  %s9 = inlined_call_operand.vmem [shape: f32[32,1024], index: 9, kind: input, shape index: {}]
  %s10 = inlined_call_operand.vmem [shape: f32[1,1024], index: 10, kind: input, shape index: {}]
  %s11 = inlined_call_operand.vmem [shape: f32[1024,32], index: 11, kind: input, shape index: {}]
  %s12 = inlined_call_operand.vmem [shape: f32[1,32], index: 12, kind: input, shape index: {}]
  %s13 = inlined_call_operand.hbm [shape: f32[2,8,32], index: 13, kind: output, shape index: {}]
  %s14 = sld [smem:[#allocation0]]
  $region85: #{tpu_custom_call.1} parent=0
    _
  %s16 = ssub.s32 1, %s14
  %s17 = scalar_select 0, %s16, %s14
  $region1: #{tpu_custom_call.1} parent=0
    #allocation2 [shape = 'u8[8192]{0}', space=vmem, size = 0x2000, scoped, tag = 'output window, operand 0']
    #allocation3 [shape = 's32[2]{0}', space=sflag, size = 0x8, scoped, tag = 'scoped memory for tpu_custom_call.1']
    %18 = vsyncpa [#allocation3], 0
    %s19 = scalar_lea.sflag [#allocation3], 1
    %20 = vsyncpa %s19, 0
    loop: start=0, step=1, limit=4
    $region2: #{tpu_custom_call.1} parent=1 // loop_pre_header
      _
    $region3: #{tpu_custom_call.1} parent=1 // loop_header
      %s22 = sphi 0, %s26
      %p23 = scmp.ge.s32.totalorder %s22, 4
      %s32 = sphi 0, %s34
      %s35 = sphi 0, %s32
      %s36 = sphi 0, %s35
      %s52 = sphi 0, %s36
      %s56 = sphi 0, %s56
      %s58 = sphi 0, %s56
      %s59 = sphi 0, %s58
      %s73 = sphi 0, %s59
      %s77 = sphi 0, %s77
      %s79 = sphi 0, %s77
      %s80 = sphi 0, %s79
      %s94 = sphi 0, %s80
      %s98 = sphi 0, %s98
      %s100 = sphi 0, %s98
      %s101 = sphi 0, %s100
      %s115 = sphi 0, %s101
      %s119 = sphi 0, %s119
      %s121 = sphi 0, %s119
      %s122 = sphi 0, %s121
      %s136 = sphi 0, %s122
      %s140 = sphi 0, %s140
      %s142 = sphi 0, %s140
      %s143 = sphi 0, %s142
      %s157 = sphi 0, %s143
      %s161 = sphi 0, %s161
      %s163 = sphi 0, %s161
      %s164 = sphi 0, %s163
      %s178 = sphi 0, %s164
      %s182 = sphi 0, %s182
      %s184 = sphi 0, %s182
      %s185 = sphi 0, %s184
      %s199 = sphi 0, %s185
      %s203 = sphi 0, %s203
      %s205 = sphi 0, %s203
      %s206 = sphi 0, %s205
      %s220 = sphi 0, %s206
      %s224 = sphi 0, %s224
      %s226 = sphi 0, %s224
      %s227 = sphi 0, %s226
      %s241 = sphi 0, %s227
      %s245 = sphi 0, %s245
      %s247 = sphi 0, %s245
      %s248 = sphi 0, %s247
      %s262 = sphi 0, %s248
      %s266 = sphi 0, %s266
      %s268 = sphi 0, %s266
      %s269 = sphi 0, %s268
      %s283 = sphi 0, %s269
      %s287 = sphi 0, %s287
      %s289 = sphi 0, %s287
      %s290 = sphi 0, %s289
      %s304 = sphi 0, %s290
      %s310 = sphi 0, %s312
      %s313 = sphi 0, %s310
      %s314 = sphi 0, %s313
      %s330 = sphi 0, %s314
    $region4: #{tpu_custom_call.1} parent=1 // loop_header_branch
      %25 = sbr.rel (%p23) target = $region8
    $region5: #{tpu_custom_call.1} parent=1 // loop_body
      %s27 = ssub.s32 %s22, 1
      %s28 = ssub.s32 %s22, 2
      %s29 = sadd.s32 %s22, 1
      %s30 = ssub.s32 %s22, %s29
      %p31 = scmp.eq.s32.totalorder %s30, 0
      %s33 = sadd.s32 %s32, 1
      %s34 = scalar_select %p31, %s32, %s33
      %p37 = pneg %p31
      %p38 = scmp.eq.s32.totalorder %s22, 1
      %p39 = por %p37, %p38
      %p40 = scmp.ne.s32.totalorder %s32, %s35
      %p41 = scmp.eq.s32.totalorder %s22, 0
      %p42 = por %p40, %p41
      %p43 = scmp.ne.s32.totalorder %s32, %s35
      %p44 = scmp.eq.s32.totalorder %s27, 1
      %p45 = por %p43, %p44
      %p46 = scmp.ne.s32.totalorder %s35, %s36
      %p47 = scmp.eq.s32.totalorder %s27, 0
      %p48 = por %p46, %p47
      %p49 = scmp.ne.s32.totalorder %s35, %s36
      %p50 = scmp.eq.s32.totalorder %s28, 1
      %p51 = por %p49, %p50
      %p53 = scmp.ne.s32.totalorder %s36, %s52
      %p54 = scmp.eq.s32.totalorder %s28, 0
      %p55 = por %p53, %p54
      %s57 = sadd.s32 %s56, 1
      %p60 = scmp.eq.s32.totalorder %s22, 1
      %p61 = scmp.ne.s32.totalorder %s56, %s58
      %p62 = scmp.eq.s32.totalorder %s22, 0
      %p63 = por %p61, %p62
      %p64 = scmp.ne.s32.totalorder %s56, %s58
      %p65 = scmp.eq.s32.totalorder %s27, 1
      %p66 = por %p64, %p65
      %p67 = scmp.ne.s32.totalorder %s58, %s59
      %p68 = scmp.eq.s32.totalorder %s27, 0
      %p69 = por %p67, %p68
      %p70 = scmp.ne.s32.totalorder %s58, %s59
      %p71 = scmp.eq.s32.totalorder %s28, 1
      %p72 = por %p70, %p71
      %p74 = scmp.ne.s32.totalorder %s59, %s73
      %p75 = scmp.eq.s32.totalorder %s28, 0
      %p76 = por %p74, %p75
      %s78 = sadd.s32 %s77, 1
      %p81 = scmp.eq.s32.totalorder %s22, 1
      %p82 = scmp.ne.s32.totalorder %s77, %s79
      %p83 = scmp.eq.s32.totalorder %s22, 0
      %p84 = por %p82, %p83
      %p85 = scmp.ne.s32.totalorder %s77, %s79
      %p86 = scmp.eq.s32.totalorder %s27, 1
      %p87 = por %p85, %p86
      %p88 = scmp.ne.s32.totalorder %s79, %s80
      %p89 = scmp.eq.s32.totalorder %s27, 0
      %p90 = por %p88, %p89
      %p91 = scmp.ne.s32.totalorder %s79, %s80
      %p92 = scmp.eq.s32.totalorder %s28, 1
      %p93 = por %p91, %p92
      %p95 = scmp.ne.s32.totalorder %s80, %s94
      %p96 = scmp.eq.s32.totalorder %s28, 0
      %p97 = por %p95, %p96
      %s99 = sadd.s32 %s98, 1
      %p102 = scmp.eq.s32.totalorder %s22, 1
      %p103 = scmp.ne.s32.totalorder %s98, %s100
      %p104 = scmp.eq.s32.totalorder %s22, 0
      %p105 = por %p103, %p104
      %p106 = scmp.ne.s32.totalorder %s98, %s100
      %p107 = scmp.eq.s32.totalorder %s27, 1
      %p108 = por %p106, %p107
      %p109 = scmp.ne.s32.totalorder %s100, %s101
      %p110 = scmp.eq.s32.totalorder %s27, 0
      %p111 = por %p109, %p110
      %p112 = scmp.ne.s32.totalorder %s100, %s101
      %p113 = scmp.eq.s32.totalorder %s28, 1
      %p114 = por %p112, %p113
      %p116 = scmp.ne.s32.totalorder %s101, %s115
      %p117 = scmp.eq.s32.totalorder %s28, 0
      %p118 = por %p116, %p117
      %s120 = sadd.s32 %s119, 1
      %p123 = scmp.eq.s32.totalorder %s22, 1
      %p124 = scmp.ne.s32.totalorder %s119, %s121
      %p125 = scmp.eq.s32.totalorder %s22, 0
      %p126 = por %p124, %p125
      %p127 = scmp.ne.s32.totalorder %s119, %s121
      %p128 = scmp.eq.s32.totalorder %s27, 1
      %p129 = por %p127, %p128
      %p130 = scmp.ne.s32.totalorder %s121, %s122
      %p131 = scmp.eq.s32.totalorder %s27, 0
      %p132 = por %p130, %p131
      %p133 = scmp.ne.s32.totalorder %s121, %s122
      %p134 = scmp.eq.s32.totalorder %s28, 1
      %p135 = por %p133, %p134
      %p137 = scmp.ne.s32.totalorder %s122, %s136
      %p138 = scmp.eq.s32.totalorder %s28, 0
      %p139 = por %p137, %p138
      %s141 = sadd.s32 %s140, 1
      %p144 = scmp.eq.s32.totalorder %s22, 1
      %p145 = scmp.ne.s32.totalorder %s140, %s142
      %p146 = scmp.eq.s32.totalorder %s22, 0
      %p147 = por %p145, %p146
      %p148 = scmp.ne.s32.totalorder %s140, %s142
      %p149 = scmp.eq.s32.totalorder %s27, 1
      %p150 = por %p148, %p149
      %p151 = scmp.ne.s32.totalorder %s142, %s143
      %p152 = scmp.eq.s32.totalorder %s27, 0
      %p153 = por %p151, %p152
      %p154 = scmp.ne.s32.totalorder %s142, %s143
      %p155 = scmp.eq.s32.totalorder %s28, 1
      %p156 = por %p154, %p155
      %p158 = scmp.ne.s32.totalorder %s143, %s157
      %p159 = scmp.eq.s32.totalorder %s28, 0
      %p160 = por %p158, %p159
      %s162 = sadd.s32 %s161, 1
      %p165 = scmp.eq.s32.totalorder %s22, 1
      %p166 = scmp.ne.s32.totalorder %s161, %s163
      %p167 = scmp.eq.s32.totalorder %s22, 0
      %p168 = por %p166, %p167
      %p169 = scmp.ne.s32.totalorder %s161, %s163
      %p170 = scmp.eq.s32.totalorder %s27, 1
      %p171 = por %p169, %p170
      %p172 = scmp.ne.s32.totalorder %s163, %s164
      %p173 = scmp.eq.s32.totalorder %s27, 0
      %p174 = por %p172, %p173
      %p175 = scmp.ne.s32.totalorder %s163, %s164
      %p176 = scmp.eq.s32.totalorder %s28, 1
      %p177 = por %p175, %p176
      %p179 = scmp.ne.s32.totalorder %s164, %s178
      %p180 = scmp.eq.s32.totalorder %s28, 0
      %p181 = por %p179, %p180
      %s183 = sadd.s32 %s182, 1
      %p186 = scmp.eq.s32.totalorder %s22, 1
      %p187 = scmp.ne.s32.totalorder %s182, %s184
      %p188 = scmp.eq.s32.totalorder %s22, 0
      %p189 = por %p187, %p188
      %p190 = scmp.ne.s32.totalorder %s182, %s184
      %p191 = scmp.eq.s32.totalorder %s27, 1
      %p192 = por %p190, %p191
      %p193 = scmp.ne.s32.totalorder %s184, %s185
      %p194 = scmp.eq.s32.totalorder %s27, 0
      %p195 = por %p193, %p194
      %p196 = scmp.ne.s32.totalorder %s184, %s185
      %p197 = scmp.eq.s32.totalorder %s28, 1
      %p198 = por %p196, %p197
      %p200 = scmp.ne.s32.totalorder %s185, %s199
      %p201 = scmp.eq.s32.totalorder %s28, 0
      %p202 = por %p200, %p201
      %s204 = sadd.s32 %s203, 1
      %p207 = scmp.eq.s32.totalorder %s22, 1
      %p208 = scmp.ne.s32.totalorder %s203, %s205
      %p209 = scmp.eq.s32.totalorder %s22, 0
      %p210 = por %p208, %p209
      %p211 = scmp.ne.s32.totalorder %s203, %s205
      %p212 = scmp.eq.s32.totalorder %s27, 1
      %p213 = por %p211, %p212
      %p214 = scmp.ne.s32.totalorder %s205, %s206
      %p215 = scmp.eq.s32.totalorder %s27, 0
      %p216 = por %p214, %p215
      %p217 = scmp.ne.s32.totalorder %s205, %s206
      %p218 = scmp.eq.s32.totalorder %s28, 1
      %p219 = por %p217, %p218
      %p221 = scmp.ne.s32.totalorder %s206, %s220
      %p222 = scmp.eq.s32.totalorder %s28, 0
      %p223 = por %p221, %p222
      %s225 = sadd.s32 %s224, 1
      %p228 = scmp.eq.s32.totalorder %s22, 1
      %p229 = scmp.ne.s32.totalorder %s224, %s226
      %p230 = scmp.eq.s32.totalorder %s22, 0
      %p231 = por %p229, %p230
      %p232 = scmp.ne.s32.totalorder %s224, %s226
      %p233 = scmp.eq.s32.totalorder %s27, 1
      %p234 = por %p232, %p233
      %p235 = scmp.ne.s32.totalorder %s226, %s227
      %p236 = scmp.eq.s32.totalorder %s27, 0
      %p237 = por %p235, %p236
      %p238 = scmp.ne.s32.totalorder %s226, %s227
      %p239 = scmp.eq.s32.totalorder %s28, 1
      %p240 = por %p238, %p239
      %p242 = scmp.ne.s32.totalorder %s227, %s241
      %p243 = scmp.eq.s32.totalorder %s28, 0
      %p244 = por %p242, %p243
      %s246 = sadd.s32 %s245, 1
      %p249 = scmp.eq.s32.totalorder %s22, 1
      %p250 = scmp.ne.s32.totalorder %s245, %s247
      %p251 = scmp.eq.s32.totalorder %s22, 0
      %p252 = por %p250, %p251
      %p253 = scmp.ne.s32.totalorder %s245, %s247
      %p254 = scmp.eq.s32.totalorder %s27, 1
      %p255 = por %p253, %p254
      %p256 = scmp.ne.s32.totalorder %s247, %s248
      %p257 = scmp.eq.s32.totalorder %s27, 0
      %p258 = por %p256, %p257
      %p259 = scmp.ne.s32.totalorder %s247, %s248
      %p260 = scmp.eq.s32.totalorder %s28, 1
      %p261 = por %p259, %p260
      %p263 = scmp.ne.s32.totalorder %s248, %s262
      %p264 = scmp.eq.s32.totalorder %s28, 0
      %p265 = por %p263, %p264
      %s267 = sadd.s32 %s266, 1
      %p270 = scmp.eq.s32.totalorder %s22, 1
      %p271 = scmp.ne.s32.totalorder %s266, %s268
      %p272 = scmp.eq.s32.totalorder %s22, 0
      %p273 = por %p271, %p272
      %p274 = scmp.ne.s32.totalorder %s266, %s268
      %p275 = scmp.eq.s32.totalorder %s27, 1
      %p276 = por %p274, %p275
      %p277 = scmp.ne.s32.totalorder %s268, %s269
      %p278 = scmp.eq.s32.totalorder %s27, 0
      %p279 = por %p277, %p278
      %p280 = scmp.ne.s32.totalorder %s268, %s269
      %p281 = scmp.eq.s32.totalorder %s28, 1
      %p282 = por %p280, %p281
      %p284 = scmp.ne.s32.totalorder %s269, %s283
      %p285 = scmp.eq.s32.totalorder %s28, 0
      %p286 = por %p284, %p285
      %s288 = sadd.s32 %s287, 1
      %p291 = scmp.eq.s32.totalorder %s22, 1
      %p292 = scmp.ne.s32.totalorder %s287, %s289
      %p293 = scmp.eq.s32.totalorder %s22, 0
      %p294 = por %p292, %p293
      %p295 = scmp.ne.s32.totalorder %s287, %s289
      %p296 = scmp.eq.s32.totalorder %s27, 1
      %p297 = por %p295, %p296
      %p298 = scmp.ne.s32.totalorder %s289, %s290
      %p299 = scmp.eq.s32.totalorder %s27, 0
      %p300 = por %p298, %p299
      %p301 = scmp.ne.s32.totalorder %s289, %s290
      %p302 = scmp.eq.s32.totalorder %s28, 1
      %p303 = por %p301, %p302
      %p305 = scmp.ne.s32.totalorder %s290, %s304
      %p306 = scmp.eq.s32.totalorder %s28, 0
      %p307 = por %p305, %p306
      %s308 = ssub.s32 %s22, %s29
      %p309 = scmp.eq.s32.totalorder %s308, 0
      %s311 = sadd.s32 %s310, 1
      %s312 = scalar_select %p309, %s310, %s311
      %p315 = pneg %p309
      %p316 = scmp.eq.s32.totalorder %s22, 1
      %p317 = por %p315, %p316
      %p318 = scmp.ne.s32.totalorder %s310, %s313
      %p319 = scmp.eq.s32.totalorder %s22, 0
      %p320 = por %p318, %p319
      %p321 = scmp.ne.s32.totalorder %s310, %s313
      %p322 = scmp.eq.s32.totalorder %s27, 1
      %p323 = por %p321, %p322
      %p324 = scmp.ne.s32.totalorder %s313, %s314
      %p325 = scmp.eq.s32.totalorder %s27, 0
      %p326 = por %p324, %p325
      %p327 = scmp.ne.s32.totalorder %s313, %s314
      %p328 = scmp.eq.s32.totalorder %s28, 1
      %p329 = por %p327, %p328
      %p331 = scmp.ne.s32.totalorder %s314, %s330
      %p332 = scmp.eq.s32.totalorder %s28, 0
      %p333 = por %p331, %p332
      %p334 = scmp.le.s32.totalorder 1, %s22
      %p335 = scmp.lt.s32.totalorder %s22, 3
      %p336 = pnand %p334, %p335
      %p337 = pneg %p336
      // Predicated region
      $region9: #{tpu_custom_call.1} parent=5 // pred_check
        _
      $region10: #{tpu_custom_call.1} parent=5 // pred_check_branch
        %339 = sbr.rel (%p336) target = $region12
      $region11: #{tpu_custom_call.1} parent=5 // pred_region
        %s340 = ssub.s32 %s22, 1
        // Predicated region
        $region13: #{tpu_custom_call.1} parent=11 // pred_check
          %p341 = pneg %p69
        $region14: #{tpu_custom_call.1} parent=11 // pred_check_branch
          %343 = sbr.rel (%p341) target = $region16
        $region15: #{tpu_custom_call.1} parent=11 // pred_region
          _
        $region16: #{tpu_custom_call.1} parent=11 // pred_fallthru
          _
        // Predicated region
        $region17: #{tpu_custom_call.1} parent=11 // pred_check
          %p344 = pneg %p90
        $region18: #{tpu_custom_call.1} parent=11 // pred_check_branch
          %346 = sbr.rel (%p344) target = $region20
        $region19: #{tpu_custom_call.1} parent=11 // pred_region
          _
        $region20: #{tpu_custom_call.1} parent=11 // pred_fallthru
          _
        // Predicated region
        $region21: #{tpu_custom_call.1} parent=11 // pred_check
          %p347 = pneg %p111
        $region22: #{tpu_custom_call.1} parent=11 // pred_check_branch
          %349 = sbr.rel (%p347) target = $region24
        $region23: #{tpu_custom_call.1} parent=11 // pred_region
          _
        $region24: #{tpu_custom_call.1} parent=11 // pred_fallthru
          _
        // Predicated region
        $region25: #{tpu_custom_call.1} parent=11 // pred_check
          %p350 = pneg %p132
        $region26: #{tpu_custom_call.1} parent=11 // pred_check_branch
          %352 = sbr.rel (%p350) target = $region28
        $region27: #{tpu_custom_call.1} parent=11 // pred_region
          _
        $region28: #{tpu_custom_call.1} parent=11 // pred_fallthru
          _
        // Predicated region
        $region29: #{tpu_custom_call.1} parent=11 // pred_check
          %p353 = pneg %p153
        $region30: #{tpu_custom_call.1} parent=11 // pred_check_branch
          %355 = sbr.rel (%p353) target = $region32
        $region31: #{tpu_custom_call.1} parent=11 // pred_region
          _
        $region32: #{tpu_custom_call.1} parent=11 // pred_fallthru
          _
        // Predicated region
        $region33: #{tpu_custom_call.1} parent=11 // pred_check
          %p356 = pneg %p174
        $region34: #{tpu_custom_call.1} parent=11 // pred_check_branch
          %358 = sbr.rel (%p356) target = $region36
        $region35: #{tpu_custom_call.1} parent=11 // pred_region
          _
        $region36: #{tpu_custom_call.1} parent=11 // pred_fallthru
          _
        // Predicated region
        $region37: #{tpu_custom_call.1} parent=11 // pred_check
          %p359 = pneg %p195
        $region38: #{tpu_custom_call.1} parent=11 // pred_check_branch
          %361 = sbr.rel (%p359) target = $region40
        $region39: #{tpu_custom_call.1} parent=11 // pred_region
          _
        $region40: #{tpu_custom_call.1} parent=11 // pred_fallthru
          _
        // Predicated region
        $region41: #{tpu_custom_call.1} parent=11 // pred_check
          %p362 = pneg %p216
        $region42: #{tpu_custom_call.1} parent=11 // pred_check_branch
          %364 = sbr.rel (%p362) target = $region44
        $region43: #{tpu_custom_call.1} parent=11 // pred_region
          _
        $region44: #{tpu_custom_call.1} parent=11 // pred_fallthru
          _
        // Predicated region
        $region45: #{tpu_custom_call.1} parent=11 // pred_check
          %p365 = pneg %p237
        $region46: #{tpu_custom_call.1} parent=11 // pred_check_branch
          %367 = sbr.rel (%p365) target = $region48
        $region47: #{tpu_custom_call.1} parent=11 // pred_region
          _
        $region48: #{tpu_custom_call.1} parent=11 // pred_fallthru
          _
        // Predicated region
        $region49: #{tpu_custom_call.1} parent=11 // pred_check
          %p368 = pneg %p258
        $region50: #{tpu_custom_call.1} parent=11 // pred_check_branch
          %370 = sbr.rel (%p368) target = $region52
        $region51: #{tpu_custom_call.1} parent=11 // pred_region
          _
        $region52: #{tpu_custom_call.1} parent=11 // pred_fallthru
          _
        // Predicated region
        $region53: #{tpu_custom_call.1} parent=11 // pred_check
          %p371 = pneg %p279
        $region54: #{tpu_custom_call.1} parent=11 // pred_check_branch
          %373 = sbr.rel (%p371) target = $region56
        $region55: #{tpu_custom_call.1} parent=11 // pred_region
          _
        $region56: #{tpu_custom_call.1} parent=11 // pred_fallthru
          _
        // Predicated region
        $region57: #{tpu_custom_call.1} parent=11 // pred_check
          %p374 = pneg %p300
        $region58: #{tpu_custom_call.1} parent=11 // pred_check_branch
          %376 = sbr.rel (%p374) target = $region60
        $region59: #{tpu_custom_call.1} parent=11 // pred_region
          _
        $region60: #{tpu_custom_call.1} parent=11 // pred_fallthru
          _
      $region12: #{tpu_custom_call.1} parent=5 // pred_fallthru
        _
      %p377 = scmp.lt.s32.totalorder %s22, 2
      // Predicated region
      $region61: #{tpu_custom_call.1} parent=5 // pred_check
        %p378 = pneg %p377
      $region62: #{tpu_custom_call.1} parent=5 // pred_check_branch
        %380 = sbr.rel (%p378) target = $region64
      $region63: #{tpu_custom_call.1} parent=5 // pred_region
        // Predicated region
        $region65: #{tpu_custom_call.1} parent=63 // pred_check
          %p381 = pneg %p42
        $region66: #{tpu_custom_call.1} parent=63 // pred_check_branch
          %383 = sbr.rel (%p381) target = $region68
        $region67: #{tpu_custom_call.1} parent=63 // pred_region
          %p384 = scmp.lt.s32.totalorder %s22, 1
          %s385 = scalar_select %p384, %s22, 1
          %s386 = smul.addr %s385, 8
          %s387 = scalar_lea.vmem %s0, %s386
        $region68: #{tpu_custom_call.1} parent=63 // pred_fallthru
          _
      $region64: #{tpu_custom_call.1} parent=5 // pred_fallthru
        _
      %p388 = scmp.le.s32.totalorder 1, %s22
      %p389 = scmp.lt.s32.totalorder %s22, 3
      %p390 = pnand %p388, %p389
      %p391 = pneg %p390
      // Predicated region
      $region69: #{tpu_custom_call.1} parent=5 // pred_check
        _
      $region70: #{tpu_custom_call.1} parent=5 // pred_check_branch
        %393 = sbr.rel (%p390) target = $region72
      $region71: #{tpu_custom_call.1} parent=5 // pred_region
        %s394 = ssub.s32 %s22, 1
        %p395 = scmp.lt.s32.totalorder %s27, 1
        %s396 = scalar_select %p395, %s27, 1
        %s397 = smul.addr %s396, 8
        %s398 = scalar_lea.vmem %s0, %s397
        %p399 = pneg %p48
        %p400 = pneg %p45
        %p401 = pneg %p69
        %p402 = pneg %p66
        %p403 = pneg %p90
        %p404 = pneg %p87
        %p405 = pneg %p111
        %p406 = pneg %p108
        %p407 = pneg %p132
        %p408 = pneg %p129
        %p409 = pneg %p153
        %p410 = pneg %p150
        %p411 = pneg %p174
        %p412 = pneg %p171
        %p413 = pneg %p195
        %p414 = pneg %p192
        %p415 = pneg %p216
        %p416 = pneg %p213
        %p417 = pneg %p237
        %p418 = pneg %p234
        %p419 = pneg %p258
        %p420 = pneg %p255
        %p421 = pneg %p279
        %p422 = pneg %p276
        %p423 = pneg %p300
        %p424 = pneg %p297
        %p425 = pneg %p326
        %p426 = pneg %p323
        %s427 = sand.u32 %s313, 1
        %s428 = scalar_lea.sflag [#allocation3], %s427
        %s429 = sand.u32 %s313, 1
        %s430 = smul.addr %s429, 8
        %s431 = scalar_lea.vmem [#allocation2], %s430
        %p432 = scmp.lt.s32.totalorder %s27, 1
        %s433 = scalar_select %p432, %s27, 1
        %s434 = smul.addr %s433, 8
        %s435 = scalar_lea.vmem %s0, %s434
        %v436 = vld [vmem:[%s435] sm:$0xff]
        %v437 = vld [vmem:[%s1] sm:$0x1]
        %v438 = vld [vmem:[%s2] sm:$0x1]
        %vm439 = vcmask 261120
        %v440 = vsel %vm439, %v436, 0.0
        %441 = vadd.xlane.f32.xlu0 %v440
        %v442 = vpop.xlane.xlu0 %441
        %v443 = vrcp.pop 32.0
        %v444 = vmul.f32 %v442, %v443
        %v445 = vsub.f32 %v436, %v444
        %v446 = vmul.f32 %v445, %v445
        %v447 = vsel %vm439, %v446, 0.0
        %448 = vadd.xlane.f32.xlu0 %v447
        %v449 = vpop.xlane.xlu0 %448
        %v450 = vmul.f32 %v449, 0.032258064
        %v451 = vrsqrt.pop %v450
        %v452 = vmul.f32 %v450, %v451
        %vm453 = vcmp.eq.f32.partialorder %v450, inf
        %v454 = vsel %vm453, %v450, %v452
        %vm455 = vcmp.eq.f32.partialorder %v450, 0.0
        %v456 = vand.u32 %v450, 2147483648
        %v457 = vsel %vm455, %v456, %v454
        %v458 = vadd.f32 %v457, 1e-06
        %v459 = vrcp.pop %v458
        %v461 = vlaneseq
        %v462 = vshrl.u32 %v461, 7
        %v463 = vsub.s32 0, %v462
        %v464 = vrot.slane %v437, %v463
        %v466 = vmul.f32 %v464, %v445
        %v467 = vmul.f32 %v466, %v459
        %v469 = vlaneseq
        %v470 = vshrl.u32 %v469, 7
        %v471 = vsub.s32 0, %v470
        %v472 = vrot.slane %v438, %v471
        %v474 = vadd.f32 %v467, %v472
        %v475 = vld [vmem:[%s3] sm:$0xff]
        %v476 = vld [vmem:[%s3 + $0x8] sm:$0xff]
        %v477 = vld [vmem:[%s3 + $0x10] sm:$0xff]
        %v478 = vld [vmem:[%s3 + $0x18] sm:$0xff]
        %v479 = vld [vmem:[%s4] sm:$0x1]
        %v481 = vlaneseq
        %v482 = vshrl.u32 %v481, 7
        %v483 = vsub.s32 0, %v482
        %v484 = vrot.slane %v479, %v483
        %v487 = vsel %vm439, %v474, 0
        %489 = vmatprep.subr.mxu0 0.0
        %490 = vmatpush1.msra.mxu0 %v475
        %491 = vmatprep.subr.mxu0 0.0
        %492 = vmatpush1.msra.mxu0 %v476
        %493 = vmatprep.subr.mxu0 0.0
        %494 = vmatpush1.msra.mxu0 %v477
        %495 = vmatprep.subr.mxu0 0.0
        %496 = vmatpush1.msra.mxu0 %v478
        %497 = vmatprep.subr.mxu0 0.0
        %498 = vmatpush1.msra.mxu0 0.0
        %499 = vmatprep.subr.mxu0 0.0
        %500 = vmatpush1.msra.mxu0 0.0
        %501 = vmatprep.subr.mxu0 0.0
        %502 = vmatpush1.msra.mxu0 0.0
        %503 = vmatprep.subr.mxu0 0.0
        %504 = vmatpush1.msra.mxu0 0.0
        %505 = vmatprep.subr.mxu0 0.0
        %506 = vmatpush1.msra.mxu0 0.0
        %507 = vmatprep.subr.mxu0 0.0
        %508 = vmatpush1.msra.mxu0 0.0
        %509 = vmatprep.subr.mxu0 0.0
        %510 = vmatpush1.msra.mxu0 0.0
        %511 = vmatprep.subr.mxu0 0.0
        %512 = vmatpush1.msra.mxu0 0.0
        %513 = vmatprep.subr.mxu0 0.0
        %514 = vmatpush1.msra.mxu0 0.0
        %515 = vmatprep.subr.mxu0 0.0
        %516 = vmatpush1.msra.mxu0 0.0
        %517 = vmatprep.subr.mxu0 0.0
        %518 = vmatpush1.msra.mxu0 0.0
        %519 = vmatprep.subr.mxu0 0.0
        %520 = vmatpush1.msra.mxu0 0.0
        %521 = vmatprep.subr.mxu0 0.0
        %522 = vmatpush1.msra.mxu0 0.0
        %523 = vmatprep.subr.mxu0 0.0
        %524 = vmatpush1.msra.mxu0 0.0
        %525 = vmatprep.subr.mxu0 0.0
        %526 = vmatpush1.msra.mxu0 0.0
        %527 = vmatprep.subr.mxu0 0.0
        %528 = vmatpush1.msra.mxu0 0.0
        %529 = vmatprep.subr.mxu0 0.0
        %530 = vmatpush1.msra.mxu0 0.0
        %531 = vmatprep.subr.mxu0 0.0
        %532 = vmatpush1.msra.mxu0 0.0
        %533 = vmatprep.subr.mxu0 0.0
        %534 = vmatpush1.msra.mxu0 0.0
        %535 = vmatprep.subr.mxu0 0.0
        %536 = vmatpush1.msra.mxu0 0.0
        %537 = vmatprep.subr.mxu0 0.0
        %538 = vmatpush1.msra.mxu0 0.0
        %539 = vmatprep.subr.mxu0 0.0
        %540 = vmatpush1.msra.mxu0 0.0
        %541 = vmatprep.subr.mxu0 0.0
        %542 = vmatpush1.msra.mxu0 0.0
        %543 = vmatprep.subr.mxu0 0.0
        %544 = vmatpush1.msra.mxu0 0.0
        %545 = vmatprep.subr.mxu0 0.0
        %546 = vmatpush1.msra.mxu0 0.0
        %547 = vmatprep.subr.mxu0 0.0
        %548 = vmatpush1.msra.mxu0 0.0
        %549 = vmatprep.subr.mxu0 0.0
        %550 = vmatpush1.msra.mxu0 0.0
        %551 = vmatprep.subr.mxu0 0.0
        %552 = vmatpush1.msra.mxu0 0.0
        %553 = vmatprep.mubr.f32.mxu0 0.0
        %554 = vmatmul.mubr.f32.gmra.mrb[0].mxu0 %v487
        %v555 = vpop.f32.mrb[0].mxu0
        %v556 = vadd.f32 %v484, %v555
        %v557 = vpop.f32.mrb[0].mxu0
        %558 = vdwg.mxu0
        %560 = vrot.lane.b32.xlu0 %v556, 120
        %v561 = vpop.permute.xlu0 %560
        %562 = vrot.lane.b32.xlu0 %v556, 112
        %v563 = vpop.permute.xlu0 %562
        %564 = vrot.lane.b32.xlu0 %v556, 104
        %v565 = vpop.permute.xlu0 %564
        %566 = vrot.lane.b32.xlu0 %v556, 96
        %v567 = vpop.permute.xlu0 %566
        %vm568 = vcmask 64512
        %v569 = vsel %vm568, %v556, 0
        %v571 = vsel %vm568, %v567, 0
        %573 = vmatprep.subr.mxu0 0.0
        %574 = vmatpush1.xpose.msra.mxu0 %v571
        %575 = vmatprep.subr.mxu0 0.0
        %576 = vmatpush1.xpose.msra.mxu0 0.0
        %577 = vmatprep.subr.mxu0 0.0
        %578 = vmatpush1.xpose.msra.mxu0 0.0
        %579 = vmatprep.subr.mxu0 0.0
        %580 = vmatpush1.xpose.msra.mxu0 0.0
        %581 = vmatprep.subr.mxu0 0.0
        %582 = vmatpush1.xpose.msra.mxu0 0.0
        %583 = vmatprep.subr.mxu0 0.0
        %584 = vmatpush1.xpose.msra.mxu0 0.0
        %585 = vmatprep.subr.mxu0 0.0
        %586 = vmatpush1.xpose.msra.mxu0 0.0
        %587 = vmatprep.subr.mxu0 0.0
        %588 = vmatpush1.xpose.msra.mxu0 0.0
        %589 = vmatprep.subr.mxu0 0.0
        %590 = vmatpush1.xpose.msra.mxu0 0.0
        %591 = vmatprep.subr.mxu0 0.0
        %592 = vmatpush1.xpose.msra.mxu0 0.0
        %593 = vmatprep.subr.mxu0 0.0
        %594 = vmatpush1.xpose.msra.mxu0 0.0
        %595 = vmatprep.subr.mxu0 0.0
        %596 = vmatpush1.xpose.msra.mxu0 0.0
        %597 = vmatprep.subr.mxu0 0.0
        %598 = vmatpush1.xpose.msra.mxu0 0.0
        %599 = vmatprep.subr.mxu0 0.0
        %600 = vmatpush1.xpose.msra.mxu0 0.0
        %601 = vmatprep.subr.mxu0 0.0
        %602 = vmatpush1.xpose.msra.mxu0 0.0
        %603 = vmatprep.subr.mxu0 0.0
        %604 = vmatpush1.xpose.msra.mxu0 0.0
        %605 = vmatprep.subr.mxu0 0.0
        %606 = vmatpush1.xpose.msra.mxu0 0.0
        %607 = vmatprep.subr.mxu0 0.0
        %608 = vmatpush1.xpose.msra.mxu0 0.0
        %609 = vmatprep.subr.mxu0 0.0
        %610 = vmatpush1.xpose.msra.mxu0 0.0
        %611 = vmatprep.subr.mxu0 0.0
        %612 = vmatpush1.xpose.msra.mxu0 0.0
        %613 = vmatprep.subr.mxu0 0.0
        %614 = vmatpush1.xpose.msra.mxu0 0.0
        %615 = vmatprep.subr.mxu0 0.0
        %616 = vmatpush1.xpose.msra.mxu0 0.0
        %617 = vmatprep.subr.mxu0 0.0
        %618 = vmatpush1.xpose.msra.mxu0 0.0
        %619 = vmatprep.subr.mxu0 0.0
        %620 = vmatpush1.xpose.msra.mxu0 0.0
        %621 = vmatprep.subr.mxu0 0.0
        %622 = vmatpush1.xpose.msra.mxu0 0.0
        %623 = vmatprep.subr.mxu0 0.0
        %624 = vmatpush1.xpose.msra.mxu0 0.0
        %625 = vmatprep.subr.mxu0 0.0
        %626 = vmatpush1.xpose.msra.mxu0 0.0
        %627 = vmatprep.subr.mxu0 0.0
        %628 = vmatpush1.xpose.msra.mxu0 0.0
        %629 = vmatprep.subr.mxu0 0.0
        %630 = vmatpush1.xpose.msra.mxu0 0.0
        %631 = vmatprep.subr.mxu0 0.0
        %632 = vmatpush1.xpose.msra.mxu0 0.0
        %633 = vmatprep.subr.mxu0 0.0
        %634 = vmatpush1.xpose.msra.mxu0 0.0
        %635 = vmatprep.subr.mxu0 0.0
        %636 = vmatpush1.xpose.msra.mxu0 0.0
        %637 = vmatprep.mubr.f32.mxu0 0.0
        %638 = vmatmul.mubr.f32.gmra.mrb[0].mxu0 %v569
        %v639 = vpop.f32.mrb[0].mxu0
        %v640 = vadd.f32 0.0, %v639
        %v641 = vpop.f32.mrb[0].mxu0
        %642 = vdwg.mxu0
        %643 = vrot.lane.b32.xlu0 %v561, 96
        %v644 = vpop.permute.xlu0 %643
        %v645 = vsel %vm568, %v561, 0
        %v647 = vsel %vm568, %v644, 0
        %649 = vmatprep.subr.mxu0 0.0
        %650 = vmatpush1.xpose.msra.mxu0 %v647
        %651 = vmatprep.subr.mxu0 0.0
        %652 = vmatpush1.xpose.msra.mxu0 0.0
        %653 = vmatprep.subr.mxu0 0.0
        %654 = vmatpush1.xpose.msra.mxu0 0.0
        %655 = vmatprep.subr.mxu0 0.0
        %656 = vmatpush1.xpose.msra.mxu0 0.0
        %657 = vmatprep.subr.mxu0 0.0
        %658 = vmatpush1.xpose.msra.mxu0 0.0
        %659 = vmatprep.subr.mxu0 0.0
        %660 = vmatpush1.xpose.msra.mxu0 0.0
        %661 = vmatprep.subr.mxu0 0.0
        %662 = vmatpush1.xpose.msra.mxu0 0.0
        %663 = vmatprep.subr.mxu0 0.0
        %664 = vmatpush1.xpose.msra.mxu0 0.0
        %665 = vmatprep.subr.mxu0 0.0
        %666 = vmatpush1.xpose.msra.mxu0 0.0
        %667 = vmatprep.subr.mxu0 0.0
        %668 = vmatpush1.xpose.msra.mxu0 0.0
        %669 = vmatprep.subr.mxu0 0.0
        %670 = vmatpush1.xpose.msra.mxu0 0.0
        %671 = vmatprep.subr.mxu0 0.0
        %672 = vmatpush1.xpose.msra.mxu0 0.0
        %673 = vmatprep.subr.mxu0 0.0
        %674 = vmatpush1.xpose.msra.mxu0 0.0
        %675 = vmatprep.subr.mxu0 0.0
        %676 = vmatpush1.xpose.msra.mxu0 0.0
        %677 = vmatprep.subr.mxu0 0.0
        %678 = vmatpush1.xpose.msra.mxu0 0.0
        %679 = vmatprep.subr.mxu0 0.0
        %680 = vmatpush1.xpose.msra.mxu0 0.0
        %681 = vmatprep.subr.mxu0 0.0
        %682 = vmatpush1.xpose.msra.mxu0 0.0
        %683 = vmatprep.subr.mxu0 0.0
        %684 = vmatpush1.xpose.msra.mxu0 0.0
        %685 = vmatprep.subr.mxu0 0.0
        %686 = vmatpush1.xpose.msra.mxu0 0.0
        %687 = vmatprep.subr.mxu0 0.0
        %688 = vmatpush1.xpose.msra.mxu0 0.0
        %689 = vmatprep.subr.mxu0 0.0
        %690 = vmatpush1.xpose.msra.mxu0 0.0
        %691 = vmatprep.subr.mxu0 0.0
        %692 = vmatpush1.xpose.msra.mxu0 0.0
        %693 = vmatprep.subr.mxu0 0.0
        %694 = vmatpush1.xpose.msra.mxu0 0.0
        %695 = vmatprep.subr.mxu0 0.0
        %696 = vmatpush1.xpose.msra.mxu0 0.0
        %697 = vmatprep.subr.mxu0 0.0
        %698 = vmatpush1.xpose.msra.mxu0 0.0
        %699 = vmatprep.subr.mxu0 0.0
        %700 = vmatpush1.xpose.msra.mxu0 0.0
        %701 = vmatprep.subr.mxu0 0.0
        %702 = vmatpush1.xpose.msra.mxu0 0.0
        %703 = vmatprep.subr.mxu0 0.0
        %704 = vmatpush1.xpose.msra.mxu0 0.0
        %705 = vmatprep.subr.mxu0 0.0
        %706 = vmatpush1.xpose.msra.mxu0 0.0
        %707 = vmatprep.subr.mxu0 0.0
        %708 = vmatpush1.xpose.msra.mxu0 0.0
        %709 = vmatprep.subr.mxu0 0.0
        %710 = vmatpush1.xpose.msra.mxu0 0.0
        %711 = vmatprep.subr.mxu0 0.0
        %712 = vmatpush1.xpose.msra.mxu0 0.0
        %713 = vmatprep.mubr.f32.mxu0 0.0
        %714 = vmatmul.mubr.f32.gmra.mrb[0].mxu0 %v645
        %v715 = vpop.f32.mrb[0].mxu0
        %v716 = vadd.f32 0.0, %v715
        %v717 = vpop.f32.mrb[0].mxu0
        %718 = vdwg.mxu0
        %719 = vrot.lane.b32.xlu0 %v563, 96
        %v720 = vpop.permute.xlu0 %719
        %v721 = vsel %vm568, %v563, 0
        %v723 = vsel %vm568, %v720, 0
        %725 = vmatprep.subr.mxu0 0.0
        %726 = vmatpush1.xpose.msra.mxu0 %v723
        %727 = vmatprep.subr.mxu0 0.0
        %728 = vmatpush1.xpose.msra.mxu0 0.0
        %729 = vmatprep.subr.mxu0 0.0
        %730 = vmatpush1.xpose.msra.mxu0 0.0
        %731 = vmatprep.subr.mxu0 0.0
        %732 = vmatpush1.xpose.msra.mxu0 0.0
        %733 = vmatprep.subr.mxu0 0.0
        %734 = vmatpush1.xpose.msra.mxu0 0.0
        %735 = vmatprep.subr.mxu0 0.0
        %736 = vmatpush1.xpose.msra.mxu0 0.0
        %737 = vmatprep.subr.mxu0 0.0
        %738 = vmatpush1.xpose.msra.mxu0 0.0
        %739 = vmatprep.subr.mxu0 0.0
        %740 = vmatpush1.xpose.msra.mxu0 0.0
        %741 = vmatprep.subr.mxu0 0.0
        %742 = vmatpush1.xpose.msra.mxu0 0.0
        %743 = vmatprep.subr.mxu0 0.0
        %744 = vmatpush1.xpose.msra.mxu0 0.0
        %745 = vmatprep.subr.mxu0 0.0
        %746 = vmatpush1.xpose.msra.mxu0 0.0
        %747 = vmatprep.subr.mxu0 0.0
        %748 = vmatpush1.xpose.msra.mxu0 0.0
        %749 = vmatprep.subr.mxu0 0.0
        %750 = vmatpush1.xpose.msra.mxu0 0.0
        %751 = vmatprep.subr.mxu0 0.0
        %752 = vmatpush1.xpose.msra.mxu0 0.0
        %753 = vmatprep.subr.mxu0 0.0
        %754 = vmatpush1.xpose.msra.mxu0 0.0
        %755 = vmatprep.subr.mxu0 0.0
        %756 = vmatpush1.xpose.msra.mxu0 0.0
        %757 = vmatprep.subr.mxu0 0.0
        %758 = vmatpush1.xpose.msra.mxu0 0.0
        %759 = vmatprep.subr.mxu0 0.0
        %760 = vmatpush1.xpose.msra.mxu0 0.0
        %761 = vmatprep.subr.mxu0 0.0
        %762 = vmatpush1.xpose.msra.mxu0 0.0
        %763 = vmatprep.subr.mxu0 0.0
        %764 = vmatpush1.xpose.msra.mxu0 0.0
        %765 = vmatprep.subr.mxu0 0.0
        %766 = vmatpush1.xpose.msra.mxu0 0.0
        %767 = vmatprep.subr.mxu0 0.0
        %768 = vmatpush1.xpose.msra.mxu0 0.0
        %769 = vmatprep.subr.mxu0 0.0
        %770 = vmatpush1.xpose.msra.mxu0 0.0
        %771 = vmatprep.subr.mxu0 0.0
        %772 = vmatpush1.xpose.msra.mxu0 0.0
        %773 = vmatprep.subr.mxu0 0.0
        %774 = vmatpush1.xpose.msra.mxu0 0.0
        %775 = vmatprep.subr.mxu0 0.0
        %776 = vmatpush1.xpose.msra.mxu0 0.0
        %777 = vmatprep.subr.mxu0 0.0
        %778 = vmatpush1.xpose.msra.mxu0 0.0
        %779 = vmatprep.subr.mxu0 0.0
        %780 = vmatpush1.xpose.msra.mxu0 0.0
        %781 = vmatprep.subr.mxu0 0.0
        %782 = vmatpush1.xpose.msra.mxu0 0.0
        %783 = vmatprep.subr.mxu0 0.0
        %784 = vmatpush1.xpose.msra.mxu0 0.0
        %785 = vmatprep.subr.mxu0 0.0
        %786 = vmatpush1.xpose.msra.mxu0 0.0
        %787 = vmatprep.subr.mxu0 0.0
        %788 = vmatpush1.xpose.msra.mxu0 0.0
        %789 = vmatprep.mubr.f32.mxu0 0.0
        %790 = vmatmul.mubr.f32.gmra.mrb[0].mxu0 %v721
        %v791 = vpop.f32.mrb[0].mxu0
        %v792 = vadd.f32 0.0, %v791
        %v793 = vpop.f32.mrb[0].mxu0
        %794 = vdwg.mxu0
        %795 = vrot.lane.b32.xlu0 %v565, 96
        %v796 = vpop.permute.xlu0 %795
        %v797 = vsel %vm568, %v565, 0
        %v799 = vsel %vm568, %v796, 0
        %801 = vmatprep.subr.mxu0 0.0
        %802 = vmatpush1.xpose.msra.mxu0 %v799
        %803 = vmatprep.subr.mxu0 0.0
        %804 = vmatpush1.xpose.msra.mxu0 0.0
        %805 = vmatprep.subr.mxu0 0.0
        %806 = vmatpush1.xpose.msra.mxu0 0.0
        %807 = vmatprep.subr.mxu0 0.0
        %808 = vmatpush1.xpose.msra.mxu0 0.0
        %809 = vmatprep.subr.mxu0 0.0
        %810 = vmatpush1.xpose.msra.mxu0 0.0
        %811 = vmatprep.subr.mxu0 0.0
        %812 = vmatpush1.xpose.msra.mxu0 0.0
        %813 = vmatprep.subr.mxu0 0.0
        %814 = vmatpush1.xpose.msra.mxu0 0.0
        %815 = vmatprep.subr.mxu0 0.0
        %816 = vmatpush1.xpose.msra.mxu0 0.0
        %817 = vmatprep.subr.mxu0 0.0
        %818 = vmatpush1.xpose.msra.mxu0 0.0
        %819 = vmatprep.subr.mxu0 0.0
        %820 = vmatpush1.xpose.msra.mxu0 0.0
        %821 = vmatprep.subr.mxu0 0.0
        %822 = vmatpush1.xpose.msra.mxu0 0.0
        %823 = vmatprep.subr.mxu0 0.0
        %824 = vmatpush1.xpose.msra.mxu0 0.0
        %825 = vmatprep.subr.mxu0 0.0
        %826 = vmatpush1.xpose.msra.mxu0 0.0
        %827 = vmatprep.subr.mxu0 0.0
        %828 = vmatpush1.xpose.msra.mxu0 0.0
        %829 = vmatprep.subr.mxu0 0.0
        %830 = vmatpush1.xpose.msra.mxu0 0.0
        %831 = vmatprep.subr.mxu0 0.0
        %832 = vmatpush1.xpose.msra.mxu0 0.0
        %833 = vmatprep.subr.mxu0 0.0
        %834 = vmatpush1.xpose.msra.mxu0 0.0
        %835 = vmatprep.subr.mxu0 0.0
        %836 = vmatpush1.xpose.msra.mxu0 0.0
        %837 = vmatprep.subr.mxu0 0.0
        %838 = vmatpush1.xpose.msra.mxu0 0.0
        %839 = vmatprep.subr.mxu0 0.0
        %840 = vmatpush1.xpose.msra.mxu0 0.0
        %841 = vmatprep.subr.mxu0 0.0
        %842 = vmatpush1.xpose.msra.mxu0 0.0
        %843 = vmatprep.subr.mxu0 0.0
        %844 = vmatpush1.xpose.msra.mxu0 0.0
        %845 = vmatprep.subr.mxu0 0.0
        %846 = vmatpush1.xpose.msra.mxu0 0.0
        %847 = vmatprep.subr.mxu0 0.0
        %848 = vmatpush1.xpose.msra.mxu0 0.0
        %849 = vmatprep.subr.mxu0 0.0
        %850 = vmatpush1.xpose.msra.mxu0 0.0
        %851 = vmatprep.subr.mxu0 0.0
        %852 = vmatpush1.xpose.msra.mxu0 0.0
        %853 = vmatprep.subr.mxu0 0.0
        %854 = vmatpush1.xpose.msra.mxu0 0.0
        %855 = vmatprep.subr.mxu0 0.0
        %856 = vmatpush1.xpose.msra.mxu0 0.0
        %857 = vmatprep.subr.mxu0 0.0
        %858 = vmatpush1.xpose.msra.mxu0 0.0
        %859 = vmatprep.subr.mxu0 0.0
        %860 = vmatpush1.xpose.msra.mxu0 0.0
        %861 = vmatprep.subr.mxu0 0.0
        %862 = vmatpush1.xpose.msra.mxu0 0.0
        %863 = vmatprep.subr.mxu0 0.0
        %864 = vmatpush1.xpose.msra.mxu0 0.0
        %865 = vmatprep.mubr.f32.mxu0 0.0
        %866 = vmatmul.mubr.f32.gmra.mrb[0].mxu0 %v797
        %v867 = vpop.f32.mrb[0].mxu0
        %v868 = vadd.f32 0.0, %v867
        %v869 = vpop.f32.mrb[0].mxu0
        %870 = vdwg.mxu0
        %v871 = vmul.f32 %v640, 0.35355338
        %v872 = vmul.f32 %v716, 0.35355338
        %v873 = vmul.f32 %v792, 0.35355338
        %v874 = vmul.f32 %v868, 0.35355338
        %v875 = vsel %vm568, %v871, -inf
        %876 = vmax.xlane.f32.xlu0 %v875
        %v877 = vpop.xlane.xlu0 %876
        %v878 = vsel %vm568, %v872, -inf
        %879 = vmax.xlane.f32.xlu0 %v878
        %v880 = vpop.xlane.xlu0 %879
        %v881 = vsel %vm568, %v873, -inf
        %882 = vmax.xlane.f32.xlu0 %v881
        %v883 = vpop.xlane.xlu0 %882
        %v884 = vsel %vm568, %v874, -inf
        %885 = vmax.xlane.f32.xlu0 %v884
        %v886 = vpop.xlane.xlu0 %885
        %v887 = vsub.f32 -inf, %v877
        %v888 = vsub.f32 -inf, %v880
        %v889 = vsub.f32 -inf, %v883
        %v890 = vsub.f32 -inf, %v886
        %v891 = vmul.f32 %v887, 1.442695
        %v892 = vpow.pop %v891
        %v893 = vmul.f32 %v888, 1.442695
        %v894 = vpow.pop %v893
        %v895 = vmul.f32 %v889, 1.442695
        %v896 = vpow.pop %v895
        %v897 = vmul.f32 %v890, 1.442695
        %v898 = vpow.pop %v897
        %v899 = vsub.f32 %v871, %v877
        %v900 = vsub.f32 %v872, %v880
        %v901 = vsub.f32 %v873, %v883
        %v902 = vsub.f32 %v874, %v886
        %v903 = vmul.f32 %v899, 1.442695
        %v904 = vpow.pop %v903
        %v905 = vmul.f32 %v900, 1.442695
        %v906 = vpow.pop %v905
        %v907 = vmul.f32 %v901, 1.442695
        %v908 = vpow.pop %v907
        %v909 = vmul.f32 %v902, 1.442695
        %v910 = vpow.pop %v909
        %v911 = vmul.f32 %v892, 0.0
        %v912 = vmul.f32 %v894, 0.0
        %v913 = vmul.f32 %v896, 0.0
        %v914 = vmul.f32 %v898, 0.0
        %v915 = vsel %vm568, %v904, 0.0
        %916 = vadd.xlane.f32.xlu0 %v915
        %v917 = vpop.xlane.xlu0 %916
        %v918 = vsel %vm568, %v906, 0.0
        %919 = vadd.xlane.f32.xlu0 %v918
        %v920 = vpop.xlane.xlu0 %919
        %v921 = vsel %vm568, %v908, 0.0
        %922 = vadd.xlane.f32.xlu0 %v921
        %v923 = vpop.xlane.xlu0 %922
        %v924 = vsel %vm568, %v910, 0.0
        %925 = vadd.xlane.f32.xlu0 %v924
        %v926 = vpop.xlane.xlu0 %925
        %v927 = vadd.f32 %v911, %v917
        %v928 = vadd.f32 %v912, %v920
        %v929 = vadd.f32 %v913, %v923
        %v930 = vadd.f32 %v914, %v926
        %931 = vrot.lane.b32.xlu0 %v556, 64
        %v932 = vpop.permute.xlu0 %931
        %v935 = vsel %vm568, %v904, 0
        %937 = vmatprep.subr.mxu0 0.0
        %938 = vmatpush1.msra.mxu0 %v932
        %939 = vmatprep.subr.mxu0 0.0
        %940 = vmatpush1.msra.mxu0 0.0
        %941 = vmatprep.subr.mxu0 0.0
        %942 = vmatpush1.msra.mxu0 0.0
        %943 = vmatprep.subr.mxu0 0.0
        %944 = vmatpush1.msra.mxu0 0.0
        %945 = vmatprep.subr.mxu0 0.0
        %946 = vmatpush1.msra.mxu0 0.0
        %947 = vmatprep.subr.mxu0 0.0
        %948 = vmatpush1.msra.mxu0 0.0
        %949 = vmatprep.subr.mxu0 0.0
        %950 = vmatpush1.msra.mxu0 0.0
        %951 = vmatprep.subr.mxu0 0.0
        %952 = vmatpush1.msra.mxu0 0.0
        %953 = vmatprep.subr.mxu0 0.0
        %954 = vmatpush1.msra.mxu0 0.0
        %955 = vmatprep.subr.mxu0 0.0
        %956 = vmatpush1.msra.mxu0 0.0
        %957 = vmatprep.subr.mxu0 0.0
        %958 = vmatpush1.msra.mxu0 0.0
        %959 = vmatprep.subr.mxu0 0.0
        %960 = vmatpush1.msra.mxu0 0.0
        %961 = vmatprep.subr.mxu0 0.0
        %962 = vmatpush1.msra.mxu0 0.0
        %963 = vmatprep.subr.mxu0 0.0
        %964 = vmatpush1.msra.mxu0 0.0
        %965 = vmatprep.subr.mxu0 0.0
        %966 = vmatpush1.msra.mxu0 0.0
        %967 = vmatprep.subr.mxu0 0.0
        %968 = vmatpush1.msra.mxu0 0.0
        %969 = vmatprep.subr.mxu0 0.0
        %970 = vmatpush1.msra.mxu0 0.0
        %971 = vmatprep.subr.mxu0 0.0
        %972 = vmatpush1.msra.mxu0 0.0
        %973 = vmatprep.subr.mxu0 0.0
        %974 = vmatpush1.msra.mxu0 0.0
        %975 = vmatprep.subr.mxu0 0.0
        %976 = vmatpush1.msra.mxu0 0.0
        %977 = vmatprep.subr.mxu0 0.0
        %978 = vmatpush1.msra.mxu0 0.0
        %979 = vmatprep.subr.mxu0 0.0
        %980 = vmatpush1.msra.mxu0 0.0
        %981 = vmatprep.subr.mxu0 0.0
        %982 = vmatpush1.msra.mxu0 0.0
        %983 = vmatprep.subr.mxu0 0.0
        %984 = vmatpush1.msra.mxu0 0.0
        %985 = vmatprep.subr.mxu0 0.0
        %986 = vmatpush1.msra.mxu0 0.0
        %987 = vmatprep.subr.mxu0 0.0
        %988 = vmatpush1.msra.mxu0 0.0
        %989 = vmatprep.subr.mxu0 0.0
        %990 = vmatpush1.msra.mxu0 0.0
        %991 = vmatprep.subr.mxu0 0.0
        %992 = vmatpush1.msra.mxu0 0.0
        %993 = vmatprep.subr.mxu0 0.0
        %994 = vmatpush1.msra.mxu0 0.0
        %995 = vmatprep.subr.mxu0 0.0
        %996 = vmatpush1.msra.mxu0 0.0
        %997 = vmatprep.subr.mxu0 0.0
        %998 = vmatpush1.msra.mxu0 0.0
        %999 = vmatprep.subr.mxu0 0.0
        %1000 = vmatpush1.msra.mxu0 0.0
        %1001 = vmatprep.mubr.f32.mxu0 0.0
        %1002 = vmatmul.mubr.f32.gmra.mrb[0].mxu0 %v935
        %v1003 = vpop.f32.mrb[0].mxu0
        %v1004 = vadd.f32 0.0, %v1003
        %v1005 = vpop.f32.mrb[0].mxu0
        %1006 = vdwg.mxu0
        %1007 = vrot.lane.b32.xlu0 %v561, 64
        %v1008 = vpop.permute.xlu0 %1007
        %v1011 = vsel %vm568, %v906, 0
        %1013 = vmatprep.subr.mxu0 0.0
        %1014 = vmatpush1.msra.mxu0 %v1008
        %1015 = vmatprep.subr.mxu0 0.0
        %1016 = vmatpush1.msra.mxu0 0.0
        %1017 = vmatprep.subr.mxu0 0.0
        %1018 = vmatpush1.msra.mxu0 0.0
        %1019 = vmatprep.subr.mxu0 0.0
        %1020 = vmatpush1.msra.mxu0 0.0
        %1021 = vmatprep.subr.mxu0 0.0
        %1022 = vmatpush1.msra.mxu0 0.0
        %1023 = vmatprep.subr.mxu0 0.0
        %1024 = vmatpush1.msra.mxu0 0.0
        %1025 = vmatprep.subr.mxu0 0.0
        %1026 = vmatpush1.msra.mxu0 0.0
        %1027 = vmatprep.subr.mxu0 0.0
        %1028 = vmatpush1.msra.mxu0 0.0
        %1029 = vmatprep.subr.mxu0 0.0
        %1030 = vmatpush1.msra.mxu0 0.0
        %1031 = vmatprep.subr.mxu0 0.0
        %1032 = vmatpush1.msra.mxu0 0.0
        %1033 = vmatprep.subr.mxu0 0.0
        %1034 = vmatpush1.msra.mxu0 0.0
        %1035 = vmatprep.subr.mxu0 0.0
        %1036 = vmatpush1.msra.mxu0 0.0
        %1037 = vmatprep.subr.mxu0 0.0
        %1038 = vmatpush1.msra.mxu0 0.0
        %1039 = vmatprep.subr.mxu0 0.0
        %1040 = vmatpush1.msra.mxu0 0.0
        %1041 = vmatprep.subr.mxu0 0.0
        %1042 = vmatpush1.msra.mxu0 0.0
        %1043 = vmatprep.subr.mxu0 0.0
        %1044 = vmatpush1.msra.mxu0 0.0
        %1045 = vmatprep.subr.mxu0 0.0
        %1046 = vmatpush1.msra.mxu0 0.0
        %1047 = vmatprep.subr.mxu0 0.0
        %1048 = vmatpush1.msra.mxu0 0.0
        %1049 = vmatprep.subr.mxu0 0.0
        %1050 = vmatpush1.msra.mxu0 0.0
        %1051 = vmatprep.subr.mxu0 0.0
        %1052 = vmatpush1.msra.mxu0 0.0
        %1053 = vmatprep.subr.mxu0 0.0
        %1054 = vmatpush1.msra.mxu0 0.0
        %1055 = vmatprep.subr.mxu0 0.0
        %1056 = vmatpush1.msra.mxu0 0.0
        %1057 = vmatprep.subr.mxu0 0.0
        %1058 = vmatpush1.msra.mxu0 0.0
        %1059 = vmatprep.subr.mxu0 0.0
        %1060 = vmatpush1.msra.mxu0 0.0
        %1061 = vmatprep.subr.mxu0 0.0
        %1062 = vmatpush1.msra.mxu0 0.0
        %1063 = vmatprep.subr.mxu0 0.0
        %1064 = vmatpush1.msra.mxu0 0.0
        %1065 = vmatprep.subr.mxu0 0.0
        %1066 = vmatpush1.msra.mxu0 0.0
        %1067 = vmatprep.subr.mxu0 0.0
        %1068 = vmatpush1.msra.mxu0 0.0
        %1069 = vmatprep.subr.mxu0 0.0
        %1070 = vmatpush1.msra.mxu0 0.0
        %1071 = vmatprep.subr.mxu0 0.0
        %1072 = vmatpush1.msra.mxu0 0.0
        %1073 = vmatprep.subr.mxu0 0.0
        %1074 = vmatpush1.msra.mxu0 0.0
        %1075 = vmatprep.subr.mxu0 0.0
        %1076 = vmatpush1.msra.mxu0 0.0
        %1077 = vmatprep.mubr.f32.mxu0 0.0
        %1078 = vmatmul.mubr.f32.gmra.mrb[0].mxu0 %v1011
        %v1079 = vpop.f32.mrb[0].mxu0
        %v1080 = vadd.f32 0.0, %v1079
        %v1081 = vpop.f32.mrb[0].mxu0
        %1082 = vdwg.mxu0
        %1083 = vrot.lane.b32.xlu0 %v563, 64
        %v1084 = vpop.permute.xlu0 %1083
        %v1087 = vsel %vm568, %v908, 0
        %1089 = vmatprep.subr.mxu0 0.0
        %1090 = vmatpush1.msra.mxu0 %v1084
        %1091 = vmatprep.subr.mxu0 0.0
        %1092 = vmatpush1.msra.mxu0 0.0
        %1093 = vmatprep.subr.mxu0 0.0
        %1094 = vmatpush1.msra.mxu0 0.0
        %1095 = vmatprep.subr.mxu0 0.0
        %1096 = vmatpush1.msra.mxu0 0.0
        %1097 = vmatprep.subr.mxu0 0.0
        %1098 = vmatpush1.msra.mxu0 0.0
        %1099 = vmatprep.subr.mxu0 0.0
        %1100 = vmatpush1.msra.mxu0 0.0
        %1101 = vmatprep.subr.mxu0 0.0
        %1102 = vmatpush1.msra.mxu0 0.0
        %1103 = vmatprep.subr.mxu0 0.0
        %1104 = vmatpush1.msra.mxu0 0.0
        %1105 = vmatprep.subr.mxu0 0.0
        %1106 = vmatpush1.msra.mxu0 0.0
        %1107 = vmatprep.subr.mxu0 0.0
        %1108 = vmatpush1.msra.mxu0 0.0
        %1109 = vmatprep.subr.mxu0 0.0
        %1110 = vmatpush1.msra.mxu0 0.0
        %1111 = vmatprep.subr.mxu0 0.0
        %1112 = vmatpush1.msra.mxu0 0.0
        %1113 = vmatprep.subr.mxu0 0.0
        %1114 = vmatpush1.msra.mxu0 0.0
        %1115 = vmatprep.subr.mxu0 0.0
        %1116 = vmatpush1.msra.mxu0 0.0
        %1117 = vmatprep.subr.mxu0 0.0
        %1118 = vmatpush1.msra.mxu0 0.0
        %1119 = vmatprep.subr.mxu0 0.0
        %1120 = vmatpush1.msra.mxu0 0.0
        %1121 = vmatprep.subr.mxu0 0.0
        %1122 = vmatpush1.msra.mxu0 0.0
        %1123 = vmatprep.subr.mxu0 0.0
        %1124 = vmatpush1.msra.mxu0 0.0
        %1125 = vmatprep.subr.mxu0 0.0
        %1126 = vmatpush1.msra.mxu0 0.0
        %1127 = vmatprep.subr.mxu0 0.0
        %1128 = vmatpush1.msra.mxu0 0.0
        %1129 = vmatprep.subr.mxu0 0.0
        %1130 = vmatpush1.msra.mxu0 0.0
        %1131 = vmatprep.subr.mxu0 0.0
        %1132 = vmatpush1.msra.mxu0 0.0
        %1133 = vmatprep.subr.mxu0 0.0
        %1134 = vmatpush1.msra.mxu0 0.0
        %1135 = vmatprep.subr.mxu0 0.0
        %1136 = vmatpush1.msra.mxu0 0.0
        %1137 = vmatprep.subr.mxu0 0.0
        %1138 = vmatpush1.msra.mxu0 0.0
        %1139 = vmatprep.subr.mxu0 0.0
        %1140 = vmatpush1.msra.mxu0 0.0
        %1141 = vmatprep.subr.mxu0 0.0
        %1142 = vmatpush1.msra.mxu0 0.0
        %1143 = vmatprep.subr.mxu0 0.0
        %1144 = vmatpush1.msra.mxu0 0.0
        %1145 = vmatprep.subr.mxu0 0.0
        %1146 = vmatpush1.msra.mxu0 0.0
        %1147 = vmatprep.subr.mxu0 0.0
        %1148 = vmatpush1.msra.mxu0 0.0
        %1149 = vmatprep.subr.mxu0 0.0
        %1150 = vmatpush1.msra.mxu0 0.0
        %1151 = vmatprep.subr.mxu0 0.0
        %1152 = vmatpush1.msra.mxu0 0.0
        %1153 = vmatprep.mubr.f32.mxu0 0.0
        %1154 = vmatmul.mubr.f32.gmra.mrb[0].mxu0 %v1087
        %v1155 = vpop.f32.mrb[0].mxu0
        %v1156 = vadd.f32 0.0, %v1155
        %v1157 = vpop.f32.mrb[0].mxu0
        %1158 = vdwg.mxu0
        %1159 = vrot.lane.b32.xlu0 %v565, 64
        %v1160 = vpop.permute.xlu0 %1159
        %v1163 = vsel %vm568, %v910, 0
        %1165 = vmatprep.subr.mxu0 0.0
        %1166 = vmatpush1.msra.mxu0 %v1160
        %1167 = vmatprep.subr.mxu0 0.0
        %1168 = vmatpush1.msra.mxu0 0.0
        %1169 = vmatprep.subr.mxu0 0.0
        %1170 = vmatpush1.msra.mxu0 0.0
        %1171 = vmatprep.subr.mxu0 0.0
        %1172 = vmatpush1.msra.mxu0 0.0
        %1173 = vmatprep.subr.mxu0 0.0
        %1174 = vmatpush1.msra.mxu0 0.0
        %1175 = vmatprep.subr.mxu0 0.0
        %1176 = vmatpush1.msra.mxu0 0.0
        %1177 = vmatprep.subr.mxu0 0.0
        %1178 = vmatpush1.msra.mxu0 0.0
        %1179 = vmatprep.subr.mxu0 0.0
        %1180 = vmatpush1.msra.mxu0 0.0
        %1181 = vmatprep.subr.mxu0 0.0
        %1182 = vmatpush1.msra.mxu0 0.0
        %1183 = vmatprep.subr.mxu0 0.0
        %1184 = vmatpush1.msra.mxu0 0.0
        %1185 = vmatprep.subr.mxu0 0.0
        %1186 = vmatpush1.msra.mxu0 0.0
        %1187 = vmatprep.subr.mxu0 0.0
        %1188 = vmatpush1.msra.mxu0 0.0
        %1189 = vmatprep.subr.mxu0 0.0
        %1190 = vmatpush1.msra.mxu0 0.0
        %1191 = vmatprep.subr.mxu0 0.0
        %1192 = vmatpush1.msra.mxu0 0.0
        %1193 = vmatprep.subr.mxu0 0.0
        %1194 = vmatpush1.msra.mxu0 0.0
        %1195 = vmatprep.subr.mxu0 0.0
        %1196 = vmatpush1.msra.mxu0 0.0
        %1197 = vmatprep.subr.mxu0 0.0
        %1198 = vmatpush1.msra.mxu0 0.0
        %1199 = vmatprep.subr.mxu0 0.0
        %1200 = vmatpush1.msra.mxu0 0.0
        %1201 = vmatprep.subr.mxu0 0.0
        %1202 = vmatpush1.msra.mxu0 0.0
        %1203 = vmatprep.subr.mxu0 0.0
        %1204 = vmatpush1.msra.mxu0 0.0
        %1205 = vmatprep.subr.mxu0 0.0
        %1206 = vmatpush1.msra.mxu0 0.0
        %1207 = vmatprep.subr.mxu0 0.0
        %1208 = vmatpush1.msra.mxu0 0.0
        %1209 = vmatprep.subr.mxu0 0.0
        %1210 = vmatpush1.msra.mxu0 0.0
        %1211 = vmatprep.subr.mxu0 0.0
        %1212 = vmatpush1.msra.mxu0 0.0
        %1213 = vmatprep.subr.mxu0 0.0
        %1214 = vmatpush1.msra.mxu0 0.0
        %1215 = vmatprep.subr.mxu0 0.0
        %1216 = vmatpush1.msra.mxu0 0.0
        %1217 = vmatprep.subr.mxu0 0.0
        %1218 = vmatpush1.msra.mxu0 0.0
        %1219 = vmatprep.subr.mxu0 0.0
        %1220 = vmatpush1.msra.mxu0 0.0
        %1221 = vmatprep.subr.mxu0 0.0
        %1222 = vmatpush1.msra.mxu0 0.0
        %1223 = vmatprep.subr.mxu0 0.0
        %1224 = vmatpush1.msra.mxu0 0.0
        %1225 = vmatprep.subr.mxu0 0.0
        %1226 = vmatpush1.msra.mxu0 0.0
        %1227 = vmatprep.subr.mxu0 0.0
        %1228 = vmatpush1.msra.mxu0 0.0
        %1229 = vmatprep.mubr.f32.mxu0 0.0
        %1230 = vmatmul.mubr.f32.gmra.mrb[0].mxu0 %v1163
        %v1231 = vpop.f32.mrb[0].mxu0
        %v1232 = vadd.f32 0.0, %v1231
        %v1233 = vpop.f32.mrb[0].mxu0
        %1234 = vdwg.mxu0
        %v1235 = vadd.f32 %v911, %v1004
        %v1236 = vadd.f32 %v912, %v1080
        %v1237 = vadd.f32 %v913, %v1156
        %v1238 = vadd.f32 %v914, %v1232
        %v1239 = vrcp.pop %v927
        %v1240 = vrcp.pop %v928
        %v1241 = vrcp.pop %v929
        %v1242 = vrcp.pop %v930
        %v1243 = vmul.f32 %v1235, %v1239
        %v1244 = vmul.f32 %v1236, %v1240
        %v1245 = vmul.f32 %v1237, %v1241
        %v1246 = vmul.f32 %v1238, %v1242
        %1248 = vrot.lane.b32.xlu0 %v1244, 8
        %v1249 = vpop.permute.xlu0 %1248
        %1252 = vrot.lane.b32.xlu0 %v1245, 16
        %v1253 = vpop.permute.xlu0 %1252
        %1256 = vrot.lane.b32.xlu0 %v1246, 24
        %v1257 = vpop.permute.xlu0 %1256
        %v1259 = vsel %vm568, %v1243, %v1249
        %vm1260 = vcmask 130048
        %v1261 = vsel %vm1260, %v1259, %v1253
        %vm1262 = vcmask 195584
        %v1263 = vsel %vm1262, %v1261, %v1257
        %v1264 = vld [vmem:[%s5] sm:$0xff]
        %v1265 = vld [vmem:[%s5 + $0x8] sm:$0xff]
        %v1266 = vld [vmem:[%s5 + $0x10] sm:$0xff]
        %v1267 = vld [vmem:[%s5 + $0x18] sm:$0xff]
        %v1268 = vld [vmem:[%s6] sm:$0x1]
        %v1270 = vlaneseq
        %v1271 = vshrl.u32 %v1270, 7
        %v1272 = vsub.s32 0, %v1271
        %v1273 = vrot.slane %v1268, %v1272
        %v1276 = vsel %vm439, %v1263, 0
        %1278 = vmatprep.subr.mxu0 0.0
        %1279 = vmatpush1.msra.mxu0 %v1264
        %1280 = vmatprep.subr.mxu0 0.0
        %1281 = vmatpush1.msra.mxu0 %v1265
        %1282 = vmatprep.subr.mxu0 0.0
        %1283 = vmatpush1.msra.mxu0 %v1266
        %1284 = vmatprep.subr.mxu0 0.0
        %1285 = vmatpush1.msra.mxu0 %v1267
        %1286 = vmatprep.subr.mxu0 0.0
        %1287 = vmatpush1.msra.mxu0 0.0
        %1288 = vmatprep.subr.mxu0 0.0
        %1289 = vmatpush1.msra.mxu0 0.0
        %1290 = vmatprep.subr.mxu0 0.0
        %1291 = vmatpush1.msra.mxu0 0.0
        %1292 = vmatprep.subr.mxu0 0.0
        %1293 = vmatpush1.msra.mxu0 0.0
        %1294 = vmatprep.subr.mxu0 0.0
        %1295 = vmatpush1.msra.mxu0 0.0
        %1296 = vmatprep.subr.mxu0 0.0
        %1297 = vmatpush1.msra.mxu0 0.0
        %1298 = vmatprep.subr.mxu0 0.0
        %1299 = vmatpush1.msra.mxu0 0.0
        %1300 = vmatprep.subr.mxu0 0.0
        %1301 = vmatpush1.msra.mxu0 0.0
        %1302 = vmatprep.subr.mxu0 0.0
        %1303 = vmatpush1.msra.mxu0 0.0
        %1304 = vmatprep.subr.mxu0 0.0
        %1305 = vmatpush1.msra.mxu0 0.0
        %1306 = vmatprep.subr.mxu0 0.0
        %1307 = vmatpush1.msra.mxu0 0.0
        %1308 = vmatprep.subr.mxu0 0.0
        %1309 = vmatpush1.msra.mxu0 0.0
        %1310 = vmatprep.subr.mxu0 0.0
        %1311 = vmatpush1.msra.mxu0 0.0
        %1312 = vmatprep.subr.mxu0 0.0
        %1313 = vmatpush1.msra.mxu0 0.0
        %1314 = vmatprep.subr.mxu0 0.0
        %1315 = vmatpush1.msra.mxu0 0.0
        %1316 = vmatprep.subr.mxu0 0.0
        %1317 = vmatpush1.msra.mxu0 0.0
        %1318 = vmatprep.subr.mxu0 0.0
        %1319 = vmatpush1.msra.mxu0 0.0
        %1320 = vmatprep.subr.mxu0 0.0
        %1321 = vmatpush1.msra.mxu0 0.0
        %1322 = vmatprep.subr.mxu0 0.0
        %1323 = vmatpush1.msra.mxu0 0.0
        %1324 = vmatprep.subr.mxu0 0.0
        %1325 = vmatpush1.msra.mxu0 0.0
        %1326 = vmatprep.subr.mxu0 0.0
        %1327 = vmatpush1.msra.mxu0 0.0
        %1328 = vmatprep.subr.mxu0 0.0
        %1329 = vmatpush1.msra.mxu0 0.0
        %1330 = vmatprep.subr.mxu0 0.0
        %1331 = vmatpush1.msra.mxu0 0.0
        %1332 = vmatprep.subr.mxu0 0.0
        %1333 = vmatpush1.msra.mxu0 0.0
        %1334 = vmatprep.subr.mxu0 0.0
        %1335 = vmatpush1.msra.mxu0 0.0
        %1336 = vmatprep.subr.mxu0 0.0
        %1337 = vmatpush1.msra.mxu0 0.0
        %1338 = vmatprep.subr.mxu0 0.0
        %1339 = vmatpush1.msra.mxu0 0.0
        %1340 = vmatprep.subr.mxu0 0.0
        %1341 = vmatpush1.msra.mxu0 0.0
        %1342 = vmatprep.mubr.f32.mxu0 0.0
        %1343 = vmatmul.mubr.f32.gmra.mrb[0].mxu0 %v1276
        %v1344 = vpop.f32.mrb[0].mxu0
        %v1345 = vadd.f32 %v1273, %v1344
        %v1346 = vpop.f32.mrb[0].mxu0
        %1347 = vdwg.mxu0
        %v1348 = vadd.f32 %v436, %v1345
        %v1349 = vld [vmem:[%s7] sm:$0x1]
        %v1350 = vld [vmem:[%s8] sm:$0x1]
        %v1351 = vsel %vm439, %v1348, 0.0
        %1352 = vadd.xlane.f32.xlu0 %v1351
        %v1353 = vpop.xlane.xlu0 %1352
        %v1354 = vmul.f32 %v1353, %v443
        %v1355 = vsub.f32 %v1348, %v1354
        %v1356 = vmul.f32 %v1355, %v1355
        %v1357 = vsel %vm439, %v1356, 0.0
        %1358 = vadd.xlane.f32.xlu0 %v1357
        %v1359 = vpop.xlane.xlu0 %1358
        %v1360 = vmul.f32 %v1359, 0.032258064
        %v1361 = vrsqrt.pop %v1360
        %v1362 = vmul.f32 %v1360, %v1361
        %vm1363 = vcmp.eq.f32.partialorder %v1360, inf
        %v1364 = vsel %vm1363, %v1360, %v1362
        %vm1365 = vcmp.eq.f32.partialorder %v1360, 0.0
        %v1366 = vand.u32 %v1360, 2147483648
        %v1367 = vsel %vm1365, %v1366, %v1364
        %v1368 = vadd.f32 %v1367, 1e-06
        %v1369 = vrcp.pop %v1368
        %v1371 = vlaneseq
        %v1372 = vshrl.u32 %v1371, 7
        %v1373 = vsub.s32 0, %v1372
        %v1374 = vrot.slane %v1349, %v1373
        %v1376 = vmul.f32 %v1374, %v1355
        %v1377 = vmul.f32 %v1376, %v1369
        %v1379 = vlaneseq
        %v1380 = vshrl.u32 %v1379, 7
        %v1381 = vsub.s32 0, %v1380
        %v1382 = vrot.slane %v1350, %v1381
        %v1384 = vadd.f32 %v1377, %v1382
        %v1385 = vld [vmem:[%s9] sm:$0xff]
        %v1386 = vld [vmem:[%s9 + $0x8] sm:$0xff]
        %v1387 = vld [vmem:[%s9 + $0x10] sm:$0xff]
        %v1388 = vld [vmem:[%s9 + $0x18] sm:$0xff]
        %v1389 = vld [vmem:[%s9 + $0x20] sm:$0xff]
        %v1390 = vld [vmem:[%s9 + $0x28] sm:$0xff]
        %v1391 = vld [vmem:[%s9 + $0x30] sm:$0xff]
        %v1392 = vld [vmem:[%s9 + $0x38] sm:$0xff]
        %v1393 = vld [vmem:[%s9 + $0x40] sm:$0xff]
        %v1394 = vld [vmem:[%s9 + $0x48] sm:$0xff]
        %v1395 = vld [vmem:[%s9 + $0x50] sm:$0xff]
        %v1396 = vld [vmem:[%s9 + $0x58] sm:$0xff]
        %v1397 = vld [vmem:[%s9 + $0x60] sm:$0xff]
        %v1398 = vld [vmem:[%s9 + $0x68] sm:$0xff]
        %v1399 = vld [vmem:[%s9 + $0x70] sm:$0xff]
        %v1400 = vld [vmem:[%s9 + $0x78] sm:$0xff]
        %v1401 = vld [vmem:[%s9 + $0x80] sm:$0xff]
        %v1402 = vld [vmem:[%s9 + $0x88] sm:$0xff]
        %v1403 = vld [vmem:[%s9 + $0x90] sm:$0xff]
        %v1404 = vld [vmem:[%s9 + $0x98] sm:$0xff]
        %v1405 = vld [vmem:[%s9 + $0xa0] sm:$0xff]
        %v1406 = vld [vmem:[%s9 + $0xa8] sm:$0xff]
        %v1407 = vld [vmem:[%s9 + $0xb0] sm:$0xff]
        %v1408 = vld [vmem:[%s9 + $0xb8] sm:$0xff]
        %v1409 = vld [vmem:[%s9 + $0xc0] sm:$0xff]
        %v1410 = vld [vmem:[%s9 + $0xc8] sm:$0xff]
        %v1411 = vld [vmem:[%s9 + $0xd0] sm:$0xff]
        %v1412 = vld [vmem:[%s9 + $0xd8] sm:$0xff]
        %v1413 = vld [vmem:[%s9 + $0xe0] sm:$0xff]
        %v1414 = vld [vmem:[%s9 + $0xe8] sm:$0xff]
        %v1415 = vld [vmem:[%s9 + $0xf0] sm:$0xff]
        %v1416 = vld [vmem:[%s9 + $0xf8] sm:$0xff]
        %v1417 = vld [vmem:[%s10] sm:$0xff]
        %v1419 = vlaneseq
        %v1420 = vshrl.u32 %v1419, 7
        %v1421 = vsub.s32 0, %v1420
        %v1422 = vrot.slane %v1417, %v1421
        %v1423 = vlaneseq
        %v1424 = vshrl.u32 %v1423, 7
        %v1425 = vsub.s32 1, %v1424
        %v1426 = vrot.slane %v1417, %v1425
        %v1427 = vlaneseq
        %v1428 = vshrl.u32 %v1427, 7
        %v1429 = vsub.s32 2, %v1428
        %v1430 = vrot.slane %v1417, %v1429
        %v1431 = vlaneseq
        %v1432 = vshrl.u32 %v1431, 7
        %v1433 = vsub.s32 3, %v1432
        %v1434 = vrot.slane %v1417, %v1433
        %v1435 = vlaneseq
        %v1436 = vshrl.u32 %v1435, 7
        %v1437 = vsub.s32 4, %v1436
        %v1438 = vrot.slane %v1417, %v1437
        %v1439 = vlaneseq
        %v1440 = vshrl.u32 %v1439, 7
        %v1441 = vsub.s32 5, %v1440
        %v1442 = vrot.slane %v1417, %v1441
        %v1443 = vlaneseq
        %v1444 = vshrl.u32 %v1443, 7
        %v1445 = vsub.s32 6, %v1444
        %v1446 = vrot.slane %v1417, %v1445
        %v1447 = vlaneseq
        %v1448 = vshrl.u32 %v1447, 7
        %v1449 = vsub.s32 7, %v1448
        %v1450 = vrot.slane %v1417, %v1449
        %v1460 = vsel %vm439, %v1384, 0
        %1462 = vmatprep.subr.mxu0 %v1386
        %1463 = vmatpush1.msra.mxu0 %v1385
        %1464 = vmatprep.subr.mxu0 %v1394
        %1465 = vmatpush1.msra.mxu0 %v1393
        %1466 = vmatprep.subr.mxu0 %v1402
        %1467 = vmatpush1.msra.mxu0 %v1401
        %1468 = vmatprep.subr.mxu0 %v1410
        %1469 = vmatpush1.msra.mxu0 %v1409
        %1470 = vmatprep.subr.mxu0 0.0
        %1471 = vmatpush1.msra.mxu0 0.0
        %1472 = vmatprep.subr.mxu0 0.0
        %1473 = vmatpush1.msra.mxu0 0.0
        %1474 = vmatprep.subr.mxu0 0.0
        %1475 = vmatpush1.msra.mxu0 0.0
        %1476 = vmatprep.subr.mxu0 0.0
        %1477 = vmatpush1.msra.mxu0 0.0
        %1478 = vmatprep.subr.mxu0 0.0
        %1479 = vmatpush1.msra.mxu0 0.0
        %1480 = vmatprep.subr.mxu0 0.0
        %1481 = vmatpush1.msra.mxu0 0.0
        %1482 = vmatprep.subr.mxu0 0.0
        %1483 = vmatpush1.msra.mxu0 0.0
        %1484 = vmatprep.subr.mxu0 0.0
        %1485 = vmatpush1.msra.mxu0 0.0
        %1486 = vmatprep.subr.mxu0 0.0
        %1487 = vmatpush1.msra.mxu0 0.0
        %1488 = vmatprep.subr.mxu0 0.0
        %1489 = vmatpush1.msra.mxu0 0.0
        %1490 = vmatprep.subr.mxu0 0.0
        %1491 = vmatpush1.msra.mxu0 0.0
        %1492 = vmatprep.subr.mxu0 0.0
        %1493 = vmatpush1.msra.mxu0 0.0
        %1494 = vmatprep.subr.mxu0 0.0
        %1495 = vmatpush1.msra.mxu0 0.0
        %1496 = vmatprep.subr.mxu0 0.0
        %1497 = vmatpush1.msra.mxu0 0.0
        %1498 = vmatprep.subr.mxu0 0.0
        %1499 = vmatpush1.msra.mxu0 0.0
        %1500 = vmatprep.subr.mxu0 0.0
        %1501 = vmatpush1.msra.mxu0 0.0
        %1502 = vmatprep.subr.mxu0 0.0
        %1503 = vmatpush1.msra.mxu0 0.0
        %1504 = vmatprep.subr.mxu0 0.0
        %1505 = vmatpush1.msra.mxu0 0.0
        %1506 = vmatprep.subr.mxu0 0.0
        %1507 = vmatpush1.msra.mxu0 0.0
        %1508 = vmatprep.subr.mxu0 0.0
        %1509 = vmatpush1.msra.mxu0 0.0
        %1510 = vmatprep.subr.mxu0 0.0
        %1511 = vmatpush1.msra.mxu0 0.0
        %1512 = vmatprep.subr.mxu0 0.0
        %1513 = vmatpush1.msra.mxu0 0.0
        %1514 = vmatprep.subr.mxu0 0.0
        %1515 = vmatpush1.msra.mxu0 0.0
        %1516 = vmatprep.subr.mxu0 0.0
        %1517 = vmatpush1.msra.mxu0 0.0
        %1518 = vmatprep.subr.mxu0 0.0
        %1519 = vmatpush1.msra.mxu0 0.0
        %1520 = vmatprep.subr.mxu0 0.0
        %1521 = vmatpush1.msra.mxu0 0.0
        %1522 = vmatprep.subr.mxu0 0.0
        %1523 = vmatpush1.msra.mxu0 0.0
        %1524 = vmatprep.subr.mxu0 0.0
        %1525 = vmatpush1.msra.mxu0 0.0
        %1526 = vmatprep.mubr.f32.mxu0 0.0
        %1527 = vmatmul.mubr.f32.gmra.mrb[0].mxu0 %v1460
        %v1528 = vpop.f32.mrb[0].mxu0
        %v1529 = vadd.f32 %v1422, %v1528
        %v1530 = vpop.f32.mrb[0].mxu0
        %v1531 = vadd.f32 %v1426, %v1530
        %1532 = vdwg.mxu0
        %1533 = vmatprep.subr.mxu0 %v1388
        %1534 = vmatpush1.msra.mxu0 %v1387
        %1535 = vmatprep.subr.mxu0 %v1396
        %1536 = vmatpush1.msra.mxu0 %v1395
        %1537 = vmatprep.subr.mxu0 %v1404
        %1538 = vmatpush1.msra.mxu0 %v1403
        %1539 = vmatprep.subr.mxu0 %v1412
        %1540 = vmatpush1.msra.mxu0 %v1411
        %1541 = vmatprep.subr.mxu0 0.0
        %1542 = vmatpush1.msra.mxu0 0.0
        %1543 = vmatprep.subr.mxu0 0.0
        %1544 = vmatpush1.msra.mxu0 0.0
        %1545 = vmatprep.subr.mxu0 0.0
        %1546 = vmatpush1.msra.mxu0 0.0
        %1547 = vmatprep.subr.mxu0 0.0
        %1548 = vmatpush1.msra.mxu0 0.0
        %1549 = vmatprep.subr.mxu0 0.0
        %1550 = vmatpush1.msra.mxu0 0.0
        %1551 = vmatprep.subr.mxu0 0.0
        %1552 = vmatpush1.msra.mxu0 0.0
        %1553 = vmatprep.subr.mxu0 0.0
        %1554 = vmatpush1.msra.mxu0 0.0
        %1555 = vmatprep.subr.mxu0 0.0
        %1556 = vmatpush1.msra.mxu0 0.0
        %1557 = vmatprep.subr.mxu0 0.0
        %1558 = vmatpush1.msra.mxu0 0.0
        %1559 = vmatprep.subr.mxu0 0.0
        %1560 = vmatpush1.msra.mxu0 0.0
        %1561 = vmatprep.subr.mxu0 0.0
        %1562 = vmatpush1.msra.mxu0 0.0
        %1563 = vmatprep.subr.mxu0 0.0
        %1564 = vmatpush1.msra.mxu0 0.0
        %1565 = vmatprep.subr.mxu0 0.0
        %1566 = vmatpush1.msra.mxu0 0.0
        %1567 = vmatprep.subr.mxu0 0.0
        %1568 = vmatpush1.msra.mxu0 0.0
        %1569 = vmatprep.subr.mxu0 0.0
        %1570 = vmatpush1.msra.mxu0 0.0
        %1571 = vmatprep.subr.mxu0 0.0
        %1572 = vmatpush1.msra.mxu0 0.0
        %1573 = vmatprep.subr.mxu0 0.0
        %1574 = vmatpush1.msra.mxu0 0.0
        %1575 = vmatprep.subr.mxu0 0.0
        %1576 = vmatpush1.msra.mxu0 0.0
        %1577 = vmatprep.subr.mxu0 0.0
        %1578 = vmatpush1.msra.mxu0 0.0
        %1579 = vmatprep.subr.mxu0 0.0
        %1580 = vmatpush1.msra.mxu0 0.0
        %1581 = vmatprep.subr.mxu0 0.0
        %1582 = vmatpush1.msra.mxu0 0.0
        %1583 = vmatprep.subr.mxu0 0.0
        %1584 = vmatpush1.msra.mxu0 0.0
        %1585 = vmatprep.subr.mxu0 0.0
        %1586 = vmatpush1.msra.mxu0 0.0
        %1587 = vmatprep.subr.mxu0 0.0
        %1588 = vmatpush1.msra.mxu0 0.0
        %1589 = vmatprep.subr.mxu0 0.0
        %1590 = vmatpush1.msra.mxu0 0.0
        %1591 = vmatprep.subr.mxu0 0.0
        %1592 = vmatpush1.msra.mxu0 0.0
        %1593 = vmatprep.subr.mxu0 0.0
        %1594 = vmatpush1.msra.mxu0 0.0
        %1595 = vmatprep.subr.mxu0 0.0
        %1596 = vmatpush1.msra.mxu0 0.0
        %1597 = vmatprep.mubr.f32.mxu0 0.0
        %1598 = vmatmul.mubr.f32.gmra.mrb[0].mxu0 %v1460
        %v1599 = vpop.f32.mrb[0].mxu0
        %v1600 = vadd.f32 %v1430, %v1599
        %v1601 = vpop.f32.mrb[0].mxu0
        %v1602 = vadd.f32 %v1434, %v1601
        %1603 = vdwg.mxu0
        %1604 = vmatprep.subr.mxu0 %v1390
        %1605 = vmatpush1.msra.mxu0 %v1389
        %1606 = vmatprep.subr.mxu0 %v1398
        %1607 = vmatpush1.msra.mxu0 %v1397
        %1608 = vmatprep.subr.mxu0 %v1406
        %1609 = vmatpush1.msra.mxu0 %v1405
        %1610 = vmatprep.subr.mxu0 %v1414
        %1611 = vmatpush1.msra.mxu0 %v1413
        %1612 = vmatprep.subr.mxu0 0.0
        %1613 = vmatpush1.msra.mxu0 0.0
        %1614 = vmatprep.subr.mxu0 0.0
        %1615 = vmatpush1.msra.mxu0 0.0
        %1616 = vmatprep.subr.mxu0 0.0
        %1617 = vmatpush1.msra.mxu0 0.0
        %1618 = vmatprep.subr.mxu0 0.0
        %1619 = vmatpush1.msra.mxu0 0.0
        %1620 = vmatprep.subr.mxu0 0.0
        %1621 = vmatpush1.msra.mxu0 0.0
        %1622 = vmatprep.subr.mxu0 0.0
        %1623 = vmatpush1.msra.mxu0 0.0
        %1624 = vmatprep.subr.mxu0 0.0
        %1625 = vmatpush1.msra.mxu0 0.0
        %1626 = vmatprep.subr.mxu0 0.0
        %1627 = vmatpush1.msra.mxu0 0.0
        %1628 = vmatprep.subr.mxu0 0.0
        %1629 = vmatpush1.msra.mxu0 0.0
        %1630 = vmatprep.subr.mxu0 0.0
        %1631 = vmatpush1.msra.mxu0 0.0
        %1632 = vmatprep.subr.mxu0 0.0
        %1633 = vmatpush1.msra.mxu0 0.0
        %1634 = vmatprep.subr.mxu0 0.0
        %1635 = vmatpush1.msra.mxu0 0.0
        %1636 = vmatprep.subr.mxu0 0.0
        %1637 = vmatpush1.msra.mxu0 0.0
        %1638 = vmatprep.subr.mxu0 0.0
        %1639 = vmatpush1.msra.mxu0 0.0
        %1640 = vmatprep.subr.mxu0 0.0
        %1641 = vmatpush1.msra.mxu0 0.0
        %1642 = vmatprep.subr.mxu0 0.0
        %1643 = vmatpush1.msra.mxu0 0.0
        %1644 = vmatprep.subr.mxu0 0.0
        %1645 = vmatpush1.msra.mxu0 0.0
        %1646 = vmatprep.subr.mxu0 0.0
        %1647 = vmatpush1.msra.mxu0 0.0
        %1648 = vmatprep.subr.mxu0 0.0
        %1649 = vmatpush1.msra.mxu0 0.0
        %1650 = vmatprep.subr.mxu0 0.0
        %1651 = vmatpush1.msra.mxu0 0.0
        %1652 = vmatprep.subr.mxu0 0.0
        %1653 = vmatpush1.msra.mxu0 0.0
        %1654 = vmatprep.subr.mxu0 0.0
        %1655 = vmatpush1.msra.mxu0 0.0
        %1656 = vmatprep.subr.mxu0 0.0
        %1657 = vmatpush1.msra.mxu0 0.0
        %1658 = vmatprep.subr.mxu0 0.0
        %1659 = vmatpush1.msra.mxu0 0.0
        %1660 = vmatprep.subr.mxu0 0.0
        %1661 = vmatpush1.msra.mxu0 0.0
        %1662 = vmatprep.subr.mxu0 0.0
        %1663 = vmatpush1.msra.mxu0 0.0
        %1664 = vmatprep.subr.mxu0 0.0
        %1665 = vmatpush1.msra.mxu0 0.0
        %1666 = vmatprep.subr.mxu0 0.0
        %1667 = vmatpush1.msra.mxu0 0.0
        %1668 = vmatprep.mubr.f32.mxu0 0.0
        %1669 = vmatmul.mubr.f32.gmra.mrb[0].mxu0 %v1460
        %v1670 = vpop.f32.mrb[0].mxu0
        %v1671 = vadd.f32 %v1438, %v1670
        %v1672 = vpop.f32.mrb[0].mxu0
        %v1673 = vadd.f32 %v1442, %v1672
        %1674 = vdwg.mxu0
        %1675 = vmatprep.subr.mxu0 %v1392
        %1676 = vmatpush1.msra.mxu0 %v1391
        %1677 = vmatprep.subr.mxu0 %v1400
        %1678 = vmatpush1.msra.mxu0 %v1399
        %1679 = vmatprep.subr.mxu0 %v1408
        %1680 = vmatpush1.msra.mxu0 %v1407
        %1681 = vmatprep.subr.mxu0 %v1416
        %1682 = vmatpush1.msra.mxu0 %v1415
        %1683 = vmatprep.subr.mxu0 0.0
        %1684 = vmatpush1.msra.mxu0 0.0
        %1685 = vmatprep.subr.mxu0 0.0
        %1686 = vmatpush1.msra.mxu0 0.0
        %1687 = vmatprep.subr.mxu0 0.0
        %1688 = vmatpush1.msra.mxu0 0.0
        %1689 = vmatprep.subr.mxu0 0.0
        %1690 = vmatpush1.msra.mxu0 0.0
        %1691 = vmatprep.subr.mxu0 0.0
        %1692 = vmatpush1.msra.mxu0 0.0
        %1693 = vmatprep.subr.mxu0 0.0
        %1694 = vmatpush1.msra.mxu0 0.0
        %1695 = vmatprep.subr.mxu0 0.0
        %1696 = vmatpush1.msra.mxu0 0.0
        %1697 = vmatprep.subr.mxu0 0.0
        %1698 = vmatpush1.msra.mxu0 0.0
        %1699 = vmatprep.subr.mxu0 0.0
        %1700 = vmatpush1.msra.mxu0 0.0
        %1701 = vmatprep.subr.mxu0 0.0
        %1702 = vmatpush1.msra.mxu0 0.0
        %1703 = vmatprep.subr.mxu0 0.0
        %1704 = vmatpush1.msra.mxu0 0.0
        %1705 = vmatprep.subr.mxu0 0.0
        %1706 = vmatpush1.msra.mxu0 0.0
        %1707 = vmatprep.subr.mxu0 0.0
        %1708 = vmatpush1.msra.mxu0 0.0
        %1709 = vmatprep.subr.mxu0 0.0
        %1710 = vmatpush1.msra.mxu0 0.0
        %1711 = vmatprep.subr.mxu0 0.0
        %1712 = vmatpush1.msra.mxu0 0.0
        %1713 = vmatprep.subr.mxu0 0.0
        %1714 = vmatpush1.msra.mxu0 0.0
        %1715 = vmatprep.subr.mxu0 0.0
        %1716 = vmatpush1.msra.mxu0 0.0
        %1717 = vmatprep.subr.mxu0 0.0
        %1718 = vmatpush1.msra.mxu0 0.0
        %1719 = vmatprep.subr.mxu0 0.0
        %1720 = vmatpush1.msra.mxu0 0.0
        %1721 = vmatprep.subr.mxu0 0.0
        %1722 = vmatpush1.msra.mxu0 0.0
        %1723 = vmatprep.subr.mxu0 0.0
        %1724 = vmatpush1.msra.mxu0 0.0
        %1725 = vmatprep.subr.mxu0 0.0
        %1726 = vmatpush1.msra.mxu0 0.0
        %1727 = vmatprep.subr.mxu0 0.0
        %1728 = vmatpush1.msra.mxu0 0.0
        %1729 = vmatprep.subr.mxu0 0.0
        %1730 = vmatpush1.msra.mxu0 0.0
        %1731 = vmatprep.subr.mxu0 0.0
        %1732 = vmatpush1.msra.mxu0 0.0
        %1733 = vmatprep.subr.mxu0 0.0
        %1734 = vmatpush1.msra.mxu0 0.0
        %1735 = vmatprep.subr.mxu0 0.0
        %1736 = vmatpush1.msra.mxu0 0.0
        %1737 = vmatprep.subr.mxu0 0.0
        %1738 = vmatpush1.msra.mxu0 0.0
        %1739 = vmatprep.mubr.f32.mxu0 0.0
        %1740 = vmatmul.mubr.f32.gmra.mrb[0].mxu0 %v1460
        %v1741 = vpop.f32.mrb[0].mxu0
        %v1742 = vadd.f32 %v1446, %v1741
        %v1743 = vpop.f32.mrb[0].mxu0
        %v1744 = vadd.f32 %v1450, %v1743
        %1745 = vdwg.mxu0
        %v1746 = vmax.f32 %v1529, 0.0
        %v1747 = vmax.f32 %v1531, 0.0
        %v1748 = vmax.f32 %v1600, 0.0
        %v1749 = vmax.f32 %v1602, 0.0
        %v1750 = vmax.f32 %v1671, 0.0
        %v1751 = vmax.f32 %v1673, 0.0
        %v1752 = vmax.f32 %v1742, 0.0
        %v1753 = vmax.f32 %v1744, 0.0
        %v1754 = vld [vmem:[%s11] sm:$0xff]
        %v1755 = vld [vmem:[%s11 + $0x8] sm:$0xff]
        %v1756 = vld [vmem:[%s11 + $0x10] sm:$0xff]
        %v1757 = vld [vmem:[%s11 + $0x18] sm:$0xff]
        %v1758 = vld [vmem:[%s11 + $0x20] sm:$0xff]
        %v1759 = vld [vmem:[%s11 + $0x28] sm:$0xff]
        %v1760 = vld [vmem:[%s11 + $0x30] sm:$0xff]
        %v1761 = vld [vmem:[%s11 + $0x38] sm:$0xff]
        %v1762 = vld [vmem:[%s11 + $0x40] sm:$0xff]
        %v1763 = vld [vmem:[%s11 + $0x48] sm:$0xff]
        %v1764 = vld [vmem:[%s11 + $0x50] sm:$0xff]
        %v1765 = vld [vmem:[%s11 + $0x58] sm:$0xff]
        %v1766 = vld [vmem:[%s11 + $0x60] sm:$0xff]
        %v1767 = vld [vmem:[%s11 + $0x68] sm:$0xff]
        %v1768 = vld [vmem:[%s11 + $0x70] sm:$0xff]
        %v1769 = vld [vmem:[%s11 + $0x78] sm:$0xff]
        %v1770 = vld [vmem:[%s11 + $0x80] sm:$0xff]
        %v1771 = vld [vmem:[%s11 + $0x88] sm:$0xff]
        %v1772 = vld [vmem:[%s11 + $0x90] sm:$0xff]
        %v1773 = vld [vmem:[%s11 + $0x98] sm:$0xff]
        %v1774 = vld [vmem:[%s11 + $0xa0] sm:$0xff]
        %v1775 = vld [vmem:[%s11 + $0xa8] sm:$0xff]
        %v1776 = vld [vmem:[%s11 + $0xb0] sm:$0xff]
        %v1777 = vld [vmem:[%s11 + $0xb8] sm:$0xff]
        %v1778 = vld [vmem:[%s11 + $0xc0] sm:$0xff]
        %v1779 = vld [vmem:[%s11 + $0xc8] sm:$0xff]
        %v1780 = vld [vmem:[%s11 + $0xd0] sm:$0xff]
        %v1781 = vld [vmem:[%s11 + $0xd8] sm:$0xff]
        %v1782 = vld [vmem:[%s11 + $0xe0] sm:$0xff]
        %v1783 = vld [vmem:[%s11 + $0xe8] sm:$0xff]
        %v1784 = vld [vmem:[%s11 + $0xf0] sm:$0xff]
        %v1785 = vld [vmem:[%s11 + $0xf8] sm:$0xff]
        %v1786 = vld [vmem:[%s11 + $0x100] sm:$0xff]
        %v1787 = vld [vmem:[%s11 + $0x108] sm:$0xff]
        %v1788 = vld [vmem:[%s11 + $0x110] sm:$0xff]
        %v1789 = vld [vmem:[%s11 + $0x118] sm:$0xff]
        %v1790 = vld [vmem:[%s11 + $0x120] sm:$0xff]
        %v1791 = vld [vmem:[%s11 + $0x128] sm:$0xff]
        %v1792 = vld [vmem:[%s11 + $0x130] sm:$0xff]
        %v1793 = vld [vmem:[%s11 + $0x138] sm:$0xff]
        %v1794 = vld [vmem:[%s11 + $0x140] sm:$0xff]
        %v1795 = vld [vmem:[%s11 + $0x148] sm:$0xff]
        %v1796 = vld [vmem:[%s11 + $0x150] sm:$0xff]
        %v1797 = vld [vmem:[%s11 + $0x158] sm:$0xff]
        %v1798 = vld [vmem:[%s11 + $0x160] sm:$0xff]
        %v1799 = vld [vmem:[%s11 + $0x168] sm:$0xff]
        %v1800 = vld [vmem:[%s11 + $0x170] sm:$0xff]
        %v1801 = vld [vmem:[%s11 + $0x178] sm:$0xff]
        %v1802 = vld [vmem:[%s11 + $0x180] sm:$0xff]
        %v1803 = vld [vmem:[%s11 + $0x188] sm:$0xff]
        %v1804 = vld [vmem:[%s11 + $0x190] sm:$0xff]
        %v1805 = vld [vmem:[%s11 + $0x198] sm:$0xff]
        %v1806 = vld [vmem:[%s11 + $0x1a0] sm:$0xff]
        %v1807 = vld [vmem:[%s11 + $0x1a8] sm:$0xff]
        %v1808 = vld [vmem:[%s11 + $0x1b0] sm:$0xff]
        %v1809 = vld [vmem:[%s11 + $0x1b8] sm:$0xff]
        %v1810 = vld [vmem:[%s11 + $0x1c0] sm:$0xff]
        %v1811 = vld [vmem:[%s11 + $0x1c8] sm:$0xff]
        %v1812 = vld [vmem:[%s11 + $0x1d0] sm:$0xff]
        %v1813 = vld [vmem:[%s11 + $0x1d8] sm:$0xff]
        %v1814 = vld [vmem:[%s11 + $0x1e0] sm:$0xff]
        %v1815 = vld [vmem:[%s11 + $0x1e8] sm:$0xff]
        %v1816 = vld [vmem:[%s11 + $0x1f0] sm:$0xff]
        %v1817 = vld [vmem:[%s11 + $0x1f8] sm:$0xff]
        %v1818 = vld [vmem:[%s11 + $0x200] sm:$0xff]
        %v1819 = vld [vmem:[%s11 + $0x208] sm:$0xff]
        %v1820 = vld [vmem:[%s11 + $0x210] sm:$0xff]
        %v1821 = vld [vmem:[%s11 + $0x218] sm:$0xff]
        %v1822 = vld [vmem:[%s11 + $0x220] sm:$0xff]
        %v1823 = vld [vmem:[%s11 + $0x228] sm:$0xff]
        %v1824 = vld [vmem:[%s11 + $0x230] sm:$0xff]
        %v1825 = vld [vmem:[%s11 + $0x238] sm:$0xff]
        %v1826 = vld [vmem:[%s11 + $0x240] sm:$0xff]
        %v1827 = vld [vmem:[%s11 + $0x248] sm:$0xff]
        %v1828 = vld [vmem:[%s11 + $0x250] sm:$0xff]
        %v1829 = vld [vmem:[%s11 + $0x258] sm:$0xff]
        %v1830 = vld [vmem:[%s11 + $0x260] sm:$0xff]
        %v1831 = vld [vmem:[%s11 + $0x268] sm:$0xff]
        %v1832 = vld [vmem:[%s11 + $0x270] sm:$0xff]
        %v1833 = vld [vmem:[%s11 + $0x278] sm:$0xff]
        %v1834 = vld [vmem:[%s11 + $0x280] sm:$0xff]
        %v1835 = vld [vmem:[%s11 + $0x288] sm:$0xff]
        %v1836 = vld [vmem:[%s11 + $0x290] sm:$0xff]
        %v1837 = vld [vmem:[%s11 + $0x298] sm:$0xff]
        %v1838 = vld [vmem:[%s11 + $0x2a0] sm:$0xff]
        %v1839 = vld [vmem:[%s11 + $0x2a8] sm:$0xff]
        %v1840 = vld [vmem:[%s11 + $0x2b0] sm:$0xff]
        %v1841 = vld [vmem:[%s11 + $0x2b8] sm:$0xff]
        %v1842 = vld [vmem:[%s11 + $0x2c0] sm:$0xff]
        %v1843 = vld [vmem:[%s11 + $0x2c8] sm:$0xff]
        %v1844 = vld [vmem:[%s11 + $0x2d0] sm:$0xff]
        %v1845 = vld [vmem:[%s11 + $0x2d8] sm:$0xff]
        %v1846 = vld [vmem:[%s11 + $0x2e0] sm:$0xff]
        %v1847 = vld [vmem:[%s11 + $0x2e8] sm:$0xff]
        %v1848 = vld [vmem:[%s11 + $0x2f0] sm:$0xff]
        %v1849 = vld [vmem:[%s11 + $0x2f8] sm:$0xff]
        %v1850 = vld [vmem:[%s11 + $0x300] sm:$0xff]
        %v1851 = vld [vmem:[%s11 + $0x308] sm:$0xff]
        %v1852 = vld [vmem:[%s11 + $0x310] sm:$0xff]
        %v1853 = vld [vmem:[%s11 + $0x318] sm:$0xff]
        %v1854 = vld [vmem:[%s11 + $0x320] sm:$0xff]
        %v1855 = vld [vmem:[%s11 + $0x328] sm:$0xff]
        %v1856 = vld [vmem:[%s11 + $0x330] sm:$0xff]
        %v1857 = vld [vmem:[%s11 + $0x338] sm:$0xff]
        %v1858 = vld [vmem:[%s11 + $0x340] sm:$0xff]
        %v1859 = vld [vmem:[%s11 + $0x348] sm:$0xff]
        %v1860 = vld [vmem:[%s11 + $0x350] sm:$0xff]
        %v1861 = vld [vmem:[%s11 + $0x358] sm:$0xff]
        %v1862 = vld [vmem:[%s11 + $0x360] sm:$0xff]
        %v1863 = vld [vmem:[%s11 + $0x368] sm:$0xff]
        %v1864 = vld [vmem:[%s11 + $0x370] sm:$0xff]
        %v1865 = vld [vmem:[%s11 + $0x378] sm:$0xff]
        %v1866 = vld [vmem:[%s11 + $0x380] sm:$0xff]
        %v1867 = vld [vmem:[%s11 + $0x388] sm:$0xff]
        %v1868 = vld [vmem:[%s11 + $0x390] sm:$0xff]
        %v1869 = vld [vmem:[%s11 + $0x398] sm:$0xff]
        %v1870 = vld [vmem:[%s11 + $0x3a0] sm:$0xff]
        %v1871 = vld [vmem:[%s11 + $0x3a8] sm:$0xff]
        %v1872 = vld [vmem:[%s11 + $0x3b0] sm:$0xff]
        %v1873 = vld [vmem:[%s11 + $0x3b8] sm:$0xff]
        %v1874 = vld [vmem:[%s11 + $0x3c0] sm:$0xff]
        %v1875 = vld [vmem:[%s11 + $0x3c8] sm:$0xff]
        %v1876 = vld [vmem:[%s11 + $0x3d0] sm:$0xff]
        %v1877 = vld [vmem:[%s11 + $0x3d8] sm:$0xff]
        %v1878 = vld [vmem:[%s11 + $0x3e0] sm:$0xff]
        %v1879 = vld [vmem:[%s11 + $0x3e8] sm:$0xff]
        %v1880 = vld [vmem:[%s11 + $0x3f0] sm:$0xff]
        %v1881 = vld [vmem:[%s11 + $0x3f8] sm:$0xff]
        %1882 = vmatprep.subr.mxu0 0.0
        %1883 = vmatpush1.msra.mxu0 %v1754
        %1884 = vmatprep.subr.mxu0 0.0
        %1885 = vmatpush1.msra.mxu0 %v1755
        %1886 = vmatprep.subr.mxu0 0.0
        %1887 = vmatpush1.msra.mxu0 %v1756
        %1888 = vmatprep.subr.mxu0 0.0
        %1889 = vmatpush1.msra.mxu0 %v1757
        %1890 = vmatprep.subr.mxu0 0.0
        %1891 = vmatpush1.msra.mxu0 %v1758
        %1892 = vmatprep.subr.mxu0 0.0
        %1893 = vmatpush1.msra.mxu0 %v1759
        %1894 = vmatprep.subr.mxu0 0.0
        %1895 = vmatpush1.msra.mxu0 %v1760
        %1896 = vmatprep.subr.mxu0 0.0
        %1897 = vmatpush1.msra.mxu0 %v1761
        %1898 = vmatprep.subr.mxu0 0.0
        %1899 = vmatpush1.msra.mxu0 %v1762
        %1900 = vmatprep.subr.mxu0 0.0
        %1901 = vmatpush1.msra.mxu0 %v1763
        %1902 = vmatprep.subr.mxu0 0.0
        %1903 = vmatpush1.msra.mxu0 %v1764
        %1904 = vmatprep.subr.mxu0 0.0
        %1905 = vmatpush1.msra.mxu0 %v1765
        %1906 = vmatprep.subr.mxu0 0.0
        %1907 = vmatpush1.msra.mxu0 %v1766
        %1908 = vmatprep.subr.mxu0 0.0
        %1909 = vmatpush1.msra.mxu0 %v1767
        %1910 = vmatprep.subr.mxu0 0.0
        %1911 = vmatpush1.msra.mxu0 %v1768
        %1912 = vmatprep.subr.mxu0 0.0
        %1913 = vmatpush1.msra.mxu0 %v1769
        %1914 = vmatprep.subr.mxu0 0.0
        %1915 = vmatpush1.msra.mxu0 %v1770
        %1916 = vmatprep.subr.mxu0 0.0
        %1917 = vmatpush1.msra.mxu0 %v1771
        %1918 = vmatprep.subr.mxu0 0.0
        %1919 = vmatpush1.msra.mxu0 %v1772
        %1920 = vmatprep.subr.mxu0 0.0
        %1921 = vmatpush1.msra.mxu0 %v1773
        %1922 = vmatprep.subr.mxu0 0.0
        %1923 = vmatpush1.msra.mxu0 %v1774
        %1924 = vmatprep.subr.mxu0 0.0
        %1925 = vmatpush1.msra.mxu0 %v1775
        %1926 = vmatprep.subr.mxu0 0.0
        %1927 = vmatpush1.msra.mxu0 %v1776
        %1928 = vmatprep.subr.mxu0 0.0
        %1929 = vmatpush1.msra.mxu0 %v1777
        %1930 = vmatprep.subr.mxu0 0.0
        %1931 = vmatpush1.msra.mxu0 %v1778
        %1932 = vmatprep.subr.mxu0 0.0
        %1933 = vmatpush1.msra.mxu0 %v1779
        %1934 = vmatprep.subr.mxu0 0.0
        %1935 = vmatpush1.msra.mxu0 %v1780
        %1936 = vmatprep.subr.mxu0 0.0
        %1937 = vmatpush1.msra.mxu0 %v1781
        %1938 = vmatprep.subr.mxu0 0.0
        %1939 = vmatpush1.msra.mxu0 %v1782
        %1940 = vmatprep.subr.mxu0 0.0
        %1941 = vmatpush1.msra.mxu0 %v1783
        %1942 = vmatprep.subr.mxu0 0.0
        %1943 = vmatpush1.msra.mxu0 %v1784
        %1944 = vmatprep.subr.mxu0 0.0
        %1945 = vmatpush1.msra.mxu0 %v1785
        %1946 = vmatprep.mubr.f32.mxu0 %v1747
        %1947 = vmatmul.mubr.f32.gmra.mrb[0].mxu0 %v1746
        %v1948 = vpop.f32.mrb[0].mxu0
        %v1949 = vadd.f32 0.0, %v1948
        %v1950 = vpop.f32.mrb[0].mxu0
        %1951 = vdwg.mxu0
        %1952 = vmatprep.subr.mxu0 0.0
        %1953 = vmatpush1.msra.mxu0 %v1786
        %1954 = vmatprep.subr.mxu0 0.0
        %1955 = vmatpush1.msra.mxu0 %v1787
        %1956 = vmatprep.subr.mxu0 0.0
        %1957 = vmatpush1.msra.mxu0 %v1788
        %1958 = vmatprep.subr.mxu0 0.0
        %1959 = vmatpush1.msra.mxu0 %v1789
        %1960 = vmatprep.subr.mxu0 0.0
        %1961 = vmatpush1.msra.mxu0 %v1790
        %1962 = vmatprep.subr.mxu0 0.0
        %1963 = vmatpush1.msra.mxu0 %v1791
        %1964 = vmatprep.subr.mxu0 0.0
        %1965 = vmatpush1.msra.mxu0 %v1792
        %1966 = vmatprep.subr.mxu0 0.0
        %1967 = vmatpush1.msra.mxu0 %v1793
        %1968 = vmatprep.subr.mxu0 0.0
        %1969 = vmatpush1.msra.mxu0 %v1794
        %1970 = vmatprep.subr.mxu0 0.0
        %1971 = vmatpush1.msra.mxu0 %v1795
        %1972 = vmatprep.subr.mxu0 0.0
        %1973 = vmatpush1.msra.mxu0 %v1796
        %1974 = vmatprep.subr.mxu0 0.0
        %1975 = vmatpush1.msra.mxu0 %v1797
        %1976 = vmatprep.subr.mxu0 0.0
        %1977 = vmatpush1.msra.mxu0 %v1798
        %1978 = vmatprep.subr.mxu0 0.0
        %1979 = vmatpush1.msra.mxu0 %v1799
        %1980 = vmatprep.subr.mxu0 0.0
        %1981 = vmatpush1.msra.mxu0 %v1800
        %1982 = vmatprep.subr.mxu0 0.0
        %1983 = vmatpush1.msra.mxu0 %v1801
        %1984 = vmatprep.subr.mxu0 0.0
        %1985 = vmatpush1.msra.mxu0 %v1802
        %1986 = vmatprep.subr.mxu0 0.0
        %1987 = vmatpush1.msra.mxu0 %v1803
        %1988 = vmatprep.subr.mxu0 0.0
        %1989 = vmatpush1.msra.mxu0 %v1804
        %1990 = vmatprep.subr.mxu0 0.0
        %1991 = vmatpush1.msra.mxu0 %v1805
        %1992 = vmatprep.subr.mxu0 0.0
        %1993 = vmatpush1.msra.mxu0 %v1806
        %1994 = vmatprep.subr.mxu0 0.0
        %1995 = vmatpush1.msra.mxu0 %v1807
        %1996 = vmatprep.subr.mxu0 0.0
        %1997 = vmatpush1.msra.mxu0 %v1808
        %1998 = vmatprep.subr.mxu0 0.0
        %1999 = vmatpush1.msra.mxu0 %v1809
        %2000 = vmatprep.subr.mxu0 0.0
        %2001 = vmatpush1.msra.mxu0 %v1810
        %2002 = vmatprep.subr.mxu0 0.0
        %2003 = vmatpush1.msra.mxu0 %v1811
        %2004 = vmatprep.subr.mxu0 0.0
        %2005 = vmatpush1.msra.mxu0 %v1812
        %2006 = vmatprep.subr.mxu0 0.0
        %2007 = vmatpush1.msra.mxu0 %v1813
        %2008 = vmatprep.subr.mxu0 0.0
        %2009 = vmatpush1.msra.mxu0 %v1814
        %2010 = vmatprep.subr.mxu0 0.0
        %2011 = vmatpush1.msra.mxu0 %v1815
        %2012 = vmatprep.subr.mxu0 0.0
        %2013 = vmatpush1.msra.mxu0 %v1816
        %2014 = vmatprep.subr.mxu0 0.0
        %2015 = vmatpush1.msra.mxu0 %v1817
        %2016 = vmatprep.mubr.f32.mxu0 %v1749
        %2017 = vmatmul.mubr.f32.gmra.mrb[0].mxu0 %v1748
        %v2018 = vpop.f32.mrb[0].mxu0
        %v2019 = vadd.f32 %v1949, %v2018
        %v2020 = vpop.f32.mrb[0].mxu0
        %2021 = vdwg.mxu0
        %2022 = vmatprep.subr.mxu0 0.0
        %2023 = vmatpush1.msra.mxu0 %v1818
        %2024 = vmatprep.subr.mxu0 0.0
        %2025 = vmatpush1.msra.mxu0 %v1819
        %2026 = vmatprep.subr.mxu0 0.0
        %2027 = vmatpush1.msra.mxu0 %v1820
        %2028 = vmatprep.subr.mxu0 0.0
        %2029 = vmatpush1.msra.mxu0 %v1821
        %2030 = vmatprep.subr.mxu0 0.0
        %2031 = vmatpush1.msra.mxu0 %v1822
        %2032 = vmatprep.subr.mxu0 0.0
        %2033 = vmatpush1.msra.mxu0 %v1823
        %2034 = vmatprep.subr.mxu0 0.0
        %2035 = vmatpush1.msra.mxu0 %v1824
        %2036 = vmatprep.subr.mxu0 0.0
        %2037 = vmatpush1.msra.mxu0 %v1825
        %2038 = vmatprep.subr.mxu0 0.0
        %2039 = vmatpush1.msra.mxu0 %v1826
        %2040 = vmatprep.subr.mxu0 0.0
        %2041 = vmatpush1.msra.mxu0 %v1827
        %2042 = vmatprep.subr.mxu0 0.0
        %2043 = vmatpush1.msra.mxu0 %v1828
        %2044 = vmatprep.subr.mxu0 0.0
        %2045 = vmatpush1.msra.mxu0 %v1829
        %2046 = vmatprep.subr.mxu0 0.0
        %2047 = vmatpush1.msra.mxu0 %v1830
        %2048 = vmatprep.subr.mxu0 0.0
        %2049 = vmatpush1.msra.mxu0 %v1831
        %2050 = vmatprep.subr.mxu0 0.0
        %2051 = vmatpush1.msra.mxu0 %v1832
        %2052 = vmatprep.subr.mxu0 0.0
        %2053 = vmatpush1.msra.mxu0 %v1833
        %2054 = vmatprep.subr.mxu0 0.0
        %2055 = vmatpush1.msra.mxu0 %v1834
        %2056 = vmatprep.subr.mxu0 0.0
        %2057 = vmatpush1.msra.mxu0 %v1835
        %2058 = vmatprep.subr.mxu0 0.0
        %2059 = vmatpush1.msra.mxu0 %v1836
        %2060 = vmatprep.subr.mxu0 0.0
        %2061 = vmatpush1.msra.mxu0 %v1837
        %2062 = vmatprep.subr.mxu0 0.0
        %2063 = vmatpush1.msra.mxu0 %v1838
        %2064 = vmatprep.subr.mxu0 0.0
        %2065 = vmatpush1.msra.mxu0 %v1839
        %2066 = vmatprep.subr.mxu0 0.0
        %2067 = vmatpush1.msra.mxu0 %v1840
        %2068 = vmatprep.subr.mxu0 0.0
        %2069 = vmatpush1.msra.mxu0 %v1841
        %2070 = vmatprep.subr.mxu0 0.0
        %2071 = vmatpush1.msra.mxu0 %v1842
        %2072 = vmatprep.subr.mxu0 0.0
        %2073 = vmatpush1.msra.mxu0 %v1843
        %2074 = vmatprep.subr.mxu0 0.0
        %2075 = vmatpush1.msra.mxu0 %v1844
        %2076 = vmatprep.subr.mxu0 0.0
        %2077 = vmatpush1.msra.mxu0 %v1845
        %2078 = vmatprep.subr.mxu0 0.0
        %2079 = vmatpush1.msra.mxu0 %v1846
        %2080 = vmatprep.subr.mxu0 0.0
        %2081 = vmatpush1.msra.mxu0 %v1847
        %2082 = vmatprep.subr.mxu0 0.0
        %2083 = vmatpush1.msra.mxu0 %v1848
        %2084 = vmatprep.subr.mxu0 0.0
        %2085 = vmatpush1.msra.mxu0 %v1849
        %2086 = vmatprep.mubr.f32.mxu0 %v1751
        %2087 = vmatmul.mubr.f32.gmra.mrb[0].mxu0 %v1750
        %v2088 = vpop.f32.mrb[0].mxu0
        %v2089 = vadd.f32 %v2019, %v2088
        %v2090 = vpop.f32.mrb[0].mxu0
        %2091 = vdwg.mxu0
        %2092 = vmatprep.subr.mxu0 0.0
        %2093 = vmatpush1.msra.mxu0 %v1850
        %2094 = vmatprep.subr.mxu0 0.0
        %2095 = vmatpush1.msra.mxu0 %v1851
        %2096 = vmatprep.subr.mxu0 0.0
        %2097 = vmatpush1.msra.mxu0 %v1852
        %2098 = vmatprep.subr.mxu0 0.0
        %2099 = vmatpush1.msra.mxu0 %v1853
        %2100 = vmatprep.subr.mxu0 0.0
        %2101 = vmatpush1.msra.mxu0 %v1854
        %2102 = vmatprep.subr.mxu0 0.0
        %2103 = vmatpush1.msra.mxu0 %v1855
        %2104 = vmatprep.subr.mxu0 0.0
        %2105 = vmatpush1.msra.mxu0 %v1856
        %2106 = vmatprep.subr.mxu0 0.0
        %2107 = vmatpush1.msra.mxu0 %v1857
        %2108 = vmatprep.subr.mxu0 0.0
        %2109 = vmatpush1.msra.mxu0 %v1858
        %2110 = vmatprep.subr.mxu0 0.0
        %2111 = vmatpush1.msra.mxu0 %v1859
        %2112 = vmatprep.subr.mxu0 0.0
        %2113 = vmatpush1.msra.mxu0 %v1860
        %2114 = vmatprep.subr.mxu0 0.0
        %2115 = vmatpush1.msra.mxu0 %v1861
        %2116 = vmatprep.subr.mxu0 0.0
        %2117 = vmatpush1.msra.mxu0 %v1862
        %2118 = vmatprep.subr.mxu0 0.0
        %2119 = vmatpush1.msra.mxu0 %v1863
        %2120 = vmatprep.subr.mxu0 0.0
        %2121 = vmatpush1.msra.mxu0 %v1864
        %2122 = vmatprep.subr.mxu0 0.0
        %2123 = vmatpush1.msra.mxu0 %v1865
        %2124 = vmatprep.subr.mxu0 0.0
        %2125 = vmatpush1.msra.mxu0 %v1866
        %2126 = vmatprep.subr.mxu0 0.0
        %2127 = vmatpush1.msra.mxu0 %v1867
        %2128 = vmatprep.subr.mxu0 0.0
        %2129 = vmatpush1.msra.mxu0 %v1868
        %2130 = vmatprep.subr.mxu0 0.0
        %2131 = vmatpush1.msra.mxu0 %v1869
        %2132 = vmatprep.subr.mxu0 0.0
        %2133 = vmatpush1.msra.mxu0 %v1870
        %2134 = vmatprep.subr.mxu0 0.0
        %2135 = vmatpush1.msra.mxu0 %v1871
        %2136 = vmatprep.subr.mxu0 0.0
        %2137 = vmatpush1.msra.mxu0 %v1872
        %2138 = vmatprep.subr.mxu0 0.0
        %2139 = vmatpush1.msra.mxu0 %v1873
        %2140 = vmatprep.subr.mxu0 0.0
        %2141 = vmatpush1.msra.mxu0 %v1874
        %2142 = vmatprep.subr.mxu0 0.0
        %2143 = vmatpush1.msra.mxu0 %v1875
        %2144 = vmatprep.subr.mxu0 0.0
        %2145 = vmatpush1.msra.mxu0 %v1876
        %2146 = vmatprep.subr.mxu0 0.0
        %2147 = vmatpush1.msra.mxu0 %v1877
        %2148 = vmatprep.subr.mxu0 0.0
        %2149 = vmatpush1.msra.mxu0 %v1878
        %2150 = vmatprep.subr.mxu0 0.0
        %2151 = vmatpush1.msra.mxu0 %v1879
        %2152 = vmatprep.subr.mxu0 0.0
        %2153 = vmatpush1.msra.mxu0 %v1880
        %2154 = vmatprep.subr.mxu0 0.0
        %2155 = vmatpush1.msra.mxu0 %v1881
        %2156 = vmatprep.mubr.f32.mxu0 %v1753
        %2157 = vmatmul.mubr.f32.gmra.mrb[0].mxu0 %v1752
        %v2158 = vpop.f32.mrb[0].mxu0
        %v2159 = vadd.f32 %v2089, %v2158
        %v2160 = vpop.f32.mrb[0].mxu0
        %2161 = vdwg.mxu0
        %v2162 = vadd.f32 %v1348, %v2159
        %v2163 = vld [vmem:[%s12] sm:$0x1]
        %v2165 = vlaneseq
        %v2166 = vshrl.u32 %v2165, 7
        %v2167 = vsub.s32 0, %v2166
        %v2168 = vrot.slane %v2163, %v2167
        %v2170 = vadd.f32 %v2162, %v2168
        %2171 = vst.msk [vmem:[%s431] sm:$0xff] %vm439, %v2170
        %s2172 = sand.u32 %s313, 1
        %s2173 = scalar_lea.sflag [#allocation3], %s2172
        %s2174 = sand.u32 %s313, 1
        %s2175 = smul.addr %s2174, 8
        %s2176 = scalar_lea.vmem [#allocation2], %s2175
        // Predicated region
        $region73: #{tpu_custom_call.1} parent=71 // pred_check
          %p2177 = pneg %p323
        $region74: #{tpu_custom_call.1} parent=71 // pred_check_branch
          %2179 = sbr.rel (%p2177) target = $region76
        $region75: #{tpu_custom_call.1} parent=71 // pred_region
          %s2181 = ssub.s32 128, 128
          %2182 = vsyncadd %s2173, %s2181
          %s2183 = smul.addr %s27, 128
          %s2184 = scalar_lea.hbm %s13, %s2183
          %s2186 = sshll.u32 %s2176, 4
          %s2187 = int_to_ptr.vmem [resolvable:$true] %s2186
          %2189 = dma.vmem_to_hbm [thread:$0]  %s2187, 128, %s2184, %s2173
        $region76: #{tpu_custom_call.1} parent=71 // pred_fallthru
          _
      $region72: #{tpu_custom_call.1} parent=5 // pred_fallthru
        _
      %p2190 = scmp.le.s32.totalorder 2, %s22
      // Predicated region
      $region77: #{tpu_custom_call.1} parent=5 // pred_check
        %p2191 = pneg %p2190
      $region78: #{tpu_custom_call.1} parent=5 // pred_check_branch
        %2193 = sbr.rel (%p2191) target = $region80
      $region79: #{tpu_custom_call.1} parent=5 // pred_region
        %s2194 = ssub.s32 %s22, 2
        // Predicated region
        $region81: #{tpu_custom_call.1} parent=79 // pred_check
          %p2195 = pneg %p329
        $region82: #{tpu_custom_call.1} parent=79 // pred_check_branch
          %2197 = sbr.rel (%p2195) target = $region84
        $region83: #{tpu_custom_call.1} parent=79 // pred_region
          %s2198 = sand.u32 %s314, 1
          %s2199 = scalar_lea.sflag [#allocation3], %s2198
          %s2200 = sand.u32 %s314, 1
          %s2201 = smul.addr %s2200, 8
          %s2202 = scalar_lea.vmem [#allocation2], %s2201
          %2203 = dma.done %s2199, 128
        $region84: #{tpu_custom_call.1} parent=79 // pred_fallthru
          _
      $region80: #{tpu_custom_call.1} parent=5 // pred_fallthru
        _
    $region6: #{tpu_custom_call.1} parent=1 // loop_footer
      %s26 = sadd.s32 1, %s22
    $region7: #{tpu_custom_call.1} parent=1 // loop_footer_branch
      %21 = sbr.rel target = $region3
    $region8: #{tpu_custom_call.1} parent=1 // loop_exit
      _
    %2204 = vsyncpa [#allocation3], 1
    %s2205 = scalar_lea.sflag [#allocation3], 1
    %2206 = vsyncpa %s2205, 1

// kernel: tpu_custom_call.1
$region0: #{tpu_custom_call.1}
  #allocation0 [shape = 'u32[]', space=smem, size = 0x4, offset = 0x4, fixed_abs, tag = 'smem constant byte address 0x4 - core index']
  #allocation1 [shape = 'u32[144,128]{1,0:T(1,128)}', space=vmem, size = 0x12000, scoped, tag = 'internal scratch']
  %s0 = inlined_call_operand.vmem [shape: f32[2,8,32], index: 0, kind: input, shape index: {}]
  %s1 = inlined_call_operand.vmem [shape: f32[1,32], index: 1, kind: input, shape index: {}]
  %s2 = inlined_call_operand.vmem [shape: f32[1,32], index: 2, kind: input, shape index: {}]
  %s3 = inlined_call_operand.vmem [shape: f32[32,96], index: 3, kind: input, shape index: {}]
  %s4 = inlined_call_operand.vmem [shape: f32[1,96], index: 4, kind: input, shape index: {}]
  %s5 = inlined_call_operand.vmem [shape: f32[32,32], index: 5, kind: input, shape index: {}]
  %s6 = inlined_call_operand.vmem [shape: f32[1,32], index: 6, kind: input, shape index: {}]
  %s7 = inlined_call_operand.vmem [shape: f32[1,32], index: 7, kind: input, shape index: {}]
  %s8 = inlined_call_operand.vmem [shape: f32[1,32], index: 8, kind: input, shape index: {}]
  %s9 = inlined_call_operand.vmem [shape: f32[32,1024], index: 9, kind: input, shape index: {}]
  %s10 = inlined_call_operand.vmem [shape: f32[1,1024], index: 10, kind: input, shape index: {}]
  %s11 = inlined_call_operand.vmem [shape: f32[1024,32], index: 11, kind: input, shape index: {}]
  %s12 = inlined_call_operand.vmem [shape: f32[1,32], index: 12, kind: input, shape index: {}]
  %s13 = inlined_call_operand.hbm [shape: f32[2,8,32], index: 13, kind: output, shape index: {}]
  %s14 = sld [smem:[#allocation0]]
  $region85: #{tpu_custom_call.1} parent=0
    _
  %s16 = ssub.s32 1, %s14
  %s17 = scalar_select 0, %s16, %s14
  $region1: #{tpu_custom_call.1} parent=0
    #allocation2 [shape = 'u8[8192]{0}', space=vmem, size = 0x2000, scoped, tag = 'output window, operand 0']
    #allocation3 [shape = 's32[2]{0}', space=sflag, size = 0x8, scoped, tag = 'scoped memory for tpu_custom_call.1']
    %18 = vsyncpa [#allocation3], 0
    %s19 = scalar_lea.sflag [#allocation3], 1
    %20 = vsyncpa %s19, 0
    loop: start=0, step=1, limit=4
    $region2: #{tpu_custom_call.1} parent=1 // loop_pre_header
      _
    $region3: #{tpu_custom_call.1} parent=1 // loop_header
      %s22 = sphi 0, %s26
      %p23 = scmp.ge.s32.totalorder %s22, 4
      %s32 = sphi 0, %s34
      %s35 = sphi 0, %s32
      %s36 = sphi 0, %s35
      %s52 = sphi 0, %s36
      %s56 = sphi 0, %s56
      %s58 = sphi 0, %s56
      %s59 = sphi 0, %s58
      %s73 = sphi 0, %s59
      %s77 = sphi 0, %s77
      %s79 = sphi 0, %s77
      %s80 = sphi 0, %s79
      %s94 = sphi 0, %s80
      %s98 = sphi 0, %s98
      %s100 = sphi 0, %s98
      %s101 = sphi 0, %s100
      %s115 = sphi 0, %s101
      %s119 = sphi 0, %s119
      %s121 = sphi 0, %s119
      %s122 = sphi 0, %s121
      %s136 = sphi 0, %s122
      %s140 = sphi 0, %s140
      %s142 = sphi 0, %s140
      %s143 = sphi 0, %s142
      %s157 = sphi 0, %s143
      %s161 = sphi 0, %s161
      %s163 = sphi 0, %s161
      %s164 = sphi 0, %s163
      %s178 = sphi 0, %s164
      %s182 = sphi 0, %s182
      %s184 = sphi 0, %s182
      %s185 = sphi 0, %s184
      %s199 = sphi 0, %s185
      %s203 = sphi 0, %s203
      %s205 = sphi 0, %s203
      %s206 = sphi 0, %s205
      %s220 = sphi 0, %s206
      %s224 = sphi 0, %s224
      %s226 = sphi 0, %s224
      %s227 = sphi 0, %s226
      %s241 = sphi 0, %s227
      %s245 = sphi 0, %s245
      %s247 = sphi 0, %s245
      %s248 = sphi 0, %s247
      %s262 = sphi 0, %s248
      %s266 = sphi 0, %s266
      %s268 = sphi 0, %s266
      %s269 = sphi 0, %s268
      %s283 = sphi 0, %s269
      %s287 = sphi 0, %s287
      %s289 = sphi 0, %s287
      %s290 = sphi 0, %s289
      %s304 = sphi 0, %s290
      %s310 = sphi 0, %s312
      %s313 = sphi 0, %s310
      %s314 = sphi 0, %s313
      %s330 = sphi 0, %s314
    $region4: #{tpu_custom_call.1} parent=1 // loop_header_branch
      %25 = sbr.rel (%p23) target = $region8
    $region5: #{tpu_custom_call.1} parent=1 // loop_body
      %s27 = ssub.s32 %s22, 1
      %s28 = ssub.s32 %s22, 2
      %s29 = sadd.s32 %s22, 1
      %s30 = ssub.s32 %s22, %s29
      %p31 = scmp.eq.s32.totalorder %s30, 0
      %s33 = sadd.s32 %s32, 1
      %s34 = scalar_select %p31, %s32, %s33
      %p37 = pneg %p31
      %p38 = scmp.eq.s32.totalorder %s22, 1
      %p39 = por %p37, %p38
      %p40 = scmp.ne.s32.totalorder %s32, %s35
      %p41 = scmp.eq.s32.totalorder %s22, 0
      %p42 = por %p40, %p41
      %p43 = scmp.ne.s32.totalorder %s32, %s35
      %p44 = scmp.eq.s32.totalorder %s27, 1
      %p45 = por %p43, %p44
      %p46 = scmp.ne.s32.totalorder %s35, %s36
      %p47 = scmp.eq.s32.totalorder %s27, 0
      %p48 = por %p46, %p47
      %p49 = scmp.ne.s32.totalorder %s35, %s36
      %p50 = scmp.eq.s32.totalorder %s28, 1
      %p51 = por %p49, %p50
      %p53 = scmp.ne.s32.totalorder %s36, %s52
      %p54 = scmp.eq.s32.totalorder %s28, 0
      %p55 = por %p53, %p54
      %s57 = sadd.s32 %s56, 1
      %p60 = scmp.eq.s32.totalorder %s22, 1
      %p61 = scmp.ne.s32.totalorder %s56, %s58
      %p62 = scmp.eq.s32.totalorder %s22, 0
      %p63 = por %p61, %p62
      %p64 = scmp.ne.s32.totalorder %s56, %s58
      %p65 = scmp.eq.s32.totalorder %s27, 1
      %p66 = por %p64, %p65
      %p67 = scmp.ne.s32.totalorder %s58, %s59
      %p68 = scmp.eq.s32.totalorder %s27, 0
      %p69 = por %p67, %p68
      %p70 = scmp.ne.s32.totalorder %s58, %s59
      %p71 = scmp.eq.s32.totalorder %s28, 1
      %p72 = por %p70, %p71
      %p74 = scmp.ne.s32.totalorder %s59, %s73
      %p75 = scmp.eq.s32.totalorder %s28, 0
      %p76 = por %p74, %p75
      %s78 = sadd.s32 %s77, 1
      %p81 = scmp.eq.s32.totalorder %s22, 1
      %p82 = scmp.ne.s32.totalorder %s77, %s79
      %p83 = scmp.eq.s32.totalorder %s22, 0
      %p84 = por %p82, %p83
      %p85 = scmp.ne.s32.totalorder %s77, %s79
      %p86 = scmp.eq.s32.totalorder %s27, 1
      %p87 = por %p85, %p86
      %p88 = scmp.ne.s32.totalorder %s79, %s80
      %p89 = scmp.eq.s32.totalorder %s27, 0
      %p90 = por %p88, %p89
      %p91 = scmp.ne.s32.totalorder %s79, %s80
      %p92 = scmp.eq.s32.totalorder %s28, 1
      %p93 = por %p91, %p92
      %p95 = scmp.ne.s32.totalorder %s80, %s94
      %p96 = scmp.eq.s32.totalorder %s28, 0
      %p97 = por %p95, %p96
      %s99 = sadd.s32 %s98, 1
      %p102 = scmp.eq.s32.totalorder %s22, 1
      %p103 = scmp.ne.s32.totalorder %s98, %s100
      %p104 = scmp.eq.s32.totalorder %s22, 0
      %p105 = por %p103, %p104
      %p106 = scmp.ne.s32.totalorder %s98, %s100
      %p107 = scmp.eq.s32.totalorder %s27, 1
      %p108 = por %p106, %p107
      %p109 = scmp.ne.s32.totalorder %s100, %s101
      %p110 = scmp.eq.s32.totalorder %s27, 0
      %p111 = por %p109, %p110
      %p112 = scmp.ne.s32.totalorder %s100, %s101
      %p113 = scmp.eq.s32.totalorder %s28, 1
      %p114 = por %p112, %p113
      %p116 = scmp.ne.s32.totalorder %s101, %s115
      %p117 = scmp.eq.s32.totalorder %s28, 0
      %p118 = por %p116, %p117
      %s120 = sadd.s32 %s119, 1
      %p123 = scmp.eq.s32.totalorder %s22, 1
      %p124 = scmp.ne.s32.totalorder %s119, %s121
      %p125 = scmp.eq.s32.totalorder %s22, 0
      %p126 = por %p124, %p125
      %p127 = scmp.ne.s32.totalorder %s119, %s121
      %p128 = scmp.eq.s32.totalorder %s27, 1
      %p129 = por %p127, %p128
      %p130 = scmp.ne.s32.totalorder %s121, %s122
      %p131 = scmp.eq.s32.totalorder %s27, 0
      %p132 = por %p130, %p131
      %p133 = scmp.ne.s32.totalorder %s121, %s122
      %p134 = scmp.eq.s32.totalorder %s28, 1
      %p135 = por %p133, %p134
      %p137 = scmp.ne.s32.totalorder %s122, %s136
      %p138 = scmp.eq.s32.totalorder %s28, 0
      %p139 = por %p137, %p138
      %s141 = sadd.s32 %s140, 1
      %p144 = scmp.eq.s32.totalorder %s22, 1
      %p145 = scmp.ne.s32.totalorder %s140, %s142
      %p146 = scmp.eq.s32.totalorder %s22, 0
      %p147 = por %p145, %p146
      %p148 = scmp.ne.s32.totalorder %s140, %s142
      %p149 = scmp.eq.s32.totalorder %s27, 1
      %p150 = por %p148, %p149
      %p151 = scmp.ne.s32.totalorder %s142, %s143
      %p152 = scmp.eq.s32.totalorder %s27, 0
      %p153 = por %p151, %p152
      %p154 = scmp.ne.s32.totalorder %s142, %s143
      %p155 = scmp.eq.s32.totalorder %s28, 1
      %p156 = por %p154, %p155
      %p158 = scmp.ne.s32.totalorder %s143, %s157
      %p159 = scmp.eq.s32.totalorder %s28, 0
      %p160 = por %p158, %p159
      %s162 = sadd.s32 %s161, 1
      %p165 = scmp.eq.s32.totalorder %s22, 1
      %p166 = scmp.ne.s32.totalorder %s161, %s163
      %p167 = scmp.eq.s32.totalorder %s22, 0
      %p168 = por %p166, %p167
      %p169 = scmp.ne.s32.totalorder %s161, %s163
      %p170 = scmp.eq.s32.totalorder %s27, 1
      %p171 = por %p169, %p170
      %p172 = scmp.ne.s32.totalorder %s163, %s164
      %p173 = scmp.eq.s32.totalorder %s27, 0
      %p174 = por %p172, %p173
      %p175 = scmp.ne.s32.totalorder %s163, %s164
      %p176 = scmp.eq.s32.totalorder %s28, 1
      %p177 = por %p175, %p176
      %p179 = scmp.ne.s32.totalorder %s164, %s178
      %p180 = scmp.eq.s32.totalorder %s28, 0
      %p181 = por %p179, %p180
      %s183 = sadd.s32 %s182, 1
      %p186 = scmp.eq.s32.totalorder %s22, 1
      %p187 = scmp.ne.s32.totalorder %s182, %s184
      %p188 = scmp.eq.s32.totalorder %s22, 0
      %p189 = por %p187, %p188
      %p190 = scmp.ne.s32.totalorder %s182, %s184
      %p191 = scmp.eq.s32.totalorder %s27, 1
      %p192 = por %p190, %p191
      %p193 = scmp.ne.s32.totalorder %s184, %s185
      %p194 = scmp.eq.s32.totalorder %s27, 0
      %p195 = por %p193, %p194
      %p196 = scmp.ne.s32.totalorder %s184, %s185
      %p197 = scmp.eq.s32.totalorder %s28, 1
      %p198 = por %p196, %p197
      %p200 = scmp.ne.s32.totalorder %s185, %s199
      %p201 = scmp.eq.s32.totalorder %s28, 0
      %p202 = por %p200, %p201
      %s204 = sadd.s32 %s203, 1
      %p207 = scmp.eq.s32.totalorder %s22, 1
      %p208 = scmp.ne.s32.totalorder %s203, %s205
      %p209 = scmp.eq.s32.totalorder %s22, 0
      %p210 = por %p208, %p209
      %p211 = scmp.ne.s32.totalorder %s203, %s205
      %p212 = scmp.eq.s32.totalorder %s27, 1
      %p213 = por %p211, %p212
      %p214 = scmp.ne.s32.totalorder %s205, %s206
      %p215 = scmp.eq.s32.totalorder %s27, 0
      %p216 = por %p214, %p215
      %p217 = scmp.ne.s32.totalorder %s205, %s206
      %p218 = scmp.eq.s32.totalorder %s28, 1
      %p219 = por %p217, %p218
      %p221 = scmp.ne.s32.totalorder %s206, %s220
      %p222 = scmp.eq.s32.totalorder %s28, 0
      %p223 = por %p221, %p222
      %s225 = sadd.s32 %s224, 1
      %p228 = scmp.eq.s32.totalorder %s22, 1
      %p229 = scmp.ne.s32.totalorder %s224, %s226
      %p230 = scmp.eq.s32.totalorder %s22, 0
      %p231 = por %p229, %p230
      %p232 = scmp.ne.s32.totalorder %s224, %s226
      %p233 = scmp.eq.s32.totalorder %s27, 1
      %p234 = por %p232, %p233
      %p235 = scmp.ne.s32.totalorder %s226, %s227
      %p236 = scmp.eq.s32.totalorder %s27, 0
      %p237 = por %p235, %p236
      %p238 = scmp.ne.s32.totalorder %s226, %s227
      %p239 = scmp.eq.s32.totalorder %s28, 1
      %p240 = por %p238, %p239
      %p242 = scmp.ne.s32.totalorder %s227, %s241
      %p243 = scmp.eq.s32.totalorder %s28, 0
      %p244 = por %p242, %p243
      %s246 = sadd.s32 %s245, 1
      %p249 = scmp.eq.s32.totalorder %s22, 1
      %p250 = scmp.ne.s32.totalorder %s245, %s247
      %p251 = scmp.eq.s32.totalorder %s22, 0
      %p252 = por %p250, %p251
      %p253 = scmp.ne.s32.totalorder %s245, %s247
      %p254 = scmp.eq.s32.totalorder %s27, 1
      %p255 = por %p253, %p254
      %p256 = scmp.ne.s32.totalorder %s247, %s248
      %p257 = scmp.eq.s32.totalorder %s27, 0
      %p258 = por %p256, %p257
      %p259 = scmp.ne.s32.totalorder %s247, %s248
      %p260 = scmp.eq.s32.totalorder %s28, 1
      %p261 = por %p259, %p260
      %p263 = scmp.ne.s32.totalorder %s248, %s262
      %p264 = scmp.eq.s32.totalorder %s28, 0
      %p265 = por %p263, %p264
      %s267 = sadd.s32 %s266, 1
      %p270 = scmp.eq.s32.totalorder %s22, 1
      %p271 = scmp.ne.s32.totalorder %s266, %s268
      %p272 = scmp.eq.s32.totalorder %s22, 0
      %p273 = por %p271, %p272
      %p274 = scmp.ne.s32.totalorder %s266, %s268
      %p275 = scmp.eq.s32.totalorder %s27, 1
      %p276 = por %p274, %p275
      %p277 = scmp.ne.s32.totalorder %s268, %s269
      %p278 = scmp.eq.s32.totalorder %s27, 0
      %p279 = por %p277, %p278
      %p280 = scmp.ne.s32.totalorder %s268, %s269
      %p281 = scmp.eq.s32.totalorder %s28, 1
      %p282 = por %p280, %p281
      %p284 = scmp.ne.s32.totalorder %s269, %s283
      %p285 = scmp.eq.s32.totalorder %s28, 0
      %p286 = por %p284, %p285
      %s288 = sadd.s32 %s287, 1
      %p291 = scmp.eq.s32.totalorder %s22, 1
      %p292 = scmp.ne.s32.totalorder %s287, %s289
      %p293 = scmp.eq.s32.totalorder %s22, 0
      %p294 = por %p292, %p293
      %p295 = scmp.ne.s32.totalorder %s287, %s289
      %p296 = scmp.eq.s32.totalorder %s27, 1
      %p297 = por %p295, %p296
      %p298 = scmp.ne.s32.totalorder %s289, %s290
      %p299 = scmp.eq.s32.totalorder %s27, 0
      %p300 = por %p298, %p299
      %p301 = scmp.ne.s32.totalorder %s289, %s290
      %p302 = scmp.eq.s32.totalorder %s28, 1
      %p303 = por %p301, %p302
      %p305 = scmp.ne.s32.totalorder %s290, %s304
      %p306 = scmp.eq.s32.totalorder %s28, 0
      %p307 = por %p305, %p306
      %s308 = ssub.s32 %s22, %s29
      %p309 = scmp.eq.s32.totalorder %s308, 0
      %s311 = sadd.s32 %s310, 1
      %s312 = scalar_select %p309, %s310, %s311
      %p315 = pneg %p309
      %p316 = scmp.eq.s32.totalorder %s22, 1
      %p317 = por %p315, %p316
      %p318 = scmp.ne.s32.totalorder %s310, %s313
      %p319 = scmp.eq.s32.totalorder %s22, 0
      %p320 = por %p318, %p319
      %p321 = scmp.ne.s32.totalorder %s310, %s313
      %p322 = scmp.eq.s32.totalorder %s27, 1
      %p323 = por %p321, %p322
      %p324 = scmp.ne.s32.totalorder %s313, %s314
      %p325 = scmp.eq.s32.totalorder %s27, 0
      %p326 = por %p324, %p325
      %p327 = scmp.ne.s32.totalorder %s313, %s314
      %p328 = scmp.eq.s32.totalorder %s28, 1
      %p329 = por %p327, %p328
      %p331 = scmp.ne.s32.totalorder %s314, %s330
      %p332 = scmp.eq.s32.totalorder %s28, 0
      %p333 = por %p331, %p332
      %p334 = scmp.le.s32.totalorder 1, %s22
      %p335 = scmp.lt.s32.totalorder %s22, 3
      %p336 = pnand %p334, %p335
      %p337 = pneg %p336
      // Predicated region
      $region9: #{tpu_custom_call.1} parent=5 // pred_check
        _
      $region10: #{tpu_custom_call.1} parent=5 // pred_check_branch
        %339 = sbr.rel (%p336) target = $region12
      $region11: #{tpu_custom_call.1} parent=5 // pred_region
        %s340 = ssub.s32 %s22, 1
        // Predicated region
        $region13: #{tpu_custom_call.1} parent=11 // pred_check
          %p341 = pneg %p69
        $region14: #{tpu_custom_call.1} parent=11 // pred_check_branch
          %343 = sbr.rel (%p341) target = $region16
        $region15: #{tpu_custom_call.1} parent=11 // pred_region
          _
        $region16: #{tpu_custom_call.1} parent=11 // pred_fallthru
          _
        // Predicated region
        $region17: #{tpu_custom_call.1} parent=11 // pred_check
          %p344 = pneg %p90
        $region18: #{tpu_custom_call.1} parent=11 // pred_check_branch
          %346 = sbr.rel (%p344) target = $region20
        $region19: #{tpu_custom_call.1} parent=11 // pred_region
          _
        $region20: #{tpu_custom_call.1} parent=11 // pred_fallthru
          _
        // Predicated region
        $region21: #{tpu_custom_call.1} parent=11 // pred_check
          %p347 = pneg %p111
        $region22: #{tpu_custom_call.1} parent=11 // pred_check_branch
          %349 = sbr.rel (%p347) target = $region24
        $region23: #{tpu_custom_call.1} parent=11 // pred_region
          _
        $region24: #{tpu_custom_call.1} parent=11 // pred_fallthru
          _
        // Predicated region
        $region25: #{tpu_custom_call.1} parent=11 // pred_check
          %p350 = pneg %p132
        $region26: #{tpu_custom_call.1} parent=11 // pred_check_branch
          %352 = sbr.rel (%p350) target = $region28
        $region27: #{tpu_custom_call.1} parent=11 // pred_region
          _
        $region28: #{tpu_custom_call.1} parent=11 // pred_fallthru
          _
        // Predicated region
        $region29: #{tpu_custom_call.1} parent=11 // pred_check
          %p353 = pneg %p153
        $region30: #{tpu_custom_call.1} parent=11 // pred_check_branch
          %355 = sbr.rel (%p353) target = $region32
        $region31: #{tpu_custom_call.1} parent=11 // pred_region
          _
        $region32: #{tpu_custom_call.1} parent=11 // pred_fallthru
          _
        // Predicated region
        $region33: #{tpu_custom_call.1} parent=11 // pred_check
          %p356 = pneg %p174
        $region34: #{tpu_custom_call.1} parent=11 // pred_check_branch
          %358 = sbr.rel (%p356) target = $region36
        $region35: #{tpu_custom_call.1} parent=11 // pred_region
          _
        $region36: #{tpu_custom_call.1} parent=11 // pred_fallthru
          _
        // Predicated region
        $region37: #{tpu_custom_call.1} parent=11 // pred_check
          %p359 = pneg %p195
        $region38: #{tpu_custom_call.1} parent=11 // pred_check_branch
          %361 = sbr.rel (%p359) target = $region40
        $region39: #{tpu_custom_call.1} parent=11 // pred_region
          _
        $region40: #{tpu_custom_call.1} parent=11 // pred_fallthru
          _
        // Predicated region
        $region41: #{tpu_custom_call.1} parent=11 // pred_check
          %p362 = pneg %p216
        $region42: #{tpu_custom_call.1} parent=11 // pred_check_branch
          %364 = sbr.rel (%p362) target = $region44
        $region43: #{tpu_custom_call.1} parent=11 // pred_region
          _
        $region44: #{tpu_custom_call.1} parent=11 // pred_fallthru
          _
        // Predicated region
        $region45: #{tpu_custom_call.1} parent=11 // pred_check
          %p365 = pneg %p237
        $region46: #{tpu_custom_call.1} parent=11 // pred_check_branch
          %367 = sbr.rel (%p365) target = $region48
        $region47: #{tpu_custom_call.1} parent=11 // pred_region
          _
        $region48: #{tpu_custom_call.1} parent=11 // pred_fallthru
          _
        // Predicated region
        $region49: #{tpu_custom_call.1} parent=11 // pred_check
          %p368 = pneg %p258
        $region50: #{tpu_custom_call.1} parent=11 // pred_check_branch
          %370 = sbr.rel (%p368) target = $region52
        $region51: #{tpu_custom_call.1} parent=11 // pred_region
          _
        $region52: #{tpu_custom_call.1} parent=11 // pred_fallthru
          _
        // Predicated region
        $region53: #{tpu_custom_call.1} parent=11 // pred_check
          %p371 = pneg %p279
        $region54: #{tpu_custom_call.1} parent=11 // pred_check_branch
          %373 = sbr.rel (%p371) target = $region56
        $region55: #{tpu_custom_call.1} parent=11 // pred_region
          _
        $region56: #{tpu_custom_call.1} parent=11 // pred_fallthru
          _
        // Predicated region
        $region57: #{tpu_custom_call.1} parent=11 // pred_check
          %p374 = pneg %p300
        $region58: #{tpu_custom_call.1} parent=11 // pred_check_branch
          %376 = sbr.rel (%p374) target = $region60
        $region59: #{tpu_custom_call.1} parent=11 // pred_region
          _
        $region60: #{tpu_custom_call.1} parent=11 // pred_fallthru
          _
      $region12: #{tpu_custom_call.1} parent=5 // pred_fallthru
        _
      %p377 = scmp.lt.s32.totalorder %s22, 2
      // Predicated region
      $region61: #{tpu_custom_call.1} parent=5 // pred_check
        %p378 = pneg %p377
      $region62: #{tpu_custom_call.1} parent=5 // pred_check_branch
        %380 = sbr.rel (%p378) target = $region64
      $region63: #{tpu_custom_call.1} parent=5 // pred_region
        // Predicated region
        $region65: #{tpu_custom_call.1} parent=63 // pred_check
          %p381 = pneg %p42
        $region66: #{tpu_custom_call.1} parent=63 // pred_check_branch
          %383 = sbr.rel (%p381) target = $region68
        $region67: #{tpu_custom_call.1} parent=63 // pred_region
          %p384 = scmp.lt.s32.totalorder %s22, 1
          %s385 = scalar_select %p384, %s22, 1
          %s386 = smul.addr %s385, 8
          %s387 = scalar_lea.vmem %s0, %s386
        $region68: #{tpu_custom_call.1} parent=63 // pred_fallthru
          _
      $region64: #{tpu_custom_call.1} parent=5 // pred_fallthru
        _
      %p388 = scmp.le.s32.totalorder 1, %s22
      %p389 = scmp.lt.s32.totalorder %s22, 3
      %p390 = pnand %p388, %p389
      %p391 = pneg %p390
      // Predicated region
      $region69: #{tpu_custom_call.1} parent=5 // pred_check
        _
      $region70: #{tpu_custom_call.1} parent=5 // pred_check_branch
        %393 = sbr.rel (%p390) target = $region72
      $region71: #{tpu_custom_call.1} parent=5 // pred_region
        %s394 = ssub.s32 %s22, 1
        %p395 = scmp.lt.s32.totalorder %s27, 1
        %s396 = scalar_select %p395, %s27, 1
        %s397 = smul.addr %s396, 8
        %s398 = scalar_lea.vmem %s0, %s397
        %p399 = pneg %p48
        %p400 = pneg %p45
        %p401 = pneg %p69
        %p402 = pneg %p66
        %p403 = pneg %p90
        %p404 = pneg %p87
        %p405 = pneg %p111
        %p406 = pneg %p108
        %p407 = pneg %p132
        %p408 = pneg %p129
        %p409 = pneg %p153
        %p410 = pneg %p150
        %p411 = pneg %p174
        %p412 = pneg %p171
        %p413 = pneg %p195
        %p414 = pneg %p192
        %p415 = pneg %p216
        %p416 = pneg %p213
        %p417 = pneg %p237
        %p418 = pneg %p234
        %p419 = pneg %p258
        %p420 = pneg %p255
        %p421 = pneg %p279
        %p422 = pneg %p276
        %p423 = pneg %p300
        %p424 = pneg %p297
        %p425 = pneg %p326
        %p426 = pneg %p323
        %s427 = sand.u32 %s313, 1
        %s428 = scalar_lea.sflag [#allocation3], %s427
        %s429 = sand.u32 %s313, 1
        %s430 = smul.addr %s429, 8
        %s431 = scalar_lea.vmem [#allocation2], %s430
        %p432 = scmp.lt.s32.totalorder %s27, 1
        %s433 = scalar_select %p432, %s27, 1
        %s434 = smul.addr %s433, 8
        %s435 = scalar_lea.vmem %s0, %s434
        %v436 = vld [vmem:[%s435] sm:$0xff]
        %v437 = vld [vmem:[%s1] sm:$0x1]
        %v438 = vld [vmem:[%s2] sm:$0x1]
        %vm439 = vcmask 261120
        %v440 = vsel %vm439, %v436, 0.0
        %441 = vadd.xlane.f32.xlu0 %v440
        %v442 = vpop.xlane.xlu0 %441
        %v443 = vrcp.pop 32.0
        %v444 = vmul.f32 %v442, %v443
        %v445 = vsub.f32 %v436, %v444
        %v446 = vmul.f32 %v445, %v445
        %v447 = vsel %vm439, %v446, 0.0
        %448 = vadd.xlane.f32.xlu0 %v447
        %v449 = vpop.xlane.xlu0 %448
        %v450 = vmul.f32 %v449, 0.032258064
        %v451 = vrsqrt.pop %v450
        %v452 = vmul.f32 %v450, %v451
        %vm453 = vcmp.eq.f32.partialorder %v450, inf
        %v454 = vsel %vm453, %v450, %v452
        %vm455 = vcmp.eq.f32.partialorder %v450, 0.0
        %v456 = vand.u32 %v450, 2147483648
        %v457 = vsel %vm455, %v456, %v454
        %v458 = vadd.f32 %v457, 1e-06
        %v459 = vrcp.pop %v458
        %v461 = vlaneseq
        %v462 = vshrl.u32 %v461, 7
        %v463 = vsub.s32 0, %v462
        %v464 = vrot.slane %v437, %v463
        %v466 = vmul.f32 %v464, %v445
        %v467 = vmul.f32 %v466, %v459
        %v469 = vlaneseq
        %v470 = vshrl.u32 %v469, 7
        %v471 = vsub.s32 0, %v470
        %v472 = vrot.slane %v438, %v471
        %v474 = vadd.f32 %v467, %v472
        %v475 = vld [vmem:[%s3] sm:$0xff]
        %v476 = vld [vmem:[%s3 + $0x8] sm:$0xff]
        %v477 = vld [vmem:[%s3 + $0x10] sm:$0xff]
        %v478 = vld [vmem:[%s3 + $0x18] sm:$0xff]
        %v479 = vld [vmem:[%s4] sm:$0x1]
        %v481 = vlaneseq
        %v482 = vshrl.u32 %v481, 7
        %v483 = vsub.s32 0, %v482
        %v484 = vrot.slane %v479, %v483
        %v487 = vsel %vm439, %v474, 0
        %489 = vmatprep.subr.mxu0 0.0
        %490 = vmatpush1.msra.mxu0 %v475
        %491 = vmatprep.subr.mxu0 0.0
        %492 = vmatpush1.msra.mxu0 %v476
        %493 = vmatprep.subr.mxu0 0.0
        %494 = vmatpush1.msra.mxu0 %v477
        %495 = vmatprep.subr.mxu0 0.0
        %496 = vmatpush1.msra.mxu0 %v478
        %497 = vmatprep.subr.mxu0 0.0
        %498 = vmatpush1.msra.mxu0 0.0
        %499 = vmatprep.subr.mxu0 0.0
        %500 = vmatpush1.msra.mxu0 0.0
        %501 = vmatprep.subr.mxu0 0.0
        %502 = vmatpush1.msra.mxu0 0.0
        %503 = vmatprep.subr.mxu0 0.0
        %504 = vmatpush1.msra.mxu0 0.0
        %505 = vmatprep.subr.mxu0 0.0
        %506 = vmatpush1.msra.mxu0 0.0
        %507 = vmatprep.subr.mxu0 0.0
        %508 = vmatpush1.msra.mxu0 0.0
        %509 = vmatprep.subr.mxu0 0.0
        %510 = vmatpush1.msra.mxu0 0.0
        %511 = vmatprep.subr.mxu0 0.0
        %512 = vmatpush1.msra.mxu0 0.0
        %513 = vmatprep.subr.mxu0 0.0
        %514 = vmatpush1.msra.mxu0 0.0
        %515 = vmatprep.subr.mxu0 0.0
        %516 = vmatpush1.msra.mxu0 0.0
        %517 = vmatprep.subr.mxu0 0.0
        %518 = vmatpush1.msra.mxu0 0.0
        %519 = vmatprep.subr.mxu0 0.0
        %520 = vmatpush1.msra.mxu0 0.0
        %521 = vmatprep.subr.mxu0 0.0
        %522 = vmatpush1.msra.mxu0 0.0
        %523 = vmatprep.subr.mxu0 0.0
        %524 = vmatpush1.msra.mxu0 0.0
        %525 = vmatprep.subr.mxu0 0.0
        %526 = vmatpush1.msra.mxu0 0.0
        %527 = vmatprep.subr.mxu0 0.0
        %528 = vmatpush1.msra.mxu0 0.0
        %529 = vmatprep.subr.mxu0 0.0
        %530 = vmatpush1.msra.mxu0 0.0
        %531 = vmatprep.subr.mxu0 0.0
        %532 = vmatpush1.msra.mxu0 0.0
        %533 = vmatprep.subr.mxu0 0.0
        %534 = vmatpush1.msra.mxu0 0.0
        %535 = vmatprep.subr.mxu0 0.0
        %536 = vmatpush1.msra.mxu0 0.0
        %537 = vmatprep.subr.mxu0 0.0
        %538 = vmatpush1.msra.mxu0 0.0
        %539 = vmatprep.subr.mxu0 0.0
        %540 = vmatpush1.msra.mxu0 0.0
        %541 = vmatprep.subr.mxu0 0.0
        %542 = vmatpush1.msra.mxu0 0.0
        %543 = vmatprep.subr.mxu0 0.0
        %544 = vmatpush1.msra.mxu0 0.0
        %545 = vmatprep.subr.mxu0 0.0
        %546 = vmatpush1.msra.mxu0 0.0
        %547 = vmatprep.subr.mxu0 0.0
        %548 = vmatpush1.msra.mxu0 0.0
        %549 = vmatprep.subr.mxu0 0.0
        %550 = vmatpush1.msra.mxu0 0.0
        %551 = vmatprep.subr.mxu0 0.0
        %552 = vmatpush1.msra.mxu0 0.0
        %553 = vmatprep.mubr.f32.mxu0 0.0
        %554 = vmatmul.mubr.f32.gmra.mrb[0].mxu0 %v487
        %v555 = vpop.f32.mrb[0].mxu0
        %v556 = vadd.f32 %v484, %v555
        %v557 = vpop.f32.mrb[0].mxu0
        %558 = vdwg.mxu0
        %560 = vrot.lane.b32.xlu0 %v556, 120
        %v561 = vpop.permute.xlu0 %560
        %562 = vrot.lane.b32.xlu0 %v556, 112
        %v563 = vpop.permute.xlu0 %562
        %564 = vrot.lane.b32.xlu0 %v556, 104
        %v565 = vpop.permute.xlu0 %564
        %566 = vrot.lane.b32.xlu0 %v556, 96
        %v567 = vpop.permute.xlu0 %566
        %vm568 = vcmask 64512
        %v569 = vsel %vm568, %v556, 0
        %v571 = vsel %vm568, %v567, 0
        %573 = vmatprep.subr.mxu0 0.0
        %574 = vmatpush1.xpose.msra.mxu0 %v571
        %575 = vmatprep.subr.mxu0 0.0
        %576 = vmatpush1.xpose.msra.mxu0 0.0
        %577 = vmatprep.subr.mxu0 0.0
        %578 = vmatpush1.xpose.msra.mxu0 0.0
        %579 = vmatprep.subr.mxu0 0.0
        %580 = vmatpush1.xpose.msra.mxu0 0.0
        %581 = vmatprep.subr.mxu0 0.0
        %582 = vmatpush1.xpose.msra.mxu0 0.0
        %583 = vmatprep.subr.mxu0 0.0
        %584 = vmatpush1.xpose.msra.mxu0 0.0
        %585 = vmatprep.subr.mxu0 0.0
        %586 = vmatpush1.xpose.msra.mxu0 0.0
        %587 = vmatprep.subr.mxu0 0.0
        %588 = vmatpush1.xpose.msra.mxu0 0.0
        %589 = vmatprep.subr.mxu0 0.0
        %590 = vmatpush1.xpose.msra.mxu0 0.0
        %591 = vmatprep.subr.mxu0 0.0
        %592 = vmatpush1.xpose.msra.mxu0 0.0
        %593 = vmatprep.subr.mxu0 0.0
        %594 = vmatpush1.xpose.msra.mxu0 0.0
        %595 = vmatprep.subr.mxu0 0.0
        %596 = vmatpush1.xpose.msra.mxu0 0.0
        %597 = vmatprep.subr.mxu0 0.0
        %598 = vmatpush1.xpose.msra.mxu0 0.0
        %599 = vmatprep.subr.mxu0 0.0
        %600 = vmatpush1.xpose.msra.mxu0 0.0
        %601 = vmatprep.subr.mxu0 0.0
        %602 = vmatpush1.xpose.msra.mxu0 0.0
        %603 = vmatprep.subr.mxu0 0.0
        %604 = vmatpush1.xpose.msra.mxu0 0.0
        %605 = vmatprep.subr.mxu0 0.0
        %606 = vmatpush1.xpose.msra.mxu0 0.0
        %607 = vmatprep.subr.mxu0 0.0
        %608 = vmatpush1.xpose.msra.mxu0 0.0
        %609 = vmatprep.subr.mxu0 0.0
        %610 = vmatpush1.xpose.msra.mxu0 0.0
        %611 = vmatprep.subr.mxu0 0.0
        %612 = vmatpush1.xpose.msra.mxu0 0.0
        %613 = vmatprep.subr.mxu0 0.0
        %614 = vmatpush1.xpose.msra.mxu0 0.0
        %615 = vmatprep.subr.mxu0 0.0
        %616 = vmatpush1.xpose.msra.mxu0 0.0
        %617 = vmatprep.subr.mxu0 0.0
        %618 = vmatpush1.xpose.msra.mxu0 0.0
        %619 = vmatprep.subr.mxu0 0.0
        %620 = vmatpush1.xpose.msra.mxu0 0.0
        %621 = vmatprep.subr.mxu0 0.0
        %622 = vmatpush1.xpose.msra.mxu0 0.0
        %623 = vmatprep.subr.mxu0 0.0
        %624 = vmatpush1.xpose.msra.mxu0 0.0
        %625 = vmatprep.subr.mxu0 0.0
        %626 = vmatpush1.xpose.msra.mxu0 0.0
        %627 = vmatprep.subr.mxu0 0.0
        %628 = vmatpush1.xpose.msra.mxu0 0.0
        %629 = vmatprep.subr.mxu0 0.0
        %630 = vmatpush1.xpose.msra.mxu0 0.0
        %631 = vmatprep.subr.mxu0 0.0
        %632 = vmatpush1.xpose.msra.mxu0 0.0
        %633 = vmatprep.subr.mxu0 0.0
        %634 = vmatpush1.xpose.msra.mxu0 0.0
        %635 = vmatprep.subr.mxu0 0.0
        %636 = vmatpush1.xpose.msra.mxu0 0.0
        %637 = vmatprep.mubr.f32.mxu0 0.0
        %638 = vmatmul.mubr.f32.gmra.mrb[0].mxu0 %v569
        %v639 = vpop.f32.mrb[0].mxu0
        %v640 = vadd.f32 0.0, %v639
        %v641 = vpop.f32.mrb[0].mxu0
        %642 = vdwg.mxu0
        %643 = vrot.lane.b32.xlu0 %v561, 96
        %v644 = vpop.permute.xlu0 %643
        %v645 = vsel %vm568, %v561, 0
        %v647 = vsel %vm568, %v644, 0
        %649 = vmatprep.subr.mxu0 0.0
        %650 = vmatpush1.xpose.msra.mxu0 %v647
        %651 = vmatprep.subr.mxu0 0.0
        %652 = vmatpush1.xpose.msra.mxu0 0.0
        %653 = vmatprep.subr.mxu0 0.0
        %654 = vmatpush1.xpose.msra.mxu0 0.0
        %655 = vmatprep.subr.mxu0 0.0
        %656 = vmatpush1.xpose.msra.mxu0 0.0
        %657 = vmatprep.subr.mxu0 0.0
        %658 = vmatpush1.xpose.msra.mxu0 0.0
        %659 = vmatprep.subr.mxu0 0.0
        %660 = vmatpush1.xpose.msra.mxu0 0.0
        %661 = vmatprep.subr.mxu0 0.0
        %662 = vmatpush1.xpose.msra.mxu0 0.0
        %663 = vmatprep.subr.mxu0 0.0
        %664 = vmatpush1.xpose.msra.mxu0 0.0
        %665 = vmatprep.subr.mxu0 0.0
        %666 = vmatpush1.xpose.msra.mxu0 0.0
        %667 = vmatprep.subr.mxu0 0.0
        %668 = vmatpush1.xpose.msra.mxu0 0.0
        %669 = vmatprep.subr.mxu0 0.0
        %670 = vmatpush1.xpose.msra.mxu0 0.0
        %671 = vmatprep.subr.mxu0 0.0
        %672 = vmatpush1.xpose.msra.mxu0 0.0
        %673 = vmatprep.subr.mxu0 0.0
        %674 = vmatpush1.xpose.msra.mxu0 0.0
        %675 = vmatprep.subr.mxu0 0.0
        %676 = vmatpush1.xpose.msra.mxu0 0.0
        %677 = vmatprep.subr.mxu0 0.0
        %678 = vmatpush1.xpose.msra.mxu0 0.0
        %679 = vmatprep.subr.mxu0 0.0
        %680 = vmatpush1.xpose.msra.mxu0 0.0
        %681 = vmatprep.subr.mxu0 0.0
        %682 = vmatpush1.xpose.msra.mxu0 0.0
        %683 = vmatprep.subr.mxu0 0.0
        %684 = vmatpush1.xpose.msra.mxu0 0.0
        %685 = vmatprep.subr.mxu0 0.0
        %686 = vmatpush1.xpose.msra.mxu0 0.0
        %687 = vmatprep.subr.mxu0 0.0
        %688 = vmatpush1.xpose.msra.mxu0 0.0
        %689 = vmatprep.subr.mxu0 0.0
        %690 = vmatpush1.xpose.msra.mxu0 0.0
        %691 = vmatprep.subr.mxu0 0.0
        %692 = vmatpush1.xpose.msra.mxu0 0.0
        %693 = vmatprep.subr.mxu0 0.0
        %694 = vmatpush1.xpose.msra.mxu0 0.0
        %695 = vmatprep.subr.mxu0 0.0
        %696 = vmatpush1.xpose.msra.mxu0 0.0
        %697 = vmatprep.subr.mxu0 0.0
        %698 = vmatpush1.xpose.msra.mxu0 0.0
        %699 = vmatprep.subr.mxu0 0.0
        %700 = vmatpush1.xpose.msra.mxu0 0.0
        %701 = vmatprep.subr.mxu0 0.0
        %702 = vmatpush1.xpose.msra.mxu0 0.0
        %703 = vmatprep.subr.mxu0 0.0
        %704 = vmatpush1.xpose.msra.mxu0 0.0
        %705 = vmatprep.subr.mxu0 0.0
        %706 = vmatpush1.xpose.msra.mxu0 0.0
        %707 = vmatprep.subr.mxu0 0.0
        %708 = vmatpush1.xpose.msra.mxu0 0.0
        %709 = vmatprep.subr.mxu0 0.0
        %710 = vmatpush1.xpose.msra.mxu0 0.0
        %711 = vmatprep.subr.mxu0 0.0
        %712 = vmatpush1.xpose.msra.mxu0 0.0
        %713 = vmatprep.mubr.f32.mxu0 0.0
        %714 = vmatmul.mubr.f32.gmra.mrb[0].mxu0 %v645
        %v715 = vpop.f32.mrb[0].mxu0
        %v716 = vadd.f32 0.0, %v715
        %v717 = vpop.f32.mrb[0].mxu0
        %718 = vdwg.mxu0
        %719 = vrot.lane.b32.xlu0 %v563, 96
        %v720 = vpop.permute.xlu0 %719
        %v721 = vsel %vm568, %v563, 0
        %v723 = vsel %vm568, %v720, 0
        %725 = vmatprep.subr.mxu0 0.0
        %726 = vmatpush1.xpose.msra.mxu0 %v723
        %727 = vmatprep.subr.mxu0 0.0
        %728 = vmatpush1.xpose.msra.mxu0 0.0
        %729 = vmatprep.subr.mxu0 0.0
        %730 = vmatpush1.xpose.msra.mxu0 0.0
        %731 = vmatprep.subr.mxu0 0.0
        %732 = vmatpush1.xpose.msra.mxu0 0.0
        %733 = vmatprep.subr.mxu0 0.0
        %734 = vmatpush1.xpose.msra.mxu0 0.0
        %735 = vmatprep.subr.mxu0 0.0
        %736 = vmatpush1.xpose.msra.mxu0 0.0
        %737 = vmatprep.subr.mxu0 0.0
        %738 = vmatpush1.xpose.msra.mxu0 0.0
        %739 = vmatprep.subr.mxu0 0.0
        %740 = vmatpush1.xpose.msra.mxu0 0.0
        %741 = vmatprep.subr.mxu0 0.0
        %742 = vmatpush1.xpose.msra.mxu0 0.0
        %743 = vmatprep.subr.mxu0 0.0
        %744 = vmatpush1.xpose.msra.mxu0 0.0
        %745 = vmatprep.subr.mxu0 0.0
        %746 = vmatpush1.xpose.msra.mxu0 0.0
        %747 = vmatprep.subr.mxu0 0.0
        %748 = vmatpush1.xpose.msra.mxu0 0.0
        %749 = vmatprep.subr.mxu0 0.0
        %750 = vmatpush1.xpose.msra.mxu0 0.0
        %751 = vmatprep.subr.mxu0 0.0
        %752 = vmatpush1.xpose.msra.mxu0 0.0
        %753 = vmatprep.subr.mxu0 0.0
        %754 = vmatpush1.xpose.msra.mxu0 0.0
        %755 = vmatprep.subr.mxu0 0.0
        %756 = vmatpush1.xpose.msra.mxu0 0.0
        %757 = vmatprep.subr.mxu0 0.0
        %758 = vmatpush1.xpose.msra.mxu0 0.0
        %759 = vmatprep.subr.mxu0 0.0
        %760 = vmatpush1.xpose.msra.mxu0 0.0
        %761 = vmatprep.subr.mxu0 0.0
        %762 = vmatpush1.xpose.msra.mxu0 0.0
        %763 = vmatprep.subr.mxu0 0.0
        %764 = vmatpush1.xpose.msra.mxu0 0.0
        %765 = vmatprep.subr.mxu0 0.0
        %766 = vmatpush1.xpose.msra.mxu0 0.0
        %767 = vmatprep.subr.mxu0 0.0
        %768 = vmatpush1.xpose.msra.mxu0 0.0
        %769 = vmatprep.subr.mxu0 0.0
        %770 = vmatpush1.xpose.msra.mxu0 0.0
        %771 = vmatprep.subr.mxu0 0.0
        %772 = vmatpush1.xpose.msra.mxu0 0.0
        %773 = vmatprep.subr.mxu0 0.0
        %774 = vmatpush1.xpose.msra.mxu0 0.0
        %775 = vmatprep.subr.mxu0 0.0
        %776 = vmatpush1.xpose.msra.mxu0 0.0
        %777 = vmatprep.subr.mxu0 0.0
        %778 = vmatpush1.xpose.msra.mxu0 0.0
        %779 = vmatprep.subr.mxu0 0.0
        %780 = vmatpush1.xpose.msra.mxu0 0.0
        %781 = vmatprep.subr.mxu0 0.0
        %782 = vmatpush1.xpose.msra.mxu0 0.0
        %783 = vmatprep.subr.mxu0 0.0
        %784 = vmatpush1.xpose.msra.mxu0 0.0
        %785 = vmatprep.subr.mxu0 0.0
        %786 = vmatpush1.xpose.msra.mxu0 0.0
        %787 = vmatprep.subr.mxu0 0.0
        %788 = vmatpush1.xpose.msra.mxu0 0.0
        %789 = vmatprep.mubr.f32.mxu0 0.0
        %790 = vmatmul.mubr.f32.gmra.mrb[0].mxu0 %v721
        %v791 = vpop.f32.mrb[0].mxu0
        %v792 = vadd.f32 0.0, %v791
        %v793 = vpop.f32.mrb[0].mxu0
        %794 = vdwg.mxu0
        %795 = vrot.lane.b32.xlu0 %v565, 96
        %v796 = vpop.permute.xlu0 %795
        %v797 = vsel %vm568, %v565, 0
        %v799 = vsel %vm568, %v796, 0
        %801 = vmatprep.subr.mxu0 0.0
        %802 = vmatpush1.xpose.msra.mxu0 %v799
        %803 = vmatprep.subr.mxu0 0.0
        %804 = vmatpush1.xpose.msra.mxu0 0.0
        %805 = vmatprep.subr.mxu0 0.0
        %806 = vmatpush1.xpose.msra.mxu0 0.0
        %807 = vmatprep.subr.mxu0 0.0
        %808 = vmatpush1.xpose.msra.mxu0 0.0
        %809 = vmatprep.subr.mxu0 0.0
        %810 = vmatpush1.xpose.msra.mxu0 0.0
        %811 = vmatprep.subr.mxu0 0.0
        %812 = vmatpush1.xpose.msra.mxu0 0.0
        %813 = vmatprep.subr.mxu0 0.0
        %814 = vmatpush1.xpose.msra.mxu0 0.0
        %815 = vmatprep.subr.mxu0 0.0
        %816 = vmatpush1.xpose.msra.mxu0 0.0
        %817 = vmatprep.subr.mxu0 0.0
        %818 = vmatpush1.xpose.msra.mxu0 0.0
        %819 = vmatprep.subr.mxu0 0.0
        %820 = vmatpush1.xpose.msra.mxu0 0.0
        %821 = vmatprep.subr.mxu0 0.0
        %822 = vmatpush1.xpose.msra.mxu0 0.0
        %823 = vmatprep.subr.mxu0 0.0
        %824 = vmatpush1.xpose.msra.mxu0 0.0
        %825 = vmatprep.subr.mxu0 0.0
        %826 = vmatpush1.xpose.msra.mxu0 0.0
        %827 = vmatprep.subr.mxu0 0.0
        %828 = vmatpush1.xpose.msra.mxu0 0.0
        %829 = vmatprep.subr.mxu0 0.0
        %830 = vmatpush1.xpose.msra.mxu0 0.0
        %831 = vmatprep.subr.mxu0 0.0
        %832 = vmatpush1.xpose.msra.mxu0 0.0
        %833 = vmatprep.subr.mxu0 0.0
        %834 = vmatpush1.xpose.msra.mxu0 0.0
        %835 = vmatprep.subr.mxu0 0.0
        %836 = vmatpush1.xpose.msra.mxu0 0.0
        %837 = vmatprep.subr.mxu0 0.0
        %838 = vmatpush1.xpose.msra.mxu0 0.0
        %839 = vmatprep.subr.mxu0 0.0
        %840 = vmatpush1.xpose.msra.mxu0 0.0
        %841 = vmatprep.subr.mxu0 0.0
        %842 = vmatpush1.xpose.msra.mxu0 0.0
        %843 = vmatprep.subr.mxu0 0.0
        %844 = vmatpush1.xpose.msra.mxu0 0.0
        %845 = vmatprep.subr.mxu0 0.0
        %846 = vmatpush1.xpose.msra.mxu0 0.0
        %847 = vmatprep.subr.mxu0 0.0
        %848 = vmatpush1.xpose.msra.mxu0 0.0
        %849 = vmatprep.subr.mxu0 0.0
        %850 = vmatpush1.xpose.msra.mxu0 0.0
        %851 = vmatprep.subr.mxu0 0.0
        %852 = vmatpush1.xpose.msra.mxu0 0.0
        %853 = vmatprep.subr.mxu0 0.0
        %854 = vmatpush1.xpose.msra.mxu0 0.0
        %855 = vmatprep.subr.mxu0 0.0
        %856 = vmatpush1.xpose.msra.mxu0 0.0
        %857 = vmatprep.subr.mxu0 0.0
        %858 = vmatpush1.xpose.msra.mxu0 0.0
        %859 = vmatprep.subr.mxu0 0.0
        %860 = vmatpush1.xpose.msra.mxu0 0.0
        %861 = vmatprep.subr.mxu0 0.0
        %862 = vmatpush1.xpose.msra.mxu0 0.0
        %863 = vmatprep.subr.mxu0 0.0
        %864 = vmatpush1.xpose.msra.mxu0 0.0
        %865 = vmatprep.mubr.f32.mxu0 0.0
        %866 = vmatmul.mubr.f32.gmra.mrb[0].mxu0 %v797
        %v867 = vpop.f32.mrb[0].mxu0
        %v868 = vadd.f32 0.0, %v867
        %v869 = vpop.f32.mrb[0].mxu0
        %870 = vdwg.mxu0
        %v871 = vmul.f32 %v640, 0.35355338
        %v872 = vmul.f32 %v716, 0.35355338
        %v873 = vmul.f32 %v792, 0.35355338
        %v874 = vmul.f32 %v868, 0.35355338
        %v875 = vsel %vm568, %v871, -inf
        %876 = vmax.xlane.f32.xlu0 %v875
        %v877 = vpop.xlane.xlu0 %876
        %v878 = vsel %vm568, %v872, -inf
        %879 = vmax.xlane.f32.xlu0 %v878
        %v880 = vpop.xlane.xlu0 %879
        %v881 = vsel %vm568, %v873, -inf
        %882 = vmax.xlane.f32.xlu0 %v881
        %v883 = vpop.xlane.xlu0 %882
        %v884 = vsel %vm568, %v874, -inf
        %885 = vmax.xlane.f32.xlu0 %v884
        %v886 = vpop.xlane.xlu0 %885
        %v887 = vsub.f32 -inf, %v877
        %v888 = vsub.f32 -inf, %v880
        %v889 = vsub.f32 -inf, %v883
        %v890 = vsub.f32 -inf, %v886
        %v891 = vmul.f32 %v887, 1.442695
        %v892 = vpow.pop %v891
        %v893 = vmul.f32 %v888, 1.442695
        %v894 = vpow.pop %v893
        %v895 = vmul.f32 %v889, 1.442695
        %v896 = vpow.pop %v895
        %v897 = vmul.f32 %v890, 1.442695
        %v898 = vpow.pop %v897
        %v899 = vsub.f32 %v871, %v877
        %v900 = vsub.f32 %v872, %v880
        %v901 = vsub.f32 %v873, %v883
        %v902 = vsub.f32 %v874, %v886
        %v903 = vmul.f32 %v899, 1.442695
        %v904 = vpow.pop %v903
        %v905 = vmul.f32 %v900, 1.442695
        %v906 = vpow.pop %v905
        %v907 = vmul.f32 %v901, 1.442695
        %v908 = vpow.pop %v907
        %v909 = vmul.f32 %v902, 1.442695
        %v910 = vpow.pop %v909
        %v911 = vmul.f32 %v892, 0.0
        %v912 = vmul.f32 %v894, 0.0
        %v913 = vmul.f32 %v896, 0.0
        %v914 = vmul.f32 %v898, 0.0
        %v915 = vsel %vm568, %v904, 0.0
        %916 = vadd.xlane.f32.xlu0 %v915
        %v917 = vpop.xlane.xlu0 %916
        %v918 = vsel %vm568, %v906, 0.0
        %919 = vadd.xlane.f32.xlu0 %v918
        %v920 = vpop.xlane.xlu0 %919
        %v921 = vsel %vm568, %v908, 0.0
        %922 = vadd.xlane.f32.xlu0 %v921
        %v923 = vpop.xlane.xlu0 %922
        %v924 = vsel %vm568, %v910, 0.0
        %925 = vadd.xlane.f32.xlu0 %v924
        %v926 = vpop.xlane.xlu0 %925
        %v927 = vadd.f32 %v911, %v917
        %v928 = vadd.f32 %v912, %v920
        %v929 = vadd.f32 %v913, %v923
        %v930 = vadd.f32 %v914, %v926
        %931 = vrot.lane.b32.xlu0 %v556, 64
        %v932 = vpop.permute.xlu0 %931
        %v935 = vsel %vm568, %v904, 0
        %937 = vmatprep.subr.mxu0 0.0
        %938 = vmatpush1.msra.mxu0 %v932
        %939 = vmatprep.subr.mxu0 0.0
        %940 = vmatpush1.msra.mxu0 0.0
        %941 = vmatprep.subr.mxu0 0.0
        %942 = vmatpush1.msra.mxu0 0.0
        %943 = vmatprep.subr.mxu0 0.0
        %944 = vmatpush1.msra.mxu0 0.0
        %945 = vmatprep.subr.mxu0 0.0
        %946 = vmatpush1.msra.mxu0 0.0
        %947 = vmatprep.subr.mxu0 0.0
        %948 = vmatpush1.msra.mxu0 0.0
        %949 = vmatprep.subr.mxu0 0.0
        %950 = vmatpush1.msra.mxu0 0.0
        %951 = vmatprep.subr.mxu0 0.0
        %952 = vmatpush1.msra.mxu0 0.0
        %953 = vmatprep.subr.mxu0 0.0
        %954 = vmatpush1.msra.mxu0 0.0
        %955 = vmatprep.subr.mxu0 0.0
        %956 = vmatpush1.msra.mxu0 0.0
        %957 = vmatprep.subr.mxu0 0.0
        %958 = vmatpush1.msra.mxu0 0.0
        %959 = vmatprep.subr.mxu0 0.0
        %960 = vmatpush1.msra.mxu0 0.0
        %961 = vmatprep.subr.mxu0 0.0
        %962 = vmatpush1.msra.mxu0 0.0
        %963 = vmatprep.subr.mxu0 0.0
        %964 = vmatpush1.msra.mxu0 0.0
        %965 = vmatprep.subr.mxu0 0.0
        %966 = vmatpush1.msra.mxu0 0.0
        %967 = vmatprep.subr.mxu0 0.0
        %968 = vmatpush1.msra.mxu0 0.0
        %969 = vmatprep.subr.mxu0 0.0
        %970 = vmatpush1.msra.mxu0 0.0
        %971 = vmatprep.subr.mxu0 0.0
        %972 = vmatpush1.msra.mxu0 0.0
        %973 = vmatprep.subr.mxu0 0.0
        %974 = vmatpush1.msra.mxu0 0.0
        %975 = vmatprep.subr.mxu0 0.0
        %976 = vmatpush1.msra.mxu0 0.0
        %977 = vmatprep.subr.mxu0 0.0
        %978 = vmatpush1.msra.mxu0 0.0
        %979 = vmatprep.subr.mxu0 0.0
        %980 = vmatpush1.msra.mxu0 0.0
        %981 = vmatprep.subr.mxu0 0.0
        %982 = vmatpush1.msra.mxu0 0.0
        %983 = vmatprep.subr.mxu0 0.0
        %984 = vmatpush1.msra.mxu0 0.0
        %985 = vmatprep.subr.mxu0 0.0
        %986 = vmatpush1.msra.mxu0 0.0
        %987 = vmatprep.subr.mxu0 0.0
        %988 = vmatpush1.msra.mxu0 0.0
        %989 = vmatprep.subr.mxu0 0.0
        %990 = vmatpush1.msra.mxu0 0.0
        %991 = vmatprep.subr.mxu0 0.0
        %992 = vmatpush1.msra.mxu0 0.0
        %993 = vmatprep.subr.mxu0 0.0
        %994 = vmatpush1.msra.mxu0 0.0
        %995 = vmatprep.subr.mxu0 0.0
        %996 = vmatpush1.msra.mxu0 0.0
        %997 = vmatprep.subr.mxu0 0.0
        %998 = vmatpush1.msra.mxu0 0.0
        %999 = vmatprep.subr.mxu0 0.0
        %1000 = vmatpush1.msra.mxu0 0.0
        %1001 = vmatprep.mubr.f32.mxu0 0.0
        %1002 = vmatmul.mubr.f32.gmra.mrb[0].mxu0 %v935
        %v1003 = vpop.f32.mrb[0].mxu0
        %v1004 = vadd.f32 0.0, %v1003
        %v1005 = vpop.f32.mrb[0].mxu0
        %1006 = vdwg.mxu0
        %1007 = vrot.lane.b32.xlu0 %v561, 64
        %v1008 = vpop.permute.xlu0 %1007
        %v1011 = vsel %vm568, %v906, 0
        %1013 = vmatprep.subr.mxu0 0.0
        %1014 = vmatpush1.msra.mxu0 %v1008
        %1015 = vmatprep.subr.mxu0 0.0
        %1016 = vmatpush1.msra.mxu0 0.0
        %1017 = vmatprep.subr.mxu0 0.0
        %1018 = vmatpush1.msra.mxu0 0.0
        %1019 = vmatprep.subr.mxu0 0.0
        %1020 = vmatpush1.msra.mxu0 0.0
        %1021 = vmatprep.subr.mxu0 0.0
        %1022 = vmatpush1.msra.mxu0 0.0
        %1023 = vmatprep.subr.mxu0 0.0
        %1024 = vmatpush1.msra.mxu0 0.0
        %1025 = vmatprep.subr.mxu0 0.0
        %1026 = vmatpush1.msra.mxu0 0.0
        %1027 = vmatprep.subr.mxu0 0.0
        %1028 = vmatpush1.msra.mxu0 0.0
        %1029 = vmatprep.subr.mxu0 0.0
        %1030 = vmatpush1.msra.mxu0 0.0
        %1031 = vmatprep.subr.mxu0 0.0
        %1032 = vmatpush1.msra.mxu0 0.0
        %1033 = vmatprep.subr.mxu0 0.0
        %1034 = vmatpush1.msra.mxu0 0.0
        %1035 = vmatprep.subr.mxu0 0.0
        %1036 = vmatpush1.msra.mxu0 0.0
        %1037 = vmatprep.subr.mxu0 0.0
        %1038 = vmatpush1.msra.mxu0 0.0
        %1039 = vmatprep.subr.mxu0 0.0
        %1040 = vmatpush1.msra.mxu0 0.0
        %1041 = vmatprep.subr.mxu0 0.0
        %1042 = vmatpush1.msra.mxu0 0.0
        %1043 = vmatprep.subr.mxu0 0.0
        %1044 = vmatpush1.msra.mxu0 0.0
        %1045 = vmatprep.subr.mxu0 0.0
        %1046 = vmatpush1.msra.mxu0 0.0
        %1047 = vmatprep.subr.mxu0 0.0
        %1048 = vmatpush1.msra.mxu0 0.0
        %1049 = vmatprep.subr.mxu0 0.0
        %1050 = vmatpush1.msra.mxu0 0.0
        %1051 = vmatprep.subr.mxu0 0.0
        %1052 = vmatpush1.msra.mxu0 0.0
        %1053 = vmatprep.subr.mxu0 0.0
        %1054 = vmatpush1.msra.mxu0 0.0
        %1055 = vmatprep.subr.mxu0 0.0
        %1056 = vmatpush1.msra.mxu0 0.0
        %1057 = vmatprep.subr.mxu0 0.0
        %1058 = vmatpush1.msra.mxu0 0.0
        %1059 = vmatprep.subr.mxu0 0.0
        %1060 = vmatpush1.msra.mxu0 0.0
        %1061 = vmatprep.subr.mxu0 0.0
        %1062 = vmatpush1.msra.mxu0 0.0
        %1063 = vmatprep.subr.mxu0 0.0
        %1064 = vmatpush1.msra.mxu0 0.0
        %1065 = vmatprep.subr.mxu0 0.0
        %1066 = vmatpush1.msra.mxu0 0.0
        %1067 = vmatprep.subr.mxu0 0.0
        %1068 = vmatpush1.msra.mxu0 0.0
        %1069 = vmatprep.subr.mxu0 0.0
        %1070 = vmatpush1.msra.mxu0 0.0
        %1071 = vmatprep.subr.mxu0 0.0
        %1072 = vmatpush1.msra.mxu0 0.0
        %1073 = vmatprep.subr.mxu0 0.0
        %1074 = vmatpush1.msra.mxu0 0.0
        %1075 = vmatprep.subr.mxu0 0.0
        %1076 = vmatpush1.msra.mxu0 0.0
        %1077 = vmatprep.mubr.f32.mxu0 0.0
        %1078 = vmatmul.mubr.f32.gmra.mrb[0].mxu0 %v1011
        %v1079 = vpop.f32.mrb[0].mxu0
        %v1080 = vadd.f32 0.0, %v1079
        %v1081 = vpop.f32.mrb[0].mxu0
        %1082 = vdwg.mxu0
        %1083 = vrot.lane.b32.xlu0 %v563, 64
        %v1084 = vpop.permute.xlu0 %1083
        %v1087 = vsel %vm568, %v908, 0
        %1089 = vmatprep.subr.mxu0 0.0
        %1090 = vmatpush1.msra.mxu0 %v1084
        %1091 = vmatprep.subr.mxu0 0.0
        %1092 = vmatpush1.msra.mxu0 0.0
        %1093 = vmatprep.subr.mxu0 0.0
        %1094 = vmatpush1.msra.mxu0 0.0
        %1095 = vmatprep.subr.mxu0 0.0
        %1096 = vmatpush1.msra.mxu0 0.0
        %1097 = vmatprep.subr.mxu0 0.0
        %1098 = vmatpush1.msra.mxu0 0.0
        %1099 = vmatprep.subr.mxu0 0.0
        %1100 = vmatpush1.msra.mxu0 0.0
        %1101 = vmatprep.subr.mxu0 0.0
        %1102 = vmatpush1.msra.mxu0 0.0
        %1103 = vmatprep.subr.mxu0 0.0
        %1104 = vmatpush1.msra.mxu0 0.0
        %1105 = vmatprep.subr.mxu0 0.0
        %1106 = vmatpush1.msra.mxu0 0.0
        %1107 = vmatprep.subr.mxu0 0.0
        %1108 = vmatpush1.msra.mxu0 0.0
        %1109 = vmatprep.subr.mxu0 0.0
        %1110 = vmatpush1.msra.mxu0 0.0
        %1111 = vmatprep.subr.mxu0 0.0
        %1112 = vmatpush1.msra.mxu0 0.0
        %1113 = vmatprep.subr.mxu0 0.0
        %1114 = vmatpush1.msra.mxu0 0.0
        %1115 = vmatprep.subr.mxu0 0.0
        %1116 = vmatpush1.msra.mxu0 0.0
        %1117 = vmatprep.subr.mxu0 0.0
        %1118 = vmatpush1.msra.mxu0 0.0
        %1119 = vmatprep.subr.mxu0 0.0
        %1120 = vmatpush1.msra.mxu0 0.0
        %1121 = vmatprep.subr.mxu0 0.0
        %1122 = vmatpush1.msra.mxu0 0.0
        %1123 = vmatprep.subr.mxu0 0.0
        %1124 = vmatpush1.msra.mxu0 0.0
        %1125 = vmatprep.subr.mxu0 0.0
        %1126 = vmatpush1.msra.mxu0 0.0
        %1127 = vmatprep.subr.mxu0 0.0
        %1128 = vmatpush1.msra.mxu0 0.0
        %1129 = vmatprep.subr.mxu0 0.0
        %1130 = vmatpush1.msra.mxu0 0.0
        %1131 = vmatprep.subr.mxu0 0.0
        %1132 = vmatpush1.msra.mxu0 0.0
        %1133 = vmatprep.subr.mxu0 0.0
        %1134 = vmatpush1.msra.mxu0 0.0
        %1135 = vmatprep.subr.mxu0 0.0
        %1136 = vmatpush1.msra.mxu0 0.0
        %1137 = vmatprep.subr.mxu0 0.0
        %1138 = vmatpush1.msra.mxu0 0.0
        %1139 = vmatprep.subr.mxu0 0.0
        %1140 = vmatpush1.msra.mxu0 0.0
        %1141 = vmatprep.subr.mxu0 0.0
        %1142 = vmatpush1.msra.mxu0 0.0
        %1143 = vmatprep.subr.mxu0 0.0
        %1144 = vmatpush1.msra.mxu0 0.0
        %1145 = vmatprep.subr.mxu0 0.0
        %1146 = vmatpush1.msra.mxu0 0.0
        %1147 = vmatprep.subr.mxu0 0.0
        %1148 = vmatpush1.msra.mxu0 0.0
        %1149 = vmatprep.subr.mxu0 0.0
        %1150 = vmatpush1.msra.mxu0 0.0
        %1151 = vmatprep.subr.mxu0 0.0
        %1152 = vmatpush1.msra.mxu0 0.0
        %1153 = vmatprep.mubr.f32.mxu0 0.0
        %1154 = vmatmul.mubr.f32.gmra.mrb[0].mxu0 %v1087
        %v1155 = vpop.f32.mrb[0].mxu0
        %v1156 = vadd.f32 0.0, %v1155
        %v1157 = vpop.f32.mrb[0].mxu0
        %1158 = vdwg.mxu0
        %1159 = vrot.lane.b32.xlu0 %v565, 64
        %v1160 = vpop.permute.xlu0 %1159
        %v1163 = vsel %vm568, %v910, 0
        %1165 = vmatprep.subr.mxu0 0.0
        %1166 = vmatpush1.msra.mxu0 %v1160
        %1167 = vmatprep.subr.mxu0 0.0
        %1168 = vmatpush1.msra.mxu0 0.0
        %1169 = vmatprep.subr.mxu0 0.0
        %1170 = vmatpush1.msra.mxu0 0.0
        %1171 = vmatprep.subr.mxu0 0.0
        %1172 = vmatpush1.msra.mxu0 0.0
        %1173 = vmatprep.subr.mxu0 0.0
        %1174 = vmatpush1.msra.mxu0 0.0
        %1175 = vmatprep.subr.mxu0 0.0
        %1176 = vmatpush1.msra.mxu0 0.0
        %1177 = vmatprep.subr.mxu0 0.0
        %1178 = vmatpush1.msra.mxu0 0.0
        %1179 = vmatprep.subr.mxu0 0.0
        %1180 = vmatpush1.msra.mxu0 0.0
        %1181 = vmatprep.subr.mxu0 0.0
        %1182 = vmatpush1.msra.mxu0 0.0
        %1183 = vmatprep.subr.mxu0 0.0
        %1184 = vmatpush1.msra.mxu0 0.0
        %1185 = vmatprep.subr.mxu0 0.0
        %1186 = vmatpush1.msra.mxu0 0.0
        %1187 = vmatprep.subr.mxu0 0.0
        %1188 = vmatpush1.msra.mxu0 0.0
        %1189 = vmatprep.subr.mxu0 0.0
        %1190 = vmatpush1.msra.mxu0 0.0
        %1191 = vmatprep.subr.mxu0 0.0
        %1192 = vmatpush1.msra.mxu0 0.0
        %1193 = vmatprep.subr.mxu0 0.0
        %1194 = vmatpush1.msra.mxu0 0.0
        %1195 = vmatprep.subr.mxu0 0.0
        %1196 = vmatpush1.msra.mxu0 0.0
        %1197 = vmatprep.subr.mxu0 0.0
        %1198 = vmatpush1.msra.mxu0 0.0
        %1199 = vmatprep.subr.mxu0 0.0
        %1200 = vmatpush1.msra.mxu0 0.0
        %1201 = vmatprep.subr.mxu0 0.0
        %1202 = vmatpush1.msra.mxu0 0.0
        %1203 = vmatprep.subr.mxu0 0.0
        %1204 = vmatpush1.msra.mxu0 0.0
        %1205 = vmatprep.subr.mxu0 0.0
        %1206 = vmatpush1.msra.mxu0 0.0
        %1207 = vmatprep.subr.mxu0 0.0
        %1208 = vmatpush1.msra.mxu0 0.0
        %1209 = vmatprep.subr.mxu0 0.0
        %1210 = vmatpush1.msra.mxu0 0.0
        %1211 = vmatprep.subr.mxu0 0.0
        %1212 = vmatpush1.msra.mxu0 0.0
        %1213 = vmatprep.subr.mxu0 0.0
        %1214 = vmatpush1.msra.mxu0 0.0
        %1215 = vmatprep.subr.mxu0 0.0
        %1216 = vmatpush1.msra.mxu0 0.0
        %1217 = vmatprep.subr.mxu0 0.0
        %1218 = vmatpush1.msra.mxu0 0.0
        %1219 = vmatprep.subr.mxu0 0.0
        %1220 = vmatpush1.msra.mxu0 0.0
        %1221 = vmatprep.subr.mxu0 0.0
        %1222 = vmatpush1.msra.mxu0 0.0
        %1223 = vmatprep.subr.mxu0 0.0
        %1224 = vmatpush1.msra.mxu0 0.0
        %1225 = vmatprep.subr.mxu0 0.0
        %1226 = vmatpush1.msra.mxu0 0.0
        %1227 = vmatprep.subr.mxu0 0.0
        %1228 = vmatpush1.msra.mxu0 0.0
        %1229 = vmatprep.mubr.f32.mxu0 0.0
        %1230 = vmatmul.mubr.f32.gmra.mrb[0].mxu0 %v1163
        %v1231 = vpop.f32.mrb[0].mxu0
        %v1232 = vadd.f32 0.0, %v1231
        %v1233 = vpop.f32.mrb[0].mxu0
        %1234 = vdwg.mxu0
        %v1235 = vadd.f32 %v911, %v1004
        %v1236 = vadd.f32 %v912, %v1080
        %v1237 = vadd.f32 %v913, %v1156
        %v1238 = vadd.f32 %v914, %v1232
        %v1239 = vrcp.pop %v927
        %v1240 = vrcp.pop %v928
        %v1241 = vrcp.pop %v929
        %v1242 = vrcp.pop %v930
        %v1243 = vmul.f32 %v1235, %v1239
        %v1244 = vmul.f32 %v1236, %v1240
        %v1245 = vmul.f32 %v1237, %v1241
        %v1246 = vmul.f32 %v1238, %v1242
        %1248 = vrot.lane.b32.xlu0 %v1244, 8
        %v1249 = vpop.permute.xlu0 %1248
        %1252 = vrot.lane.b32.xlu0 %v1245, 16
        %v1253 = vpop.permute.xlu0 %1252
        %1256 = vrot.lane.b32.xlu0 %v1246, 24
        %v1257 = vpop.permute.xlu0 %1256
        %v1259 = vsel %vm568, %v1243, %v1249
        %vm1260 = vcmask 130048
        %v1261 = vsel %vm1260, %v1259, %v1253
        %vm1262 = vcmask 195584
        %v1263 = vsel %vm1262, %v1261, %v1257
        %v1264 = vld [vmem:[%s5] sm:$0xff]
        %v1265 = vld [vmem:[%s5 + $0x8] sm:$0xff]
        %v1266 = vld [vmem:[%s5 + $0x10] sm:$0xff]
        %v1267 = vld [vmem:[%s5 + $0x18] sm:$0xff]
        %v1268 = vld [vmem:[%s6] sm:$0x1]
        %v1270 = vlaneseq
        %v1271 = vshrl.u32 %v1270, 7
        %v1272 = vsub.s32 0, %v1271
        %v1273 = vrot.slane %v1268, %v1272
        %v1276 = vsel %vm439, %v1263, 0
        %1278 = vmatprep.subr.mxu0 0.0
        %1279 = vmatpush1.msra.mxu0 %v1264
        %1280 = vmatprep.subr.mxu0 0.0
        %1281 = vmatpush1.msra.mxu0 %v1265
        %1282 = vmatprep.subr.mxu0 0.0
        %1283 = vmatpush1.msra.mxu0 %v1266
        %1284 = vmatprep.subr.mxu0 0.0
        %1285 = vmatpush1.msra.mxu0 %v1267
        %1286 = vmatprep.subr.mxu0 0.0
        %1287 = vmatpush1.msra.mxu0 0.0
        %1288 = vmatprep.subr.mxu0 0.0
        %1289 = vmatpush1.msra.mxu0 0.0
        %1290 = vmatprep.subr.mxu0 0.0
        %1291 = vmatpush1.msra.mxu0 0.0
        %1292 = vmatprep.subr.mxu0 0.0
        %1293 = vmatpush1.msra.mxu0 0.0
        %1294 = vmatprep.subr.mxu0 0.0
        %1295 = vmatpush1.msra.mxu0 0.0
        %1296 = vmatprep.subr.mxu0 0.0
        %1297 = vmatpush1.msra.mxu0 0.0
        %1298 = vmatprep.subr.mxu0 0.0
        %1299 = vmatpush1.msra.mxu0 0.0
        %1300 = vmatprep.subr.mxu0 0.0
        %1301 = vmatpush1.msra.mxu0 0.0
        %1302 = vmatprep.subr.mxu0 0.0
        %1303 = vmatpush1.msra.mxu0 0.0
        %1304 = vmatprep.subr.mxu0 0.0
        %1305 = vmatpush1.msra.mxu0 0.0
        %1306 = vmatprep.subr.mxu0 0.0
        %1307 = vmatpush1.msra.mxu0 0.0
        %1308 = vmatprep.subr.mxu0 0.0
        %1309 = vmatpush1.msra.mxu0 0.0
        %1310 = vmatprep.subr.mxu0 0.0
        %1311 = vmatpush1.msra.mxu0 0.0
        %1312 = vmatprep.subr.mxu0 0.0
        %1313 = vmatpush1.msra.mxu0 0.0
        %1314 = vmatprep.subr.mxu0 0.0
        %1315 = vmatpush1.msra.mxu0 0.0
        %1316 = vmatprep.subr.mxu0 0.0
        %1317 = vmatpush1.msra.mxu0 0.0
        %1318 = vmatprep.subr.mxu0 0.0
        %1319 = vmatpush1.msra.mxu0 0.0
        %1320 = vmatprep.subr.mxu0 0.0
        %1321 = vmatpush1.msra.mxu0 0.0
        %1322 = vmatprep.subr.mxu0 0.0
        %1323 = vmatpush1.msra.mxu0 0.0
        %1324 = vmatprep.subr.mxu0 0.0
        %1325 = vmatpush1.msra.mxu0 0.0
        %1326 = vmatprep.subr.mxu0 0.0
        %1327 = vmatpush1.msra.mxu0 0.0
        %1328 = vmatprep.subr.mxu0 0.0
        %1329 = vmatpush1.msra.mxu0 0.0
        %1330 = vmatprep.subr.mxu0 0.0
        %1331 = vmatpush1.msra.mxu0 0.0
        %1332 = vmatprep.subr.mxu0 0.0
        %1333 = vmatpush1.msra.mxu0 0.0
        %1334 = vmatprep.subr.mxu0 0.0
        %1335 = vmatpush1.msra.mxu0 0.0
        %1336 = vmatprep.subr.mxu0 0.0
        %1337 = vmatpush1.msra.mxu0 0.0
        %1338 = vmatprep.subr.mxu0 0.0
        %1339 = vmatpush1.msra.mxu0 0.0
        %1340 = vmatprep.subr.mxu0 0.0
        %1341 = vmatpush1.msra.mxu0 0.0
        %1342 = vmatprep.mubr.f32.mxu0 0.0
        %1343 = vmatmul.mubr.f32.gmra.mrb[0].mxu0 %v1276
        %v1344 = vpop.f32.mrb[0].mxu0
        %v1345 = vadd.f32 %v1273, %v1344
        %v1346 = vpop.f32.mrb[0].mxu0
        %1347 = vdwg.mxu0
        %v1348 = vadd.f32 %v436, %v1345
        %v1349 = vld [vmem:[%s7] sm:$0x1]
        %v1350 = vld [vmem:[%s8] sm:$0x1]
        %v1351 = vsel %vm439, %v1348, 0.0
        %1352 = vadd.xlane.f32.xlu0 %v1351
        %v1353 = vpop.xlane.xlu0 %1352
        %v1354 = vmul.f32 %v1353, %v443
        %v1355 = vsub.f32 %v1348, %v1354
        %v1356 = vmul.f32 %v1355, %v1355
        %v1357 = vsel %vm439, %v1356, 0.0
        %1358 = vadd.xlane.f32.xlu0 %v1357
        %v1359 = vpop.xlane.xlu0 %1358
        %v1360 = vmul.f32 %v1359, 0.032258064
        %v1361 = vrsqrt.pop %v1360
        %v1362 = vmul.f32 %v1360, %v1361
        %vm1363 = vcmp.eq.f32.partialorder %v1360, inf
        %v1364 = vsel %vm1363, %v1360, %v1362
        %vm1365 = vcmp.eq.f32.partialorder %v1360, 0.0
        %v1366 = vand.u32 %v1360, 2147483648
        %v1367 = vsel %vm1365, %v1366, %v1364
        %v1368 = vadd.f32 %v1367, 1e-06
        %v1369 = vrcp.pop %v1368
        %v1371 = vlaneseq
        %v1372 = vshrl.u32 %v1371, 7
        %v1373 = vsub.s32 0, %v1372
        %v1374 = vrot.slane %v1349, %v1373
        %v1376 = vmul.f32 %v1374, %v1355
        %v1377 = vmul.f32 %v1376, %v1369
        %v1379 = vlaneseq
        %v1380 = vshrl.u32 %v1379, 7
        %v1381 = vsub.s32 0, %v1380
        %v1382 = vrot.slane %v1350, %v1381
        %v1384 = vadd.f32 %v1377, %v1382
        %v1385 = vld [vmem:[%s9] sm:$0xff]
        %v1386 = vld [vmem:[%s9 + $0x8] sm:$0xff]
        %v1387 = vld [vmem:[%s9 + $0x10] sm:$0xff]
        %v1388 = vld [vmem:[%s9 + $0x18] sm:$0xff]
        %v1389 = vld [vmem:[%s9 + $0x20] sm:$0xff]
        %v1390 = vld [vmem:[%s9 + $0x28] sm:$0xff]
        %v1391 = vld [vmem:[%s9 + $0x30] sm:$0xff]
        %v1392 = vld [vmem:[%s9 + $0x38] sm:$0xff]
        %v1393 = vld [vmem:[%s9 + $0x40] sm:$0xff]
        %v1394 = vld [vmem:[%s9 + $0x48] sm:$0xff]
        %v1395 = vld [vmem:[%s9 + $0x50] sm:$0xff]
        %v1396 = vld [vmem:[%s9 + $0x58] sm:$0xff]
        %v1397 = vld [vmem:[%s9 + $0x60] sm:$0xff]
        %v1398 = vld [vmem:[%s9 + $0x68] sm:$0xff]
        %v1399 = vld [vmem:[%s9 + $0x70] sm:$0xff]
        %v1400 = vld [vmem:[%s9 + $0x78] sm:$0xff]
        %v1401 = vld [vmem:[%s9 + $0x80] sm:$0xff]
        %v1402 = vld [vmem:[%s9 + $0x88] sm:$0xff]
        %v1403 = vld [vmem:[%s9 + $0x90] sm:$0xff]
        %v1404 = vld [vmem:[%s9 + $0x98] sm:$0xff]
        %v1405 = vld [vmem:[%s9 + $0xa0] sm:$0xff]
        %v1406 = vld [vmem:[%s9 + $0xa8] sm:$0xff]
        %v1407 = vld [vmem:[%s9 + $0xb0] sm:$0xff]
        %v1408 = vld [vmem:[%s9 + $0xb8] sm:$0xff]
        %v1409 = vld [vmem:[%s9 + $0xc0] sm:$0xff]
        %v1410 = vld [vmem:[%s9 + $0xc8] sm:$0xff]
        %v1411 = vld [vmem:[%s9 + $0xd0] sm:$0xff]
        %v1412 = vld [vmem:[%s9 + $0xd8] sm:$0xff]
        %v1413 = vld [vmem:[%s9 + $0xe0] sm:$0xff]
        %v1414 = vld [vmem:[%s9 + $0xe8] sm:$0xff]
        %v1415 = vld [vmem:[%s9 + $0xf0] sm:$0xff]
        %v1416 = vld [vmem:[%s9 + $0xf8] sm:$0xff]
        %v1417 = vld [vmem:[%s10] sm:$0xff]
        %v1419 = vlaneseq
        %v1420 = vshrl.u32 %v1419, 7
        %v1421 = vsub.s32 0, %v1420
        %v1422 = vrot.slane %v1417, %v1421
        %v1423 = vlaneseq
        %v1424 = vshrl.u32 %v1423, 7
        %v1425 = vsub.s32 1, %v1424
        %v1426 = vrot.slane %v1417, %v1425
        %v1427 = vlaneseq
        %v1428 = vshrl.u32 %v1427, 7
        %v1429 = vsub.s32 2, %v1428
        %v1430 = vrot.slane %v1417, %v1429
        %v1431 = vlaneseq
        %v1432 = vshrl.u32 %v1431, 7
        %v1433 = vsub.s32 3, %v1432
        %v1434 = vrot.slane %v1417, %v1433
        %v1435 = vlaneseq
        %v1436 = vshrl.u32 %v1435, 7
        %v1437 = vsub.s32 4, %v1436
        %v1438 = vrot.slane %v1417, %v1437
        %v1439 = vlaneseq
        %v1440 = vshrl.u32 %v1439, 7
        %v1441 = vsub.s32 5, %v1440
        %v1442 = vrot.slane %v1417, %v1441
        %v1443 = vlaneseq
        %v1444 = vshrl.u32 %v1443, 7
        %v1445 = vsub.s32 6, %v1444
        %v1446 = vrot.slane %v1417, %v1445
        %v1447 = vlaneseq
        %v1448 = vshrl.u32 %v1447, 7
        %v1449 = vsub.s32 7, %v1448
        %v1450 = vrot.slane %v1417, %v1449
        %v1460 = vsel %vm439, %v1384, 0
        %1462 = vmatprep.subr.mxu0 %v1386
        %1463 = vmatpush1.msra.mxu0 %v1385
        %1464 = vmatprep.subr.mxu0 %v1394
        %1465 = vmatpush1.msra.mxu0 %v1393
        %1466 = vmatprep.subr.mxu0 %v1402
        %1467 = vmatpush1.msra.mxu0 %v1401
        %1468 = vmatprep.subr.mxu0 %v1410
        %1469 = vmatpush1.msra.mxu0 %v1409
        %1470 = vmatprep.subr.mxu0 0.0
        %1471 = vmatpush1.msra.mxu0 0.0
        %1472 = vmatprep.subr.mxu0 0.0
        %1473 = vmatpush1.msra.mxu0 0.0
        %1474 = vmatprep.subr.mxu0 0.0
        %1475 = vmatpush1.msra.mxu0 0.0
        %1476 = vmatprep.subr.mxu0 0.0
        %1477 = vmatpush1.msra.mxu0 0.0
        %1478 = vmatprep.subr.mxu0 0.0
        %1479 = vmatpush1.msra.mxu0 0.0
        %1480 = vmatprep.subr.mxu0 0.0
        %1481 = vmatpush1.msra.mxu0 0.0
        %1482 = vmatprep.subr.mxu0 0.0
        %1483 = vmatpush1.msra.mxu0 0.0
        %1484 = vmatprep.subr.mxu0 0.0
        %1485 = vmatpush1.msra.mxu0 0.0
        %1486 = vmatprep.subr.mxu0 0.0
        %1487 = vmatpush1.msra.mxu0 0.0
        %1488 = vmatprep.subr.mxu0 0.0
        %1489 = vmatpush1.msra.mxu0 0.0
        %1490 = vmatprep.subr.mxu0 0.0
        %1491 = vmatpush1.msra.mxu0 0.0
        %1492 = vmatprep.subr.mxu0 0.0
        %1493 = vmatpush1.msra.mxu0 0.0
        %1494 = vmatprep.subr.mxu0 0.0
        %1495 = vmatpush1.msra.mxu0 0.0
        %1496 = vmatprep.subr.mxu0 0.0
        %1497 = vmatpush1.msra.mxu0 0.0
        %1498 = vmatprep.subr.mxu0 0.0
        %1499 = vmatpush1.msra.mxu0 0.0
        %1500 = vmatprep.subr.mxu0 0.0
        %1501 = vmatpush1.msra.mxu0 0.0
        %1502 = vmatprep.subr.mxu0 0.0
        %1503 = vmatpush1.msra.mxu0 0.0
        %1504 = vmatprep.subr.mxu0 0.0
        %1505 = vmatpush1.msra.mxu0 0.0
        %1506 = vmatprep.subr.mxu0 0.0
        %1507 = vmatpush1.msra.mxu0 0.0
        %1508 = vmatprep.subr.mxu0 0.0
        %1509 = vmatpush1.msra.mxu0 0.0
        %1510 = vmatprep.subr.mxu0 0.0
        %1511 = vmatpush1.msra.mxu0 0.0
        %1512 = vmatprep.subr.mxu0 0.0
        %1513 = vmatpush1.msra.mxu0 0.0
        %1514 = vmatprep.subr.mxu0 0.0
        %1515 = vmatpush1.msra.mxu0 0.0
        %1516 = vmatprep.subr.mxu0 0.0
        %1517 = vmatpush1.msra.mxu0 0.0
        %1518 = vmatprep.subr.mxu0 0.0
        %1519 = vmatpush1.msra.mxu0 0.0
        %1520 = vmatprep.subr.mxu0 0.0
        %1521 = vmatpush1.msra.mxu0 0.0
        %1522 = vmatprep.subr.mxu0 0.0
        %1523 = vmatpush1.msra.mxu0 0.0
        %1524 = vmatprep.subr.mxu0 0.0
        %1525 = vmatpush1.msra.mxu0 0.0
        %1526 = vmatprep.mubr.f32.mxu0 0.0
        %1527 = vmatmul.mubr.f32.gmra.mrb[0].mxu0 %v1460
        %v1528 = vpop.f32.mrb[0].mxu0
        %v1529 = vadd.f32 %v1422, %v1528
        %v1530 = vpop.f32.mrb[0].mxu0
        %v1531 = vadd.f32 %v1426, %v1530
        %1532 = vdwg.mxu0
        %1533 = vmatprep.subr.mxu0 %v1388
        %1534 = vmatpush1.msra.mxu0 %v1387
        %1535 = vmatprep.subr.mxu0 %v1396
        %1536 = vmatpush1.msra.mxu0 %v1395
        %1537 = vmatprep.subr.mxu0 %v1404
        %1538 = vmatpush1.msra.mxu0 %v1403
        %1539 = vmatprep.subr.mxu0 %v1412
        %1540 = vmatpush1.msra.mxu0 %v1411
        %1541 = vmatprep.subr.mxu0 0.0
        %1542 = vmatpush1.msra.mxu0 0.0
        %1543 = vmatprep.subr.mxu0 0.0
        %1544 = vmatpush1.msra.mxu0 0.0
        %1545 = vmatprep.subr.mxu0 0.0
        %1546 = vmatpush1.msra.mxu0 0.0
        %1547 = vmatprep.subr.mxu0 0.0
        %1548 = vmatpush1.msra.mxu0 0.0
        %1549 = vmatprep.subr.mxu0 0.0
        %1550 = vmatpush1.msra.mxu0 0.0
        %1551 = vmatprep.subr.mxu0 0.0
        %1552 = vmatpush1.msra.mxu0 0.0
        %1553 = vmatprep.subr.mxu0 0.0
        %1554 = vmatpush1.msra.mxu0 0.0
        %1555 = vmatprep.subr.mxu0 0.0
        %1556 = vmatpush1.msra.mxu0 0.0
        %1557 = vmatprep.subr.mxu0 0.0
        %1558 = vmatpush1.msra.mxu0 0.0
        %1559 = vmatprep.subr.mxu0 0.0
        %1560 = vmatpush1.msra.mxu0 0.0
        %1561 = vmatprep.subr.mxu0 0.0
        %1562 = vmatpush1.msra.mxu0 0.0
        %1563 = vmatprep.subr.mxu0 0.0
        %1564 = vmatpush1.msra.mxu0 0.0
        %1565 = vmatprep.subr.mxu0 0.0
        %1566 = vmatpush1.msra.mxu0 0.0
        %1567 = vmatprep.subr.mxu0 0.0
        %1568 = vmatpush1.msra.mxu0 0.0
        %1569 = vmatprep.subr.mxu0 0.0
        %1570 = vmatpush1.msra.mxu0 0.0
        %1571 = vmatprep.subr.mxu0 0.0
        %1572 = vmatpush1.msra.mxu0 0.0
        %1573 = vmatprep.subr.mxu0 0.0
        %1574 = vmatpush1.msra.mxu0 0.0
        %1575 = vmatprep.subr.mxu0 0.0
        %1576 = vmatpush1.msra.mxu0 0.0
        %1577 = vmatprep.subr.mxu0 0.0
        %1578 = vmatpush1.msra.mxu0 0.0
        %1579 = vmatprep.subr.mxu0 0.0
        %1580 = vmatpush1.msra.mxu0 0.0
        %1581 = vmatprep.subr.mxu0 0.0
        %1582 = vmatpush1.msra.mxu0 0.0
        %1583 = vmatprep.subr.mxu0 0.0
        %1584 = vmatpush1.msra.mxu0 0.0
        %1585 = vmatprep.subr.mxu0 0.0
        %1586 = vmatpush1.msra.mxu0 0.0
        %1587 = vmatprep.subr.mxu0 0.0
        %1588 = vmatpush1.msra.mxu0 0.0
        %1589 = vmatprep.subr.mxu0 0.0
        %1590 = vmatpush1.msra.mxu0 0.0
        %1591 = vmatprep.subr.mxu0 0.0
        %1592 = vmatpush1.msra.mxu0 0.0
        %1593 = vmatprep.subr.mxu0 0.0
        %1594 = vmatpush1.msra.mxu0 0.0
        %1595 = vmatprep.subr.mxu0 0.0
        %1596 = vmatpush1.msra.mxu0 0.0
        %1597 = vmatprep.mubr.f32.mxu0 0.0
        %1598 = vmatmul.mubr.f32.gmra.mrb[0].mxu0 %v1460
        %v1599 = vpop.f32.mrb[0].mxu0
        %v1600 = vadd.f32 %v1430, %v1599
        %v1601 = vpop.f32.mrb[0].mxu0
        %v1602 = vadd.f32 %v1434, %v1601
        %1603 = vdwg.mxu0
        %1604 = vmatprep.subr.mxu0 %v1390
        %1605 = vmatpush1.msra.mxu0 %v1389
        %1606 = vmatprep.subr.mxu0 %v1398
        %1607 = vmatpush1.msra.mxu0 %v1397
        %1608 = vmatprep.subr.mxu0 %v1406
        %1609 = vmatpush1.msra.mxu0 %v1405
        %1610 = vmatprep.subr.mxu0 %v1414
        %1611 = vmatpush1.msra.mxu0 %v1413
        %1612 = vmatprep.subr.mxu0 0.0
        %1613 = vmatpush1.msra.mxu0 0.0
        %1614 = vmatprep.subr.mxu0 0.0
        %1615 = vmatpush1.msra.mxu0 0.0
        %1616 = vmatprep.subr.mxu0 0.0
        %1617 = vmatpush1.msra.mxu0 0.0
        %1618 = vmatprep.subr.mxu0 0.0
        %1619 = vmatpush1.msra.mxu0 0.0
        %1620 = vmatprep.subr.mxu0 0.0
        %1621 = vmatpush1.msra.mxu0 0.0
        %1622 = vmatprep.subr.mxu0 0.0
        %1623 = vmatpush1.msra.mxu0 0.0
        %1624 = vmatprep.subr.mxu0 0.0
        %1625 = vmatpush1.msra.mxu0 0.0
        %1626 = vmatprep.subr.mxu0 0.0
        %1627 = vmatpush1.msra.mxu0 0.0
        %1628 = vmatprep.subr.mxu0 0.0
        %1629 = vmatpush1.msra.mxu0 0.0
        %1630 = vmatprep.subr.mxu0 0.0
        %1631 = vmatpush1.msra.mxu0 0.0
        %1632 = vmatprep.subr.mxu0 0.0
        %1633 = vmatpush1.msra.mxu0 0.0
        %1634 = vmatprep.subr.mxu0 0.0
        %1635 = vmatpush1.msra.mxu0 0.0
        %1636 = vmatprep.subr.mxu0 0.0
        %1637 = vmatpush1.msra.mxu0 0.0
        %1638 = vmatprep.subr.mxu0 0.0
        %1639 = vmatpush1.msra.mxu0 0.0
        %1640 = vmatprep.subr.mxu0 0.0
        %1641 = vmatpush1.msra.mxu0 0.0
        %1642 = vmatprep.subr.mxu0 0.0
        %1643 = vmatpush1.msra.mxu0 0.0
        %1644 = vmatprep.subr.mxu0 0.0
        %1645 = vmatpush1.msra.mxu0 0.0
        %1646 = vmatprep.subr.mxu0 0.0
        %1647 = vmatpush1.msra.mxu0 0.0
        %1648 = vmatprep.subr.mxu0 0.0
        %1649 = vmatpush1.msra.mxu0 0.0
        %1650 = vmatprep.subr.mxu0 0.0
        %1651 = vmatpush1.msra.mxu0 0.0
        %1652 = vmatprep.subr.mxu0 0.0
        %1653 = vmatpush1.msra.mxu0 0.0
        %1654 = vmatprep.subr.mxu0 0.0
        %1655 = vmatpush1.msra.mxu0 0.0
        %1656 = vmatprep.subr.mxu0 0.0
        %1657 = vmatpush1.msra.mxu0 0.0
        %1658 = vmatprep.subr.mxu0 0.0
        %1659 = vmatpush1.msra.mxu0 0.0
        %1660 = vmatprep.subr.mxu0 0.0
        %1661 = vmatpush1.msra.mxu0 0.0
        %1662 = vmatprep.subr.mxu0 0.0
        %1663 = vmatpush1.msra.mxu0 0.0
        %1664 = vmatprep.subr.mxu0 0.0
        %1665 = vmatpush1.msra.mxu0 0.0
        %1666 = vmatprep.subr.mxu0 0.0
        %1667 = vmatpush1.msra.mxu0 0.0
        %1668 = vmatprep.mubr.f32.mxu0 0.0
        %1669 = vmatmul.mubr.f32.gmra.mrb[0].mxu0 %v1460
        %v1670 = vpop.f32.mrb[0].mxu0
        %v1671 = vadd.f32 %v1438, %v1670
        %v1672 = vpop.f32.mrb[0].mxu0
        %v1673 = vadd.f32 %v1442, %v1672
        %1674 = vdwg.mxu0
        %1675 = vmatprep.subr.mxu0 %v1392
        %1676 = vmatpush1.msra.mxu0 %v1391
        %1677 = vmatprep.subr.mxu0 %v1400
        %1678 = vmatpush1.msra.mxu0 %v1399
        %1679 = vmatprep.subr.mxu0 %v1408
        %1680 = vmatpush1.msra.mxu0 %v1407
        %1681 = vmatprep.subr.mxu0 %v1416
        %1682 = vmatpush1.msra.mxu0 %v1415
        %1683 = vmatprep.subr.mxu0 0.0
        %1684 = vmatpush1.msra.mxu0 0.0
        %1685 = vmatprep.subr.mxu0 0.0
        %1686 = vmatpush1.msra.mxu0 0.0
        %1687 = vmatprep.subr.mxu0 0.0
        %1688 = vmatpush1.msra.mxu0 0.0
        %1689 = vmatprep.subr.mxu0 0.0
        %1690 = vmatpush1.msra.mxu0 0.0
        %1691 = vmatprep.subr.mxu0 0.0
        %1692 = vmatpush1.msra.mxu0 0.0
        %1693 = vmatprep.subr.mxu0 0.0
        %1694 = vmatpush1.msra.mxu0 0.0
        %1695 = vmatprep.subr.mxu0 0.0
        %1696 = vmatpush1.msra.mxu0 0.0
        %1697 = vmatprep.subr.mxu0 0.0
        %1698 = vmatpush1.msra.mxu0 0.0
        %1699 = vmatprep.subr.mxu0 0.0
        %1700 = vmatpush1.msra.mxu0 0.0
        %1701 = vmatprep.subr.mxu0 0.0
        %1702 = vmatpush1.msra.mxu0 0.0
        %1703 = vmatprep.subr.mxu0 0.0
        %1704 = vmatpush1.msra.mxu0 0.0
        %1705 = vmatprep.subr.mxu0 0.0
        %1706 = vmatpush1.msra.mxu0 0.0
        %1707 = vmatprep.subr.mxu0 0.0
        %1708 = vmatpush1.msra.mxu0 0.0
        %1709 = vmatprep.subr.mxu0 0.0
        %1710 = vmatpush1.msra.mxu0 0.0
        %1711 = vmatprep.subr.mxu0 0.0
        %1712 = vmatpush1.msra.mxu0 0.0
        %1713 = vmatprep.subr.mxu0 0.0
        %1714 = vmatpush1.msra.mxu0 0.0
        %1715 = vmatprep.subr.mxu0 0.0
        %1716 = vmatpush1.msra.mxu0 0.0
        %1717 = vmatprep.subr.mxu0 0.0
        %1718 = vmatpush1.msra.mxu0 0.0
        %1719 = vmatprep.subr.mxu0 0.0
        %1720 = vmatpush1.msra.mxu0 0.0
        %1721 = vmatprep.subr.mxu0 0.0
        %1722 = vmatpush1.msra.mxu0 0.0
        %1723 = vmatprep.subr.mxu0 0.0
        %1724 = vmatpush1.msra.mxu0 0.0
        %1725 = vmatprep.subr.mxu0 0.0
        %1726 = vmatpush1.msra.mxu0 0.0
        %1727 = vmatprep.subr.mxu0 0.0
        %1728 = vmatpush1.msra.mxu0 0.0
        %1729 = vmatprep.subr.mxu0 0.0
        %1730 = vmatpush1.msra.mxu0 0.0
        %1731 = vmatprep.subr.mxu0 0.0
        %1732 = vmatpush1.msra.mxu0 0.0
        %1733 = vmatprep.subr.mxu0 0.0
        %1734 = vmatpush1.msra.mxu0 0.0
        %1735 = vmatprep.subr.mxu0 0.0
        %1736 = vmatpush1.msra.mxu0 0.0
        %1737 = vmatprep.subr.mxu0 0.0
        %1738 = vmatpush1.msra.mxu0 0.0
        %1739 = vmatprep.mubr.f32.mxu0 0.0
        %1740 = vmatmul.mubr.f32.gmra.mrb[0].mxu0 %v1460
        %v1741 = vpop.f32.mrb[0].mxu0
        %v1742 = vadd.f32 %v1446, %v1741
        %v1743 = vpop.f32.mrb[0].mxu0
        %v1744 = vadd.f32 %v1450, %v1743
        %1745 = vdwg.mxu0
        %v1746 = vmax.f32 %v1529, 0.0
        %v1747 = vmax.f32 %v1531, 0.0
        %v1748 = vmax.f32 %v1600, 0.0
        %v1749 = vmax.f32 %v1602, 0.0
        %v1750 = vmax.f32 %v1671, 0.0
        %v1751 = vmax.f32 %v1673, 0.0
        %v1752 = vmax.f32 %v1742, 0.0
        %v1753 = vmax.f32 %v1744, 0.0
        %v1754 = vld [vmem:[%s11] sm:$0xff]
        %v1755 = vld [vmem:[%s11 + $0x8] sm:$0xff]
        %v1756 = vld [vmem:[%s11 + $0x10] sm:$0xff]
        %v1757 = vld [vmem:[%s11 + $0x18] sm:$0xff]
        %v1758 = vld [vmem:[%s11 + $0x20] sm:$0xff]
        %v1759 = vld [vmem:[%s11 + $0x28] sm:$0xff]
        %v1760 = vld [vmem:[%s11 + $0x30] sm:$0xff]
        %v1761 = vld [vmem:[%s11 + $0x38] sm:$0xff]
        %v1762 = vld [vmem:[%s11 + $0x40] sm:$0xff]
        %v1763 = vld [vmem:[%s11 + $0x48] sm:$0xff]
        %v1764 = vld [vmem:[%s11 + $0x50] sm:$0xff]
        %v1765 = vld [vmem:[%s11 + $0x58] sm:$0xff]
        %v1766 = vld [vmem:[%s11 + $0x60] sm:$0xff]
        %v1767 = vld [vmem:[%s11 + $0x68] sm:$0xff]
        %v1768 = vld [vmem:[%s11 + $0x70] sm:$0xff]
        %v1769 = vld [vmem:[%s11 + $0x78] sm:$0xff]
        %v1770 = vld [vmem:[%s11 + $0x80] sm:$0xff]
        %v1771 = vld [vmem:[%s11 + $0x88] sm:$0xff]
        %v1772 = vld [vmem:[%s11 + $0x90] sm:$0xff]
        %v1773 = vld [vmem:[%s11 + $0x98] sm:$0xff]
        %v1774 = vld [vmem:[%s11 + $0xa0] sm:$0xff]
        %v1775 = vld [vmem:[%s11 + $0xa8] sm:$0xff]
        %v1776 = vld [vmem:[%s11 + $0xb0] sm:$0xff]
        %v1777 = vld [vmem:[%s11 + $0xb8] sm:$0xff]
        %v1778 = vld [vmem:[%s11 + $0xc0] sm:$0xff]
        %v1779 = vld [vmem:[%s11 + $0xc8] sm:$0xff]
        %v1780 = vld [vmem:[%s11 + $0xd0] sm:$0xff]
        %v1781 = vld [vmem:[%s11 + $0xd8] sm:$0xff]
        %v1782 = vld [vmem:[%s11 + $0xe0] sm:$0xff]
        %v1783 = vld [vmem:[%s11 + $0xe8] sm:$0xff]
        %v1784 = vld [vmem:[%s11 + $0xf0] sm:$0xff]
        %v1785 = vld [vmem:[%s11 + $0xf8] sm:$0xff]
        %v1786 = vld [vmem:[%s11 + $0x100] sm:$0xff]
        %v1787 = vld [vmem:[%s11 + $0x108] sm:$0xff]
        %v1788 = vld [vmem:[%s11 + $0x110] sm:$0xff]
        %v1789 = vld [vmem:[%s11 + $0x118] sm:$0xff]
        %v1790 = vld [vmem:[%s11 + $0x120] sm:$0xff]
        %v1791 = vld [vmem:[%s11 + $0x128] sm:$0xff]
        %v1792 = vld [vmem:[%s11 + $0x130] sm:$0xff]
        %v1793 = vld [vmem:[%s11 + $0x138] sm:$0xff]
        %v1794 = vld [vmem:[%s11 + $0x140] sm:$0xff]
        %v1795 = vld [vmem:[%s11 + $0x148] sm:$0xff]
        %v1796 = vld [vmem:[%s11 + $0x150] sm:$0xff]
        %v1797 = vld [vmem:[%s11 + $0x158] sm:$0xff]
        %v1798 = vld [vmem:[%s11 + $0x160] sm:$0xff]
        %v1799 = vld [vmem:[%s11 + $0x168] sm:$0xff]
        %v1800 = vld [vmem:[%s11 + $0x170] sm:$0xff]
        %v1801 = vld [vmem:[%s11 + $0x178] sm:$0xff]
        %v1802 = vld [vmem:[%s11 + $0x180] sm:$0xff]
        %v1803 = vld [vmem:[%s11 + $0x188] sm:$0xff]
        %v1804 = vld [vmem:[%s11 + $0x190] sm:$0xff]
        %v1805 = vld [vmem:[%s11 + $0x198] sm:$0xff]
        %v1806 = vld [vmem:[%s11 + $0x1a0] sm:$0xff]
        %v1807 = vld [vmem:[%s11 + $0x1a8] sm:$0xff]
        %v1808 = vld [vmem:[%s11 + $0x1b0] sm:$0xff]
        %v1809 = vld [vmem:[%s11 + $0x1b8] sm:$0xff]
        %v1810 = vld [vmem:[%s11 + $0x1c0] sm:$0xff]
        %v1811 = vld [vmem:[%s11 + $0x1c8] sm:$0xff]
        %v1812 = vld [vmem:[%s11 + $0x1d0] sm:$0xff]
        %v1813 = vld [vmem:[%s11 + $0x1d8] sm:$0xff]
        %v1814 = vld [vmem:[%s11 + $0x1e0] sm:$0xff]
        %v1815 = vld [vmem:[%s11 + $0x1e8] sm:$0xff]
        %v1816 = vld [vmem:[%s11 + $0x1f0] sm:$0xff]
        %v1817 = vld [vmem:[%s11 + $0x1f8] sm:$0xff]
        %v1818 = vld [vmem:[%s11 + $0x200] sm:$0xff]
        %v1819 = vld [vmem:[%s11 + $0x208] sm:$0xff]
        %v1820 = vld [vmem:[%s11 + $0x210] sm:$0xff]
        %v1821 = vld [vmem:[%s11 + $0x218] sm:$0xff]
        %v1822 = vld [vmem:[%s11 + $0x220] sm:$0xff]
        %v1823 = vld [vmem:[%s11 + $0x228] sm:$0xff]
        %v1824 = vld [vmem:[%s11 + $0x230] sm:$0xff]
        %v1825 = vld [vmem:[%s11 + $0x238] sm:$0xff]
        %v1826 = vld [vmem:[%s11 + $0x240] sm:$0xff]
        %v1827 = vld [vmem:[%s11 + $0x248] sm:$0xff]
        %v1828 = vld [vmem:[%s11 + $0x250] sm:$0xff]
        %v1829 = vld [vmem:[%s11 + $0x258] sm:$0xff]
        %v1830 = vld [vmem:[%s11 + $0x260] sm:$0xff]
        %v1831 = vld [vmem:[%s11 + $0x268] sm:$0xff]
        %v1832 = vld [vmem:[%s11 + $0x270] sm:$0xff]
        %v1833 = vld [vmem:[%s11 + $0x278] sm:$0xff]
        %v1834 = vld [vmem:[%s11 + $0x280] sm:$0xff]
        %v1835 = vld [vmem:[%s11 + $0x288] sm:$0xff]
        %v1836 = vld [vmem:[%s11 + $0x290] sm:$0xff]
        %v1837 = vld [vmem:[%s11 + $0x298] sm:$0xff]
        %v1838 = vld [vmem:[%s11 + $0x2a0] sm:$0xff]
        %v1839 = vld [vmem:[%s11 + $0x2a8] sm:$0xff]
        %v1840 = vld [vmem:[%s11 + $0x2b0] sm:$0xff]
        %v1841 = vld [vmem:[%s11 + $0x2b8] sm:$0xff]
        %v1842 = vld [vmem:[%s11 + $0x2c0] sm:$0xff]
        %v1843 = vld [vmem:[%s11 + $0x2c8] sm:$0xff]
        %v1844 = vld [vmem:[%s11 + $0x2d0] sm:$0xff]
        %v1845 = vld [vmem:[%s11 + $0x2d8] sm:$0xff]
        %v1846 = vld [vmem:[%s11 + $0x2e0] sm:$0xff]
        %v1847 = vld [vmem:[%s11 + $0x2e8] sm:$0xff]
        %v1848 = vld [vmem:[%s11 + $0x2f0] sm:$0xff]
        %v1849 = vld [vmem:[%s11 + $0x2f8] sm:$0xff]
        %v1850 = vld [vmem:[%s11 + $0x300] sm:$0xff]
        %v1851 = vld [vmem:[%s11 + $0x308] sm:$0xff]
        %v1852 = vld [vmem:[%s11 + $0x310] sm:$0xff]
        %v1853 = vld [vmem:[%s11 + $0x318] sm:$0xff]
        %v1854 = vld [vmem:[%s11 + $0x320] sm:$0xff]
        %v1855 = vld [vmem:[%s11 + $0x328] sm:$0xff]
        %v1856 = vld [vmem:[%s11 + $0x330] sm:$0xff]
        %v1857 = vld [vmem:[%s11 + $0x338] sm:$0xff]
        %v1858 = vld [vmem:[%s11 + $0x340] sm:$0xff]
        %v1859 = vld [vmem:[%s11 + $0x348] sm:$0xff]
        %v1860 = vld [vmem:[%s11 + $0x350] sm:$0xff]
        %v1861 = vld [vmem:[%s11 + $0x358] sm:$0xff]
        %v1862 = vld [vmem:[%s11 + $0x360] sm:$0xff]
        %v1863 = vld [vmem:[%s11 + $0x368] sm:$0xff]
        %v1864 = vld [vmem:[%s11 + $0x370] sm:$0xff]
        %v1865 = vld [vmem:[%s11 + $0x378] sm:$0xff]
        %v1866 = vld [vmem:[%s11 + $0x380] sm:$0xff]
        %v1867 = vld [vmem:[%s11 + $0x388] sm:$0xff]
        %v1868 = vld [vmem:[%s11 + $0x390] sm:$0xff]
        %v1869 = vld [vmem:[%s11 + $0x398] sm:$0xff]
        %v1870 = vld [vmem:[%s11 + $0x3a0] sm:$0xff]
        %v1871 = vld [vmem:[%s11 + $0x3a8] sm:$0xff]
        %v1872 = vld [vmem:[%s11 + $0x3b0] sm:$0xff]
        %v1873 = vld [vmem:[%s11 + $0x3b8] sm:$0xff]
        %v1874 = vld [vmem:[%s11 + $0x3c0] sm:$0xff]
        %v1875 = vld [vmem:[%s11 + $0x3c8] sm:$0xff]
        %v1876 = vld [vmem:[%s11 + $0x3d0] sm:$0xff]
        %v1877 = vld [vmem:[%s11 + $0x3d8] sm:$0xff]
        %v1878 = vld [vmem:[%s11 + $0x3e0] sm:$0xff]
        %v1879 = vld [vmem:[%s11 + $0x3e8] sm:$0xff]
        %v1880 = vld [vmem:[%s11 + $0x3f0] sm:$0xff]
        %v1881 = vld [vmem:[%s11 + $0x3f8] sm:$0xff]
        %1882 = vmatprep.subr.mxu0 0.0
        %1883 = vmatpush1.msra.mxu0 %v1754
        %1884 = vmatprep.subr.mxu0 0.0
        %1885 = vmatpush1.msra.mxu0 %v1755
        %1886 = vmatprep.subr.mxu0 0.0
        %1887 = vmatpush1.msra.mxu0 %v1756
        %1888 = vmatprep.subr.mxu0 0.0
        %1889 = vmatpush1.msra.mxu0 %v1757
        %1890 = vmatprep.subr.mxu0 0.0
        %1891 = vmatpush1.msra.mxu0 %v1758
        %1892 = vmatprep.subr.mxu0 0.0
        %1893 = vmatpush1.msra.mxu0 %v1759
        %1894 = vmatprep.subr.mxu0 0.0
        %1895 = vmatpush1.msra.mxu0 %v1760
        %1896 = vmatprep.subr.mxu0 0.0
        %1897 = vmatpush1.msra.mxu0 %v1761
        %1898 = vmatprep.subr.mxu0 0.0
        %1899 = vmatpush1.msra.mxu0 %v1762
        %1900 = vmatprep.subr.mxu0 0.0
        %1901 = vmatpush1.msra.mxu0 %v1763
        %1902 = vmatprep.subr.mxu0 0.0
        %1903 = vmatpush1.msra.mxu0 %v1764
        %1904 = vmatprep.subr.mxu0 0.0
        %1905 = vmatpush1.msra.mxu0 %v1765
        %1906 = vmatprep.subr.mxu0 0.0
        %1907 = vmatpush1.msra.mxu0 %v1766
        %1908 = vmatprep.subr.mxu0 0.0
        %1909 = vmatpush1.msra.mxu0 %v1767
        %1910 = vmatprep.subr.mxu0 0.0
        %1911 = vmatpush1.msra.mxu0 %v1768
        %1912 = vmatprep.subr.mxu0 0.0
        %1913 = vmatpush1.msra.mxu0 %v1769
        %1914 = vmatprep.subr.mxu0 0.0
        %1915 = vmatpush1.msra.mxu0 %v1770
        %1916 = vmatprep.subr.mxu0 0.0
        %1917 = vmatpush1.msra.mxu0 %v1771
        %1918 = vmatprep.subr.mxu0 0.0
        %1919 = vmatpush1.msra.mxu0 %v1772
        %1920 = vmatprep.subr.mxu0 0.0
        %1921 = vmatpush1.msra.mxu0 %v1773
        %1922 = vmatprep.subr.mxu0 0.0
        %1923 = vmatpush1.msra.mxu0 %v1774
        %1924 = vmatprep.subr.mxu0 0.0
        %1925 = vmatpush1.msra.mxu0 %v1775
        %1926 = vmatprep.subr.mxu0 0.0
        %1927 = vmatpush1.msra.mxu0 %v1776
        %1928 = vmatprep.subr.mxu0 0.0
        %1929 = vmatpush1.msra.mxu0 %v1777
        %1930 = vmatprep.subr.mxu0 0.0
        %1931 = vmatpush1.msra.mxu0 %v1778
        %1932 = vmatprep.subr.mxu0 0.0
        %1933 = vmatpush1.msra.mxu0 %v1779
        %1934 = vmatprep.subr.mxu0 0.0
        %1935 = vmatpush1.msra.mxu0 %v1780
        %1936 = vmatprep.subr.mxu0 0.0
        %1937 = vmatpush1.msra.mxu0 %v1781
        %1938 = vmatprep.subr.mxu0 0.0
        %1939 = vmatpush1.msra.mxu0 %v1782
        %1940 = vmatprep.subr.mxu0 0.0
        %1941 = vmatpush1.msra.mxu0 %v1783
        %1942 = vmatprep.subr.mxu0 0.0
        %1943 = vmatpush1.msra.mxu0 %v1784
        %1944 = vmatprep.subr.mxu0 0.0
        %1945 = vmatpush1.msra.mxu0 %v1785
        %1946 = vmatprep.mubr.f32.mxu0 %v1747
        %1947 = vmatmul.mubr.f32.gmra.mrb[0].mxu0 %v1746
        %v1948 = vpop.f32.mrb[0].mxu0
        %v1949 = vadd.f32 0.0, %v1948
        %v1950 = vpop.f32.mrb[0].mxu0
        %1951 = vdwg.mxu0
        %1952 = vmatprep.subr.mxu0 0.0
        %1953 = vmatpush1.msra.mxu0 %v1786
        %1954 = vmatprep.subr.mxu0 0.0
        %1955 = vmatpush1.msra.mxu0 %v1787
        %1956 = vmatprep.subr.mxu0 0.0
        %1957 = vmatpush1.msra.mxu0 %v1788
        %1958 = vmatprep.subr.mxu0 0.0
        %1959 = vmatpush1.msra.mxu0 %v1789
        %1960 = vmatprep.subr.mxu0 0.0
        %1961 = vmatpush1.msra.mxu0 %v1790
        %1962 = vmatprep.subr.mxu0 0.0
        %1963 = vmatpush1.msra.mxu0 %v1791
        %1964 = vmatprep.subr.mxu0 0.0
        %1965 = vmatpush1.msra.mxu0 %v1792
        %1966 = vmatprep.subr.mxu0 0.0
        %1967 = vmatpush1.msra.mxu0 %v1793
        %1968 = vmatprep.subr.mxu0 0.0
        %1969 = vmatpush1.msra.mxu0 %v1794
        %1970 = vmatprep.subr.mxu0 0.0
        %1971 = vmatpush1.msra.mxu0 %v1795
        %1972 = vmatprep.subr.mxu0 0.0
        %1973 = vmatpush1.msra.mxu0 %v1796
        %1974 = vmatprep.subr.mxu0 0.0
        %1975 = vmatpush1.msra.mxu0 %v1797
        %1976 = vmatprep.subr.mxu0 0.0
        %1977 = vmatpush1.msra.mxu0 %v1798
        %1978 = vmatprep.subr.mxu0 0.0
        %1979 = vmatpush1.msra.mxu0 %v1799
        %1980 = vmatprep.subr.mxu0 0.0
        %1981 = vmatpush1.msra.mxu0 %v1800
        %1982 = vmatprep.subr.mxu0 0.0
        %1983 = vmatpush1.msra.mxu0 %v1801
        %1984 = vmatprep.subr.mxu0 0.0
        %1985 = vmatpush1.msra.mxu0 %v1802
        %1986 = vmatprep.subr.mxu0 0.0
        %1987 = vmatpush1.msra.mxu0 %v1803
        %1988 = vmatprep.subr.mxu0 0.0
        %1989 = vmatpush1.msra.mxu0 %v1804
        %1990 = vmatprep.subr.mxu0 0.0
        %1991 = vmatpush1.msra.mxu0 %v1805
        %1992 = vmatprep.subr.mxu0 0.0
        %1993 = vmatpush1.msra.mxu0 %v1806
        %1994 = vmatprep.subr.mxu0 0.0
        %1995 = vmatpush1.msra.mxu0 %v1807
        %1996 = vmatprep.subr.mxu0 0.0
        %1997 = vmatpush1.msra.mxu0 %v1808
        %1998 = vmatprep.subr.mxu0 0.0
        %1999 = vmatpush1.msra.mxu0 %v1809
        %2000 = vmatprep.subr.mxu0 0.0
        %2001 = vmatpush1.msra.mxu0 %v1810
        %2002 = vmatprep.subr.mxu0 0.0
        %2003 = vmatpush1.msra.mxu0 %v1811
        %2004 = vmatprep.subr.mxu0 0.0
        %2005 = vmatpush1.msra.mxu0 %v1812
        %2006 = vmatprep.subr.mxu0 0.0
        %2007 = vmatpush1.msra.mxu0 %v1813
        %2008 = vmatprep.subr.mxu0 0.0
        %2009 = vmatpush1.msra.mxu0 %v1814
        %2010 = vmatprep.subr.mxu0 0.0
        %2011 = vmatpush1.msra.mxu0 %v1815
        %2012 = vmatprep.subr.mxu0 0.0
        %2013 = vmatpush1.msra.mxu0 %v1816
        %2014 = vmatprep.subr.mxu0 0.0
        %2015 = vmatpush1.msra.mxu0 %v1817
        %2016 = vmatprep.mubr.f32.mxu0 %v1749
        %2017 = vmatmul.mubr.f32.gmra.mrb[0].mxu0 %v1748
        %v2018 = vpop.f32.mrb[0].mxu0
        %v2019 = vadd.f32 %v1949, %v2018
        %v2020 = vpop.f32.mrb[0].mxu0
        %2021 = vdwg.mxu0
        %2022 = vmatprep.subr.mxu0 0.0
        %2023 = vmatpush1.msra.mxu0 %v1818
        %2024 = vmatprep.subr.mxu0 0.0
        %2025 = vmatpush1.msra.mxu0 %v1819
        %2026 = vmatprep.subr.mxu0 0.0
        %2027 = vmatpush1.msra.mxu0 %v1820
        %2028 = vmatprep.subr.mxu0 0.0
        %2029 = vmatpush1.msra.mxu0 %v1821
        %2030 = vmatprep.subr.mxu0 0.0
        %2031 = vmatpush1.msra.mxu0 %v1822
        %2032 = vmatprep.subr.mxu0 0.0
        %2033 = vmatpush1.msra.mxu0 %v1823
        %2034 = vmatprep.subr.mxu0 0.0
        %2035 = vmatpush1.msra.mxu0 %v1824
        %2036 = vmatprep.subr.mxu0 0.0
        %2037 = vmatpush1.msra.mxu0 %v1825
        %2038 = vmatprep.subr.mxu0 0.0
        %2039 = vmatpush1.msra.mxu0 %v1826
        %2040 = vmatprep.subr.mxu0 0.0
        %2041 = vmatpush1.msra.mxu0 %v1827
        %2042 = vmatprep.subr.mxu0 0.0
        %2043 = vmatpush1.msra.mxu0 %v1828
        %2044 = vmatprep.subr.mxu0 0.0
        %2045 = vmatpush1.msra.mxu0 %v1829
        %2046 = vmatprep.subr.mxu0 0.0
        %2047 = vmatpush1.msra.mxu0 %v1830
        %2048 = vmatprep.subr.mxu0 0.0
        %2049 = vmatpush1.msra.mxu0 %v1831
        %2050 = vmatprep.subr.mxu0 0.0
        %2051 = vmatpush1.msra.mxu0 %v1832
        %2052 = vmatprep.subr.mxu0 0.0
        %2053 = vmatpush1.msra.mxu0 %v1833
        %2054 = vmatprep.subr.mxu0 0.0
        %2055 = vmatpush1.msra.mxu0 %v1834
        %2056 = vmatprep.subr.mxu0 0.0
        %2057 = vmatpush1.msra.mxu0 %v1835
        %2058 = vmatprep.subr.mxu0 0.0
        %2059 = vmatpush1.msra.mxu0 %v1836
        %2060 = vmatprep.subr.mxu0 0.0
        %2061 = vmatpush1.msra.mxu0 %v1837
        %2062 = vmatprep.subr.mxu0 0.0
        %2063 = vmatpush1.msra.mxu0 %v1838
        %2064 = vmatprep.subr.mxu0 0.0
        %2065 = vmatpush1.msra.mxu0 %v1839
        %2066 = vmatprep.subr.mxu0 0.0
        %2067 = vmatpush1.msra.mxu0 %v1840
        %2068 = vmatprep.subr.mxu0 0.0
        %2069 = vmatpush1.msra.mxu0 %v1841
        %2070 = vmatprep.subr.mxu0 0.0
        %2071 = vmatpush1.msra.mxu0 %v1842
        %2072 = vmatprep.subr.mxu0 0.0
        %2073 = vmatpush1.msra.mxu0 %v1843
        %2074 = vmatprep.subr.mxu0 0.0
        %2075 = vmatpush1.msra.mxu0 %v1844
        %2076 = vmatprep.subr.mxu0 0.0
        %2077 = vmatpush1.msra.mxu0 %v1845
        %2078 = vmatprep.subr.mxu0 0.0
        %2079 = vmatpush1.msra.mxu0 %v1846
        %2080 = vmatprep.subr.mxu0 0.0
        %2081 = vmatpush1.msra.mxu0 %v1847
        %2082 = vmatprep.subr.mxu0 0.0
        %2083 = vmatpush1.msra.mxu0 %v1848
        %2084 = vmatprep.subr.mxu0 0.0
        %2085 = vmatpush1.msra.mxu0 %v1849
        %2086 = vmatprep.mubr.f32.mxu0 %v1751
        %2087 = vmatmul.mubr.f32.gmra.mrb[0].mxu0 %v1750
        %v2088 = vpop.f32.mrb[0].mxu0
        %v2089 = vadd.f32 %v2019, %v2088
        %v2090 = vpop.f32.mrb[0].mxu0
        %2091 = vdwg.mxu0
        %2092 = vmatprep.subr.mxu0 0.0
        %2093 = vmatpush1.msra.mxu0 %v1850
        %2094 = vmatprep.subr.mxu0 0.0
        %2095 = vmatpush1.msra.mxu0 %v1851
        %2096 = vmatprep.subr.mxu0 0.0
        %2097 = vmatpush1.msra.mxu0 %v1852
        %2098 = vmatprep.subr.mxu0 0.0
        %2099 = vmatpush1.msra.mxu0 %v1853
        %2100 = vmatprep.subr.mxu0 0.0
        %2101 = vmatpush1.msra.mxu0 %v1854
        %2102 = vmatprep.subr.mxu0 0.0
        %2103 = vmatpush1.msra.mxu0 %v1855
        %2104 = vmatprep.subr.mxu0 0.0
        %2105 = vmatpush1.msra.mxu0 %v1856
        %2106 = vmatprep.subr.mxu0 0.0
        %2107 = vmatpush1.msra.mxu0 %v1857
        %2108 = vmatprep.subr.mxu0 0.0
        %2109 = vmatpush1.msra.mxu0 %v1858
        %2110 = vmatprep.subr.mxu0 0.0
        %2111 = vmatpush1.msra.mxu0 %v1859
        %2112 = vmatprep.subr.mxu0 0.0
        %2113 = vmatpush1.msra.mxu0 %v1860
        %2114 = vmatprep.subr.mxu0 0.0
        %2115 = vmatpush1.msra.mxu0 %v1861
        %2116 = vmatprep.subr.mxu0 0.0
        %2117 = vmatpush1.msra.mxu0 %v1862
        %2118 = vmatprep.subr.mxu0 0.0
        %2119 = vmatpush1.msra.mxu0 %v1863
        %2120 = vmatprep.subr.mxu0 0.0
        %2121 = vmatpush1.msra.mxu0 %v1864
        %2122 = vmatprep.subr.mxu0 0.0
        %2123 = vmatpush1.msra.mxu0 %v1865
        %2124 = vmatprep.subr.mxu0 0.0
        %2125 = vmatpush1.msra.mxu0 %v1866
        %2126 = vmatprep.subr.mxu0 0.0
        %2127 = vmatpush1.msra.mxu0 %v1867
        %2128 = vmatprep.subr.mxu0 0.0
        %2129 = vmatpush1.msra.mxu0 %v1868
        %2130 = vmatprep.subr.mxu0 0.0
        %2131 = vmatpush1.msra.mxu0 %v1869
        %2132 = vmatprep.subr.mxu0 0.0
        %2133 = vmatpush1.msra.mxu0 %v1870
        %2134 = vmatprep.subr.mxu0 0.0
        %2135 = vmatpush1.msra.mxu0 %v1871
        %2136 = vmatprep.subr.mxu0 0.0
        %2137 = vmatpush1.msra.mxu0 %v1872
        %2138 = vmatprep.subr.mxu0 0.0
        %2139 = vmatpush1.msra.mxu0 %v1873
        %2140 = vmatprep.subr.mxu0 0.0
        %2141 = vmatpush1.msra.mxu0 %v1874
        %2142 = vmatprep.subr.mxu0 0.0
        %2143 = vmatpush1.msra.mxu0 %v1875
        %2144 = vmatprep.subr.mxu0 0.0
        %2145 = vmatpush1.msra.mxu0 %v1876
        %2146 = vmatprep.subr.mxu0 0.0
        %2147 = vmatpush1.msra.mxu0 %v1877
        %2148 = vmatprep.subr.mxu0 0.0
        %2149 = vmatpush1.msra.mxu0 %v1878
        %2150 = vmatprep.subr.mxu0 0.0
        %2151 = vmatpush1.msra.mxu0 %v1879
        %2152 = vmatprep.subr.mxu0 0.0
        %2153 = vmatpush1.msra.mxu0 %v1880
        %2154 = vmatprep.subr.mxu0 0.0
        %2155 = vmatpush1.msra.mxu0 %v1881
        %2156 = vmatprep.mubr.f32.mxu0 %v1753
        %2157 = vmatmul.mubr.f32.gmra.mrb[0].mxu0 %v1752
        %v2158 = vpop.f32.mrb[0].mxu0
        %v2159 = vadd.f32 %v2089, %v2158
        %v2160 = vpop.f32.mrb[0].mxu0
        %2161 = vdwg.mxu0
        %v2162 = vadd.f32 %v1348, %v2159
        %v2163 = vld [vmem:[%s12] sm:$0x1]
        %v2165 = vlaneseq
        %v2166 = vshrl.u32 %v2165, 7
        %v2167 = vsub.s32 0, %v2166
        %v2168 = vrot.slane %v2163, %v2167
        %v2170 = vadd.f32 %v2162, %v2168
        %2171 = vst.msk [vmem:[%s431] sm:$0xff] %vm439, %v2170
        %s2172 = sand.u32 %s313, 1
        %s2173 = scalar_lea.sflag [#allocation3], %s2172
        %s2174 = sand.u32 %s313, 1
        %s2175 = smul.addr %s2174, 8
        %s2176 = scalar_lea.vmem [#allocation2], %s2175
        // Predicated region
        $region73: #{tpu_custom_call.1} parent=71 // pred_check
          %p2177 = pneg %p323
        $region74: #{tpu_custom_call.1} parent=71 // pred_check_branch
          %2179 = sbr.rel (%p2177) target = $region76
        $region75: #{tpu_custom_call.1} parent=71 // pred_region
          %s2181 = ssub.s32 128, 128
          %2182 = vsyncadd %s2173, %s2181
          %s2183 = smul.addr %s27, 128
          %s2184 = scalar_lea.hbm %s13, %s2183
          %s2186 = sshll.u32 %s2176, 4
          %s2187 = int_to_ptr.vmem [resolvable:$true] %s2186
          %2189 = dma.vmem_to_hbm [thread:$0]  %s2187, 128, %s2184, %s2173
        $region76: #{tpu_custom_call.1} parent=71 // pred_fallthru
          _
      $region72: #{tpu_custom_call.1} parent=5 // pred_fallthru
        _
      %p2190 = scmp.le.s32.totalorder 2, %s22
      // Predicated region
      $region77: #{tpu_custom_call.1} parent=5 // pred_check
        %p2191 = pneg %p2190
      $region78: #{tpu_custom_call.1} parent=5 // pred_check_branch
        %2193 = sbr.rel (%p2191) target = $region80
      $region79: #{tpu_custom_call.1} parent=5 // pred_region
        %s2194 = ssub.s32 %s22, 2
        // Predicated region
        $region81: #{tpu_custom_call.1} parent=79 // pred_check
          %p2195 = pneg %p329
        $region82: #{tpu_custom_call.1} parent=79 // pred_check_branch
          %2197 = sbr.rel (%p2195) target = $region84
        $region83: #{tpu_custom_call.1} parent=79 // pred_region
          %s2198 = sand.u32 %s314, 1
          %s2199 = scalar_lea.sflag [#allocation3], %s2198
          %s2200 = sand.u32 %s314, 1
          %s2201 = smul.addr %s2200, 8
          %s2202 = scalar_lea.vmem [#allocation2], %s2201
          %2203 = dma.done %s2199, 128
        $region84: #{tpu_custom_call.1} parent=79 // pred_fallthru
          _
      $region80: #{tpu_custom_call.1} parent=5 // pred_fallthru
        _
    $region6: #{tpu_custom_call.1} parent=1 // loop_footer
      %s26 = sadd.s32 1, %s22
    $region7: #{tpu_custom_call.1} parent=1 // loop_footer_branch
      %21 = sbr.rel target = $region3
    $region8: #{tpu_custom_call.1} parent=1 // loop_exit
      _
    %2204 = vsyncpa [#allocation3], 1
    %s2205 = scalar_lea.sflag [#allocation3], 1
    %2206 = vsyncpa %s2205, 1

</llo_original>
